<compile_context>
chip_gen: v6e
topology: v6e:2x2x1
jax: 0.10.0
libtpu: 0.0.40
codegen_flags: <defaults>
</compile_context>

<pallas_src>
import functools
import math

import jax
import jax.numpy as jnp
from jax.experimental import pallas as pl
from jax.experimental.pallas import tpu as pltpu


def _layernorm(x, gamma, beta, eps=1e-5):
    # x: (rows, D) f32; gamma/beta: (1, D) f32
    mu = jnp.mean(x, axis=-1, keepdims=True)
    var = jnp.mean((x - mu) ** 2, axis=-1, keepdims=True)
    return (x - mu) * jax.lax.rsqrt(var + eps) * gamma + beta


def encoder_stack_kernel(
    x_ref,
    ln1g_ref, ln1b_ref,
    wqkv_ref, bqkv_ref, wo_ref, bo_ref,
    ln2g_ref, ln2b_ref,
    w1_ref, b1_ref, w2_ref, b2_ref,
    o_ref,
    *, num_layers, num_heads,
):
    bf16 = jnp.bfloat16
    x = x_ref[...].astype(jnp.float32)               # (S, D) — one batch element
    S, D = x.shape
    H = num_heads
    Dh = D // H
    scale = 1.0 / math.sqrt(Dh)

    for l in range(num_layers):                      # static loop: layers fused
        # ---- sub-block 1: pre-norm multi-head self-attention + residual ----
        xn = _layernorm(x, ln1g_ref[l], ln1b_ref[l])                       # (S, D) f32

        # fused QKV projection: one (S,D)@(D,3D) matmul, bf16 in / f32 acc
        qkv = jnp.dot(xn.astype(bf16), wqkv_ref[l],
                      preferred_element_type=jnp.float32) + bqkv_ref[l]    # (S, 3D) f32

        qkvT = qkv.T                                  # (3D, S)  minor-dim transpose
        heads = qkvT.reshape(3 * H, Dh, S)            # tile-aligned sublane split
        qT = heads[0:H]                               # (H, Dh, S)
        kT = heads[H:2 * H]
        vT = heads[2 * H:3 * H]
        qh = (jnp.swapaxes(qT, 1, 2) * scale).astype(bf16)   # (H, S, Dh), scale folded in
        kh = jnp.swapaxes(kT, 1, 2).astype(bf16)             # (H, S, Dh)

        # head-batched scores (H, S, S), f32 accumulation; stable softmax in f32
        s = jnp.einsum('hqd,hkd->hqk', qh, kh,
                       preferred_element_type=jnp.float32)
        s = s - jnp.max(s, axis=-1, keepdims=True)
        p = jnp.exp(s)
        p = p * pl.reciprocal(jnp.sum(p, axis=-1, keepdims=True), approx=True)

        # head-batched attention output, produced directly in (H, Dh, S) form
        oT = jnp.einsum('hdk,hqk->hdq', vT.astype(bf16), p.astype(bf16),
                        preferred_element_type=jnp.float32)                # (H, Dh, S)
        attn = oT.reshape(D, S).T                                          # (S, D) layout-free merge
        attn = jnp.dot(attn.astype(bf16), wo_ref[l],
                       preferred_element_type=jnp.float32) + bo_ref[l]
        x = x + attn                                  # residual (dropout == identity)

        # ---- sub-block 2: pre-norm FFN + residual ----
        xn2 = _layernorm(x, ln2g_ref[l], ln2b_ref[l])
        h1 = jnp.dot(xn2.astype(bf16), w1_ref[l],
                     preferred_element_type=jnp.float32) + b1_ref[l]
        h1 = jnp.maximum(h1, 0.0)                     # ReLU (f32)
        ffn = jnp.dot(h1.astype(bf16), w2_ref[l],
                      preferred_element_type=jnp.float32) + b2_ref[l]
        x = x + ffn                                   # residual (dropout == identity)

    o_ref[...] = x.astype(o_ref.dtype)


def transformer_encoder(x, params, num_heads):
    """x: (B, S, D) f32. params: dict of per-layer-stacked weights (leading dim L)."""
    B, S, D = x.shape
    L = params["wqkv"].shape[0]

    x2 = x.reshape(B * S, D)                          # fold batch into rows

    weights = [
        params["ln1_g"], params["ln1_b"],
        params["wqkv"], params["bqkv"], params["wo"], params["bo"],
        params["ln2_g"], params["ln2_b"],
        params["w1"], params["b1"], params["w2"], params["b2"],
    ]

    def weight_spec(a):
        n = a.ndim
        # Constant block index across the (batch) grid -> weights stay resident
        # in VMEM after the first fetch.
        return pl.BlockSpec(a.shape, lambda b, n=n: (0,) * n)

    kernel = functools.partial(
        encoder_stack_kernel, num_layers=L, num_heads=num_heads,
    )

    out = pl.pallas_call(
        kernel,
        out_shape=jax.ShapeDtypeStruct((B * S, D), x.dtype),
        grid_spec=pltpu.PrefetchScalarGridSpec(
            num_scalar_prefetch=0,
            grid=(B,),                                # batch elements are independent
            in_specs=[pl.BlockSpec((S, D), lambda b: (b, 0))]
                     + [weight_spec(a) for a in weights],
            out_specs=pl.BlockSpec((S, D), lambda b: (b, 0)),
        ),
        compiler_params=pltpu.CompilerParams(
            dimension_semantics=("parallel",),        # megacore-shardable on v7x
        ),
    )(x2, *weights)
    return out.reshape(B, S, D)


def init_params(key, num_layers, d_model, dim_ff):
    def one_layer(k):
        ks = jax.random.split(k, 6)
        w = lambda kk, shp: 0.02 * jax.random.normal(kk, shp, dtype=jnp.float32)
        wq = w(ks[0], (d_model, d_model))
        wk = w(ks[1], (d_model, d_model))
        wv = w(ks[2], (d_model, d_model))
        return {
            "ln1_g": jnp.ones((1, d_model), jnp.float32),
            "ln1_b": jnp.zeros((1, d_model), jnp.float32),
            # fused QKV weight: columns = [Q | K | V], each head-major within its block
            "wqkv": jnp.concatenate([wq, wk, wv], axis=1),
            "bqkv": jnp.zeros((1, 3 * d_model), jnp.float32),
            "wo": w(ks[3], (d_model, d_model)),
            "bo": jnp.zeros((1, d_model), jnp.float32),
            "ln2_g": jnp.ones((1, d_model), jnp.float32),
            "ln2_b": jnp.zeros((1, d_model), jnp.float32),
            "w1": w(ks[4], (d_model, dim_ff)),
            "b1": jnp.zeros((1, dim_ff), jnp.float32),
            "w2": w(ks[5], (dim_ff, d_model)),
            "b2": jnp.zeros((1, d_model), jnp.float32),
        }

    layers = [one_layer(k) for k in jax.random.split(key, num_layers)]
    stacked = {name: jnp.stack([lp[name] for lp in layers]) for name in layers[0]}
    # bf16 operands feed the MXU at full rate; biases / LN params stay f32.
    for name in ("wqkv", "wo", "w1", "w2"):
        stacked[name] = stacked[name].astype(jnp.bfloat16)
    return stacked


if __name__ == "__main__":
    B, S, D, H, FF, L = 2, 8, 32, 4, 64, 2

    key = jax.random.PRNGKey(0)
    k_x, k_p = jax.random.split(key)

    x = jax.random.normal(k_x, (B, S, D), dtype=jnp.float32)
    params = init_params(k_p, L, D, FF)

    out = transformer_encoder(x, params, num_heads=H)
    out = jax.block_until_ready(out)

    assert out.shape == (B, S, D) and out.dtype == jnp.float32
    assert bool(jnp.all(jnp.isfinite(out)))
    print("KERNEL_OK")
</pallas_src>

<mosaic_0001>
module attributes {stable_mosaic.version = 11 : i64} {
  func.func @encoder_stack_kernel(%arg0: i32, %arg1: memref<8x32xf32, #tpu.memory_space<vmem>>, %arg2: memref<2x1x32xf32, #tpu.memory_space<vmem>>, %arg3: memref<2x1x32xf32, #tpu.memory_space<vmem>>, %arg4: memref<2x32x96xbf16, #tpu.memory_space<vmem>>, %arg5: memref<2x1x96xf32, #tpu.memory_space<vmem>>, %arg6: memref<2x32x32xbf16, #tpu.memory_space<vmem>>, %arg7: memref<2x1x32xf32, #tpu.memory_space<vmem>>, %arg8: memref<2x1x32xf32, #tpu.memory_space<vmem>>, %arg9: memref<2x1x32xf32, #tpu.memory_space<vmem>>, %arg10: memref<2x32x64xbf16, #tpu.memory_space<vmem>>, %arg11: memref<2x1x64xf32, #tpu.memory_space<vmem>>, %arg12: memref<2x64x32xbf16, #tpu.memory_space<vmem>>, %arg13: memref<2x1x32xf32, #tpu.memory_space<vmem>>, %arg14: memref<8x32xf32, #tpu.memory_space<vmem>>) attributes {dimension_semantics = [#tpu.dimension_semantics<parallel>], iteration_bounds = array<i64: 2>, scalar_prefetch = 0 : i64, scratch_operands = 0 : i64, tpu.core_type = #tpu.core_type<tc>, window_params = [{transform_indices = @transform_0, window_bounds = array<i64: 8, 32>}, {pipeline_mode = #tpu.pipeline_mode<synchronous>, transform_indices = @transform_1, window_bounds = array<i64: 2, 1, 32>}, {pipeline_mode = #tpu.pipeline_mode<synchronous>, transform_indices = @transform_2, window_bounds = array<i64: 2, 1, 32>}, {pipeline_mode = #tpu.pipeline_mode<synchronous>, transform_indices = @transform_3, window_bounds = array<i64: 2, 32, 96>}, {pipeline_mode = #tpu.pipeline_mode<synchronous>, transform_indices = @transform_4, window_bounds = array<i64: 2, 1, 96>}, {pipeline_mode = #tpu.pipeline_mode<synchronous>, transform_indices = @transform_5, window_bounds = array<i64: 2, 32, 32>}, {pipeline_mode = #tpu.pipeline_mode<synchronous>, transform_indices = @transform_6, window_bounds = array<i64: 2, 1, 32>}, {pipeline_mode = #tpu.pipeline_mode<synchronous>, transform_indices = @transform_7, window_bounds = array<i64: 2, 1, 32>}, {pipeline_mode = #tpu.pipeline_mode<synchronous>, transform_indices = @transform_8, window_bounds = array<i64: 2, 1, 32>}, {pipeline_mode = #tpu.pipeline_mode<synchronous>, transform_indices = @transform_9, window_bounds = array<i64: 2, 32, 64>}, {pipeline_mode = #tpu.pipeline_mode<synchronous>, transform_indices = @transform_10, window_bounds = array<i64: 2, 1, 64>}, {pipeline_mode = #tpu.pipeline_mode<synchronous>, transform_indices = @transform_11, window_bounds = array<i64: 2, 64, 32>}, {pipeline_mode = #tpu.pipeline_mode<synchronous>, transform_indices = @transform_12, window_bounds = array<i64: 2, 1, 32>}, {transform_indices = @transform_13, window_bounds = array<i64: 8, 32>}]} {
    %c0 = arith.constant 0 : index
    %c0_0 = arith.constant 0 : index
    %0 = vector.load %arg1[%c0, %c0_0] : memref<8x32xf32, #tpu.memory_space<vmem>>, vector<8x32xf32>
    %c0_1 = arith.constant 0 : index
    %c0_2 = arith.constant 0 : index
    %c0_3 = arith.constant 0 : index
    %1 = vector.load %arg2[%c0_1, %c0_2, %c0_3] : memref<2x1x32xf32, #tpu.memory_space<vmem>>, vector<1x1x32xf32>
    %2 = vector.shape_cast %1 : vector<1x1x32xf32> to vector<1x32xf32>
    %c0_4 = arith.constant 0 : index
    %c0_5 = arith.constant 0 : index
    %c0_6 = arith.constant 0 : index
    %3 = vector.load %arg3[%c0_4, %c0_5, %c0_6] : memref<2x1x32xf32, #tpu.memory_space<vmem>>, vector<1x1x32xf32>
    %4 = vector.shape_cast %3 : vector<1x1x32xf32> to vector<1x32xf32>
    %cst = arith.constant dense<0.000000e+00> : vector<8xf32>
    %5 = vector.multi_reduction <add>, %0, %cst [1] : vector<8x32xf32> to vector<8xf32>
    %6 = vector.shape_cast %5 : vector<8xf32> to vector<8x1xf32>
    %cst_7 = arith.constant 3.200000e+01 : f32
    %7 = vector.broadcast %cst_7 : f32 to vector<8x1xf32>
    %8 = arith.divf %6, %7 : vector<8x1xf32>
    %9 = vector.broadcast %8 : vector<8x1xf32> to vector<8x32xf32>
    %10 = arith.subf %0, %9 : vector<8x32xf32>
    %11 = arith.mulf %10, %10 : vector<8x32xf32>
    %cst_8 = arith.constant dense<0.000000e+00> : vector<8xf32>
    %12 = vector.multi_reduction <add>, %11, %cst_8 [1] : vector<8x32xf32> to vector<8xf32>
    %13 = vector.shape_cast %12 : vector<8xf32> to vector<8x1xf32>
    %cst_9 = arith.constant 3.200000e+01 : f32
    %14 = vector.broadcast %cst_9 : f32 to vector<8x1xf32>
    %15 = arith.divf %13, %14 : vector<8x1xf32>
    %16 = vector.broadcast %8 : vector<8x1xf32> to vector<8x32xf32>
    %17 = arith.subf %0, %16 : vector<8x32xf32>
    %cst_10 = arith.constant 9.99999974E-6 : f32
    %18 = vector.broadcast %cst_10 : f32 to vector<8x1xf32>
    %19 = arith.addf %15, %18 : vector<8x1xf32>
    %20 = math.rsqrt %19 : vector<8x1xf32>
    %21 = vector.broadcast %20 : vector<8x1xf32> to vector<8x32xf32>
    %22 = arith.mulf %17, %21 : vector<8x32xf32>
    %23 = vector.broadcast %2 : vector<1x32xf32> to vector<8x32xf32>
    %24 = arith.mulf %22, %23 : vector<8x32xf32>
    %25 = vector.broadcast %4 : vector<1x32xf32> to vector<8x32xf32>
    %26 = arith.addf %24, %25 : vector<8x32xf32>
    %27 = arith.truncf %26 : vector<8x32xf32> to vector<8x32xbf16>
    %c0_11 = arith.constant 0 : index
    %c0_12 = arith.constant 0 : index
    %c0_13 = arith.constant 0 : index
    %28 = vector.load %arg4[%c0_11, %c0_12, %c0_13] : memref<2x32x96xbf16, #tpu.memory_space<vmem>>, vector<1x32x96xbf16>
    %29 = vector.shape_cast %28 : vector<1x32x96xbf16> to vector<32x96xbf16>
    %cst_14 = arith.constant dense<0.000000e+00> : vector<8x96xf32>
    %30 = tpu.matmul %27, %29, %cst_14 {dimension_numbers = #tpu.dot_dimension_numbers<[1], [0], [0], [1], [0, 0, 1, 1], [], []>} : vector<8x32xbf16>, vector<32x96xbf16>, vector<8x96xf32> -> vector<8x96xf32>
    %c0_15 = arith.constant 0 : index
    %c0_16 = arith.constant 0 : index
    %c0_17 = arith.constant 0 : index
    %31 = vector.load %arg5[%c0_15, %c0_16, %c0_17] : memref<2x1x96xf32, #tpu.memory_space<vmem>>, vector<1x1x96xf32>
    %32 = vector.shape_cast %31 : vector<1x1x96xf32> to vector<1x96xf32>
    %33 = vector.broadcast %32 : vector<1x96xf32> to vector<8x96xf32>
    %34 = arith.addf %30, %33 : vector<8x96xf32>
    %35 = tpu.transpose %34, [1, 0] : vector<8x96xf32> -> vector<96x8xf32>
    %36 = vector.shape_cast %35 : vector<96x8xf32> to vector<12x8x8xf32>
    %37 = vector.extract_strided_slice %36 {offsets = [0, 0, 0], sizes = [4, 8, 8], strides = [1, 1, 1]} : vector<12x8x8xf32> to vector<4x8x8xf32>
    %38 = vector.extract_strided_slice %36 {offsets = [4, 0, 0], sizes = [4, 8, 8], strides = [1, 1, 1]} : vector<12x8x8xf32> to vector<4x8x8xf32>
    %39 = vector.extract_strided_slice %36 {offsets = [8, 0, 0], sizes = [4, 8, 8], strides = [1, 1, 1]} : vector<12x8x8xf32> to vector<4x8x8xf32>
    %40 = tpu.transpose %37, [0, 2, 1] : vector<4x8x8xf32> -> vector<4x8x8xf32>
    %cst_18 = arith.constant 0.353553385 : f32
    %41 = vector.broadcast %cst_18 : f32 to vector<4x8x8xf32>
    %42 = arith.mulf %40, %41 : vector<4x8x8xf32>
    %43 = arith.truncf %42 : vector<4x8x8xf32> to vector<4x8x8xbf16>
    %44 = tpu.transpose %38, [0, 2, 1] : vector<4x8x8xf32> -> vector<4x8x8xf32>
    %45 = arith.truncf %44 : vector<4x8x8xf32> to vector<4x8x8xbf16>
    "tpu.trace_start"() <{level = 10 : i32, message = "hqd,hkd->hqk"}> : () -> ()
    %cst_19 = arith.constant dense<0.000000e+00> : vector<4x8x8xf32>
    %46 = tpu.matmul %43, %45, %cst_19 {dimension_numbers = #tpu.dot_dimension_numbers<[2], [2], [1], [1], [0, 0, 0, 1, 1, 1], [0], [0]>} : vector<4x8x8xbf16>, vector<4x8x8xbf16>, vector<4x8x8xf32> -> vector<4x8x8xf32>
    "tpu.trace_stop"() : () -> ()
    %cst_20 = arith.constant dense<0xFF800000> : vector<4x8xf32>
    %47 = vector.multi_reduction <maximumf>, %46, %cst_20 [2] : vector<4x8x8xf32> to vector<4x8xf32>
    %48 = vector.shape_cast %47 : vector<4x8xf32> to vector<4x8x1xf32>
    %49 = vector.broadcast %48 : vector<4x8x1xf32> to vector<4x8x8xf32>
    %50 = arith.subf %46, %49 : vector<4x8x8xf32>
    %51 = math.exp %50 : vector<4x8x8xf32>
    %cst_21 = arith.constant dense<0.000000e+00> : vector<4x8xf32>
    %52 = vector.multi_reduction <add>, %51, %cst_21 [2] : vector<4x8x8xf32> to vector<4x8xf32>
    %53 = vector.shape_cast %52 : vector<4x8xf32> to vector<4x8x1xf32>
    %54 = tpu.reciprocal %53 {approx = true} : vector<4x8x1xf32> -> vector<4x8x1xf32>
    %55 = vector.broadcast %54 : vector<4x8x1xf32> to vector<4x8x8xf32>
    %56 = arith.mulf %51, %55 : vector<4x8x8xf32>
    %57 = arith.truncf %39 : vector<4x8x8xf32> to vector<4x8x8xbf16>
    %58 = arith.truncf %56 : vector<4x8x8xf32> to vector<4x8x8xbf16>
    "tpu.trace_start"() <{level = 10 : i32, message = "hdk,hqk->hdq"}> : () -> ()
    %cst_22 = arith.constant dense<0.000000e+00> : vector<4x8x8xf32>
    %59 = tpu.matmul %57, %58, %cst_22 {dimension_numbers = #tpu.dot_dimension_numbers<[2], [2], [1], [1], [0, 0, 0, 1, 1, 1], [0], [0]>} : vector<4x8x8xbf16>, vector<4x8x8xbf16>, vector<4x8x8xf32> -> vector<4x8x8xf32>
    "tpu.trace_stop"() : () -> ()
    %60 = vector.shape_cast %59 : vector<4x8x8xf32> to vector<32x8xf32>
    %61 = tpu.transpose %60, [1, 0] : vector<32x8xf32> -> vector<8x32xf32>
    %62 = arith.truncf %61 : vector<8x32xf32> to vector<8x32xbf16>
    %c0_23 = arith.constant 0 : index
    %c0_24 = arith.constant 0 : index
    %c0_25 = arith.constant 0 : index
    %63 = vector.load %arg6[%c0_23, %c0_24, %c0_25] : memref<2x32x32xbf16, #tpu.memory_space<vmem>>, vector<1x32x32xbf16>
    %64 = vector.shape_cast %63 : vector<1x32x32xbf16> to vector<32x32xbf16>
    %cst_26 = arith.constant dense<0.000000e+00> : vector<8x32xf32>
    %65 = tpu.matmul %62, %64, %cst_26 {dimension_numbers = #tpu.dot_dimension_numbers<[1], [0], [0], [1], [0, 0, 1, 1], [], []>} : vector<8x32xbf16>, vector<32x32xbf16>, vector<8x32xf32> -> vector<8x32xf32>
    %c0_27 = arith.constant 0 : index
    %c0_28 = arith.constant 0 : index
    %c0_29 = arith.constant 0 : index
    %66 = vector.load %arg7[%c0_27, %c0_28, %c0_29] : memref<2x1x32xf32, #tpu.memory_space<vmem>>, vector<1x1x32xf32>
    %67 = vector.shape_cast %66 : vector<1x1x32xf32> to vector<1x32xf32>
    %68 = vector.broadcast %67 : vector<1x32xf32> to vector<8x32xf32>
    %69 = arith.addf %65, %68 : vector<8x32xf32>
    %70 = arith.addf %0, %69 : vector<8x32xf32>
    %c0_30 = arith.constant 0 : index
    %c0_31 = arith.constant 0 : index
    %c0_32 = arith.constant 0 : index
    %71 = vector.load %arg8[%c0_30, %c0_31, %c0_32] : memref<2x1x32xf32, #tpu.memory_space<vmem>>, vector<1x1x32xf32>
    %72 = vector.shape_cast %71 : vector<1x1x32xf32> to vector<1x32xf32>
    %c0_33 = arith.constant 0 : index
    %c0_34 = arith.constant 0 : index
    %c0_35 = arith.constant 0 : index
    %73 = vector.load %arg9[%c0_33, %c0_34, %c0_35] : memref<2x1x32xf32, #tpu.memory_space<vmem>>, vector<1x1x32xf32>
    %74 = vector.shape_cast %73 : vector<1x1x32xf32> to vector<1x32xf32>
    %cst_36 = arith.constant dense<0.000000e+00> : vector<8xf32>
    %75 = vector.multi_reduction <add>, %70, %cst_36 [1] : vector<8x32xf32> to vector<8xf32>
    %76 = vector.shape_cast %75 : vector<8xf32> to vector<8x1xf32>
    %cst_37 = arith.constant 3.200000e+01 : f32
    %77 = vector.broadcast %cst_37 : f32 to vector<8x1xf32>
    %78 = arith.divf %76, %77 : vector<8x1xf32>
    %79 = vector.broadcast %78 : vector<8x1xf32> to vector<8x32xf32>
    %80 = arith.subf %70, %79 : vector<8x32xf32>
    %81 = arith.mulf %80, %80 : vector<8x32xf32>
    %cst_38 = arith.constant dense<0.000000e+00> : vector<8xf32>
    %82 = vector.multi_reduction <add>, %81, %cst_38 [1] : vector<8x32xf32> to vector<8xf32>
    %83 = vector.shape_cast %82 : vector<8xf32> to vector<8x1xf32>
    %cst_39 = arith.constant 3.200000e+01 : f32
    %84 = vector.broadcast %cst_39 : f32 to vector<8x1xf32>
    %85 = arith.divf %83, %84 : vector<8x1xf32>
    %86 = vector.broadcast %78 : vector<8x1xf32> to vector<8x32xf32>
    %87 = arith.subf %70, %86 : vector<8x32xf32>
    %cst_40 = arith.constant 9.99999974E-6 : f32
    %88 = vector.broadcast %cst_40 : f32 to vector<8x1xf32>
    %89 = arith.addf %85, %88 : vector<8x1xf32>
    %90 = math.rsqrt %89 : vector<8x1xf32>
    %91 = vector.broadcast %90 : vector<8x1xf32> to vector<8x32xf32>
    %92 = arith.mulf %87, %91 : vector<8x32xf32>
    %93 = vector.broadcast %72 : vector<1x32xf32> to vector<8x32xf32>
    %94 = arith.mulf %92, %93 : vector<8x32xf32>
    %95 = vector.broadcast %74 : vector<1x32xf32> to vector<8x32xf32>
    %96 = arith.addf %94, %95 : vector<8x32xf32>
    %97 = arith.truncf %96 : vector<8x32xf32> to vector<8x32xbf16>
    %c0_41 = arith.constant 0 : index
    %c0_42 = arith.constant 0 : index
    %c0_43 = arith.constant 0 : index
    %98 = vector.load %arg10[%c0_41, %c0_42, %c0_43] : memref<2x32x64xbf16, #tpu.memory_space<vmem>>, vector<1x32x64xbf16>
    %99 = vector.shape_cast %98 : vector<1x32x64xbf16> to vector<32x64xbf16>
    %cst_44 = arith.constant dense<0.000000e+00> : vector<8x64xf32>
    %100 = tpu.matmul %97, %99, %cst_44 {dimension_numbers = #tpu.dot_dimension_numbers<[1], [0], [0], [1], [0, 0, 1, 1], [], []>} : vector<8x32xbf16>, vector<32x64xbf16>, vector<8x64xf32> -> vector<8x64xf32>
    %c0_45 = arith.constant 0 : index
    %c0_46 = arith.constant 0 : index
    %c0_47 = arith.constant 0 : index
    %101 = vector.load %arg11[%c0_45, %c0_46, %c0_47] : memref<2x1x64xf32, #tpu.memory_space<vmem>>, vector<1x1x64xf32>
    %102 = vector.shape_cast %101 : vector<1x1x64xf32> to vector<1x64xf32>
    %103 = vector.broadcast %102 : vector<1x64xf32> to vector<8x64xf32>
    %104 = arith.addf %100, %103 : vector<8x64xf32>
    %cst_48 = arith.constant 0.000000e+00 : f32
    %105 = vector.broadcast %cst_48 : f32 to vector<8x64xf32>
    %106 = arith.maximumf %104, %105 : vector<8x64xf32>
    %107 = arith.truncf %106 : vector<8x64xf32> to vector<8x64xbf16>
    %c0_49 = arith.constant 0 : index
    %c0_50 = arith.constant 0 : index
    %c0_51 = arith.constant 0 : index
    %108 = vector.load %arg12[%c0_49, %c0_50, %c0_51] : memref<2x64x32xbf16, #tpu.memory_space<vmem>>, vector<1x64x32xbf16>
    %109 = vector.shape_cast %108 : vector<1x64x32xbf16> to vector<64x32xbf16>
    %cst_52 = arith.constant dense<0.000000e+00> : vector<8x32xf32>
    %110 = tpu.matmul %107, %109, %cst_52 {dimension_numbers = #tpu.dot_dimension_numbers<[1], [0], [0], [1], [0, 0, 1, 1], [], []>} : vector<8x64xbf16>, vector<64x32xbf16>, vector<8x32xf32> -> vector<8x32xf32>
    %c0_53 = arith.constant 0 : index
    %c0_54 = arith.constant 0 : index
    %c0_55 = arith.constant 0 : index
    %111 = vector.load %arg13[%c0_53, %c0_54, %c0_55] : memref<2x1x32xf32, #tpu.memory_space<vmem>>, vector<1x1x32xf32>
    %112 = vector.shape_cast %111 : vector<1x1x32xf32> to vector<1x32xf32>
    %113 = vector.broadcast %112 : vector<1x32xf32> to vector<8x32xf32>
    %114 = arith.addf %110, %113 : vector<8x32xf32>
    %115 = arith.addf %70, %114 : vector<8x32xf32>
    %c1 = arith.constant 1 : index
    %c0_56 = arith.constant 0 : index
    %c0_57 = arith.constant 0 : index
    %116 = vector.load %arg2[%c1, %c0_56, %c0_57] : memref<2x1x32xf32, #tpu.memory_space<vmem>>, vector<1x1x32xf32>
    %117 = vector.shape_cast %116 : vector<1x1x32xf32> to vector<1x32xf32>
    %c1_58 = arith.constant 1 : index
    %c0_59 = arith.constant 0 : index
    %c0_60 = arith.constant 0 : index
    %118 = vector.load %arg3[%c1_58, %c0_59, %c0_60] : memref<2x1x32xf32, #tpu.memory_space<vmem>>, vector<1x1x32xf32>
    %119 = vector.shape_cast %118 : vector<1x1x32xf32> to vector<1x32xf32>
    %cst_61 = arith.constant dense<0.000000e+00> : vector<8xf32>
    %120 = vector.multi_reduction <add>, %115, %cst_61 [1] : vector<8x32xf32> to vector<8xf32>
    %121 = vector.shape_cast %120 : vector<8xf32> to vector<8x1xf32>
    %cst_62 = arith.constant 3.200000e+01 : f32
    %122 = vector.broadcast %cst_62 : f32 to vector<8x1xf32>
    %123 = arith.divf %121, %122 : vector<8x1xf32>
    %124 = vector.broadcast %123 : vector<8x1xf32> to vector<8x32xf32>
    %125 = arith.subf %115, %124 : vector<8x32xf32>
    %126 = arith.mulf %125, %125 : vector<8x32xf32>
    %cst_63 = arith.constant dense<0.000000e+00> : vector<8xf32>
    %127 = vector.multi_reduction <add>, %126, %cst_63 [1] : vector<8x32xf32> to vector<8xf32>
    %128 = vector.shape_cast %127 : vector<8xf32> to vector<8x1xf32>
    %cst_64 = arith.constant 3.200000e+01 : f32
    %129 = vector.broadcast %cst_64 : f32 to vector<8x1xf32>
    %130 = arith.divf %128, %129 : vector<8x1xf32>
    %131 = vector.broadcast %123 : vector<8x1xf32> to vector<8x32xf32>
    %132 = arith.subf %115, %131 : vector<8x32xf32>
    %cst_65 = arith.constant 9.99999974E-6 : f32
    %133 = vector.broadcast %cst_65 : f32 to vector<8x1xf32>
    %134 = arith.addf %130, %133 : vector<8x1xf32>
    %135 = math.rsqrt %134 : vector<8x1xf32>
    %136 = vector.broadcast %135 : vector<8x1xf32> to vector<8x32xf32>
    %137 = arith.mulf %132, %136 : vector<8x32xf32>
    %138 = vector.broadcast %117 : vector<1x32xf32> to vector<8x32xf32>
    %139 = arith.mulf %137, %138 : vector<8x32xf32>
    %140 = vector.broadcast %119 : vector<1x32xf32> to vector<8x32xf32>
    %141 = arith.addf %139, %140 : vector<8x32xf32>
    %142 = arith.truncf %141 : vector<8x32xf32> to vector<8x32xbf16>
    %c1_66 = arith.constant 1 : index
    %c0_67 = arith.constant 0 : index
    %c0_68 = arith.constant 0 : index
    %143 = vector.load %arg4[%c1_66, %c0_67, %c0_68] : memref<2x32x96xbf16, #tpu.memory_space<vmem>>, vector<1x32x96xbf16>
    %144 = vector.shape_cast %143 : vector<1x32x96xbf16> to vector<32x96xbf16>
    %cst_69 = arith.constant dense<0.000000e+00> : vector<8x96xf32>
    %145 = tpu.matmul %142, %144, %cst_69 {dimension_numbers = #tpu.dot_dimension_numbers<[1], [0], [0], [1], [0, 0, 1, 1], [], []>} : vector<8x32xbf16>, vector<32x96xbf16>, vector<8x96xf32> -> vector<8x96xf32>
    %c1_70 = arith.constant 1 : index
    %c0_71 = arith.constant 0 : index
    %c0_72 = arith.constant 0 : index
    %146 = vector.load %arg5[%c1_70, %c0_71, %c0_72] : memref<2x1x96xf32, #tpu.memory_space<vmem>>, vector<1x1x96xf32>
    %147 = vector.shape_cast %146 : vector<1x1x96xf32> to vector<1x96xf32>
    %148 = vector.broadcast %147 : vector<1x96xf32> to vector<8x96xf32>
    %149 = arith.addf %145, %148 : vector<8x96xf32>
    %150 = tpu.transpose %149, [1, 0] : vector<8x96xf32> -> vector<96x8xf32>
    %151 = vector.shape_cast %150 : vector<96x8xf32> to vector<12x8x8xf32>
    %152 = vector.extract_strided_slice %151 {offsets = [0, 0, 0], sizes = [4, 8, 8], strides = [1, 1, 1]} : vector<12x8x8xf32> to vector<4x8x8xf32>
    %153 = vector.extract_strided_slice %151 {offsets = [4, 0, 0], sizes = [4, 8, 8], strides = [1, 1, 1]} : vector<12x8x8xf32> to vector<4x8x8xf32>
    %154 = vector.extract_strided_slice %151 {offsets = [8, 0, 0], sizes = [4, 8, 8], strides = [1, 1, 1]} : vector<12x8x8xf32> to vector<4x8x8xf32>
    %155 = tpu.transpose %152, [0, 2, 1] : vector<4x8x8xf32> -> vector<4x8x8xf32>
    %cst_73 = arith.constant 0.353553385 : f32
    %156 = vector.broadcast %cst_73 : f32 to vector<4x8x8xf32>
    %157 = arith.mulf %155, %156 : vector<4x8x8xf32>
    %158 = arith.truncf %157 : vector<4x8x8xf32> to vector<4x8x8xbf16>
    %159 = tpu.transpose %153, [0, 2, 1] : vector<4x8x8xf32> -> vector<4x8x8xf32>
    %160 = arith.truncf %159 : vector<4x8x8xf32> to vector<4x8x8xbf16>
    "tpu.trace_start"() <{level = 10 : i32, message = "hqd,hkd->hqk"}> : () -> ()
    %cst_74 = arith.constant dense<0.000000e+00> : vector<4x8x8xf32>
    %161 = tpu.matmul %158, %160, %cst_74 {dimension_numbers = #tpu.dot_dimension_numbers<[2], [2], [1], [1], [0, 0, 0, 1, 1, 1], [0], [0]>} : vector<4x8x8xbf16>, vector<4x8x8xbf16>, vector<4x8x8xf32> -> vector<4x8x8xf32>
    "tpu.trace_stop"() : () -> ()
    %cst_75 = arith.constant dense<0xFF800000> : vector<4x8xf32>
    %162 = vector.multi_reduction <maximumf>, %161, %cst_75 [2] : vector<4x8x8xf32> to vector<4x8xf32>
    %163 = vector.shape_cast %162 : vector<4x8xf32> to vector<4x8x1xf32>
    %164 = vector.broadcast %163 : vector<4x8x1xf32> to vector<4x8x8xf32>
    %165 = arith.subf %161, %164 : vector<4x8x8xf32>
    %166 = math.exp %165 : vector<4x8x8xf32>
    %cst_76 = arith.constant dense<0.000000e+00> : vector<4x8xf32>
    %167 = vector.multi_reduction <add>, %166, %cst_76 [2] : vector<4x8x8xf32> to vector<4x8xf32>
    %168 = vector.shape_cast %167 : vector<4x8xf32> to vector<4x8x1xf32>
    %169 = tpu.reciprocal %168 {approx = true} : vector<4x8x1xf32> -> vector<4x8x1xf32>
    %170 = vector.broadcast %169 : vector<4x8x1xf32> to vector<4x8x8xf32>
    %171 = arith.mulf %166, %170 : vector<4x8x8xf32>
    %172 = arith.truncf %154 : vector<4x8x8xf32> to vector<4x8x8xbf16>
    %173 = arith.truncf %171 : vector<4x8x8xf32> to vector<4x8x8xbf16>
    "tpu.trace_start"() <{level = 10 : i32, message = "hdk,hqk->hdq"}> : () -> ()
    %cst_77 = arith.constant dense<0.000000e+00> : vector<4x8x8xf32>
    %174 = tpu.matmul %172, %173, %cst_77 {dimension_numbers = #tpu.dot_dimension_numbers<[2], [2], [1], [1], [0, 0, 0, 1, 1, 1], [0], [0]>} : vector<4x8x8xbf16>, vector<4x8x8xbf16>, vector<4x8x8xf32> -> vector<4x8x8xf32>
    "tpu.trace_stop"() : () -> ()
    %175 = vector.shape_cast %174 : vector<4x8x8xf32> to vector<32x8xf32>
    %176 = tpu.transpose %175, [1, 0] : vector<32x8xf32> -> vector<8x32xf32>
    %177 = arith.truncf %176 : vector<8x32xf32> to vector<8x32xbf16>
    %c1_78 = arith.constant 1 : index
    %c0_79 = arith.constant 0 : index
    %c0_80 = arith.constant 0 : index
    %178 = vector.load %arg6[%c1_78, %c0_79, %c0_80] : memref<2x32x32xbf16, #tpu.memory_space<vmem>>, vector<1x32x32xbf16>
    %179 = vector.shape_cast %178 : vector<1x32x32xbf16> to vector<32x32xbf16>
    %cst_81 = arith.constant dense<0.000000e+00> : vector<8x32xf32>
    %180 = tpu.matmul %177, %179, %cst_81 {dimension_numbers = #tpu.dot_dimension_numbers<[1], [0], [0], [1], [0, 0, 1, 1], [], []>} : vector<8x32xbf16>, vector<32x32xbf16>, vector<8x32xf32> -> vector<8x32xf32>
    %c1_82 = arith.constant 1 : index
    %c0_83 = arith.constant 0 : index
    %c0_84 = arith.constant 0 : index
    %181 = vector.load %arg7[%c1_82, %c0_83, %c0_84] : memref<2x1x32xf32, #tpu.memory_space<vmem>>, vector<1x1x32xf32>
    %182 = vector.shape_cast %181 : vector<1x1x32xf32> to vector<1x32xf32>
    %183 = vector.broadcast %182 : vector<1x32xf32> to vector<8x32xf32>
    %184 = arith.addf %180, %183 : vector<8x32xf32>
    %185 = arith.addf %115, %184 : vector<8x32xf32>
    %c1_85 = arith.constant 1 : index
    %c0_86 = arith.constant 0 : index
    %c0_87 = arith.constant 0 : index
    %186 = vector.load %arg8[%c1_85, %c0_86, %c0_87] : memref<2x1x32xf32, #tpu.memory_space<vmem>>, vector<1x1x32xf32>
    %187 = vector.shape_cast %186 : vector<1x1x32xf32> to vector<1x32xf32>
    %c1_88 = arith.constant 1 : index
    %c0_89 = arith.constant 0 : index
    %c0_90 = arith.constant 0 : index
    %188 = vector.load %arg9[%c1_88, %c0_89, %c0_90] : memref<2x1x32xf32, #tpu.memory_space<vmem>>, vector<1x1x32xf32>
    %189 = vector.shape_cast %188 : vector<1x1x32xf32> to vector<1x32xf32>
    %cst_91 = arith.constant dense<0.000000e+00> : vector<8xf32>
    %190 = vector.multi_reduction <add>, %185, %cst_91 [1] : vector<8x32xf32> to vector<8xf32>
    %191 = vector.shape_cast %190 : vector<8xf32> to vector<8x1xf32>
    %cst_92 = arith.constant 3.200000e+01 : f32
    %192 = vector.broadcast %cst_92 : f32 to vector<8x1xf32>
    %193 = arith.divf %191, %192 : vector<8x1xf32>
    %194 = vector.broadcast %193 : vector<8x1xf32> to vector<8x32xf32>
    %195 = arith.subf %185, %194 : vector<8x32xf32>
    %196 = arith.mulf %195, %195 : vector<8x32xf32>
    %cst_93 = arith.constant dense<0.000000e+00> : vector<8xf32>
    %197 = vector.multi_reduction <add>, %196, %cst_93 [1] : vector<8x32xf32> to vector<8xf32>
    %198 = vector.shape_cast %197 : vector<8xf32> to vector<8x1xf32>
    %cst_94 = arith.constant 3.200000e+01 : f32
    %199 = vector.broadcast %cst_94 : f32 to vector<8x1xf32>
    %200 = arith.divf %198, %199 : vector<8x1xf32>
    %201 = vector.broadcast %193 : vector<8x1xf32> to vector<8x32xf32>
    %202 = arith.subf %185, %201 : vector<8x32xf32>
    %cst_95 = arith.constant 9.99999974E-6 : f32
    %203 = vector.broadcast %cst_95 : f32 to vector<8x1xf32>
    %204 = arith.addf %200, %203 : vector<8x1xf32>
    %205 = math.rsqrt %204 : vector<8x1xf32>
    %206 = vector.broadcast %205 : vector<8x1xf32> to vector<8x32xf32>
    %207 = arith.mulf %202, %206 : vector<8x32xf32>
    %208 = vector.broadcast %187 : vector<1x32xf32> to vector<8x32xf32>
    %209 = arith.mulf %207, %208 : vector<8x32xf32>
    %210 = vector.broadcast %189 : vector<1x32xf32> to vector<8x32xf32>
    %211 = arith.addf %209, %210 : vector<8x32xf32>
    %212 = arith.truncf %211 : vector<8x32xf32> to vector<8x32xbf16>
    %c1_96 = arith.constant 1 : index
    %c0_97 = arith.constant 0 : index
    %c0_98 = arith.constant 0 : index
    %213 = vector.load %arg10[%c1_96, %c0_97, %c0_98] : memref<2x32x64xbf16, #tpu.memory_space<vmem>>, vector<1x32x64xbf16>
    %214 = vector.shape_cast %213 : vector<1x32x64xbf16> to vector<32x64xbf16>
    %cst_99 = arith.constant dense<0.000000e+00> : vector<8x64xf32>
    %215 = tpu.matmul %212, %214, %cst_99 {dimension_numbers = #tpu.dot_dimension_numbers<[1], [0], [0], [1], [0, 0, 1, 1], [], []>} : vector<8x32xbf16>, vector<32x64xbf16>, vector<8x64xf32> -> vector<8x64xf32>
    %c1_100 = arith.constant 1 : index
    %c0_101 = arith.constant 0 : index
    %c0_102 = arith.constant 0 : index
    %216 = vector.load %arg11[%c1_100, %c0_101, %c0_102] : memref<2x1x64xf32, #tpu.memory_space<vmem>>, vector<1x1x64xf32>
    %217 = vector.shape_cast %216 : vector<1x1x64xf32> to vector<1x64xf32>
    %218 = vector.broadcast %217 : vector<1x64xf32> to vector<8x64xf32>
    %219 = arith.addf %215, %218 : vector<8x64xf32>
    %cst_103 = arith.constant 0.000000e+00 : f32
    %220 = vector.broadcast %cst_103 : f32 to vector<8x64xf32>
    %221 = arith.maximumf %219, %220 : vector<8x64xf32>
    %222 = arith.truncf %221 : vector<8x64xf32> to vector<8x64xbf16>
    %c1_104 = arith.constant 1 : index
    %c0_105 = arith.constant 0 : index
    %c0_106 = arith.constant 0 : index
    %223 = vector.load %arg12[%c1_104, %c0_105, %c0_106] : memref<2x64x32xbf16, #tpu.memory_space<vmem>>, vector<1x64x32xbf16>
    %224 = vector.shape_cast %223 : vector<1x64x32xbf16> to vector<64x32xbf16>
    %cst_107 = arith.constant dense<0.000000e+00> : vector<8x32xf32>
    %225 = tpu.matmul %222, %224, %cst_107 {dimension_numbers = #tpu.dot_dimension_numbers<[1], [0], [0], [1], [0, 0, 1, 1], [], []>} : vector<8x64xbf16>, vector<64x32xbf16>, vector<8x32xf32> -> vector<8x32xf32>
    %c1_108 = arith.constant 1 : index
    %c0_109 = arith.constant 0 : index
    %c0_110 = arith.constant 0 : index
    %226 = vector.load %arg13[%c1_108, %c0_109, %c0_110] : memref<2x1x32xf32, #tpu.memory_space<vmem>>, vector<1x1x32xf32>
    %227 = vector.shape_cast %226 : vector<1x1x32xf32> to vector<1x32xf32>
    %228 = vector.broadcast %227 : vector<1x32xf32> to vector<8x32xf32>
    %229 = arith.addf %225, %228 : vector<8x32xf32>
    %230 = arith.addf %185, %229 : vector<8x32xf32>
    %c0_111 = arith.constant 0 : index
    %c0_112 = arith.constant 0 : index
    %231 = vector.load %arg14[%c0_111, %c0_112] : memref<8x32xf32, #tpu.memory_space<vmem>>, vector<8x32xf32>
    tpu.vector_store %arg14[%c0_111, %c0_112], %230 {strides = array<i32>} : memref<8x32xf32, #tpu.memory_space<vmem>>, vector<8x32xf32>,
    return
  }
  func.func @transform_0(%arg0: i32) -> (i32, i32) {
    %c0_i32 = arith.constant 0 : i32
    %c0_i32_0 = arith.constant 0 : i32
    return %arg0, %c0_i32 : i32, i32
  }
  func.func @transform_1(%arg0: i32) -> (i32, i32, i32) {
    %c0_i32 = arith.constant 0 : i32
    %c0_i32_0 = arith.constant 0 : i32
    %c0_i32_1 = arith.constant 0 : i32
    %c0_i32_2 = arith.constant 0 : i32
    return %c0_i32, %c0_i32_0, %c0_i32_1 : i32, i32, i32
  }
  func.func @transform_2(%arg0: i32) -> (i32, i32, i32) {
    %c0_i32 = arith.constant 0 : i32
    %c0_i32_0 = arith.constant 0 : i32
    %c0_i32_1 = arith.constant 0 : i32
    %c0_i32_2 = arith.constant 0 : i32
    return %c0_i32, %c0_i32_0, %c0_i32_1 : i32, i32, i32
  }
  func.func @transform_3(%arg0: i32) -> (i32, i32, i32) {
    %c0_i32 = arith.constant 0 : i32
    %c0_i32_0 = arith.constant 0 : i32
    %c0_i32_1 = arith.constant 0 : i32
    %c0_i32_2 = arith.constant 0 : i32
    return %c0_i32, %c0_i32_0, %c0_i32_1 : i32, i32, i32
  }
  func.func @transform_4(%arg0: i32) -> (i32, i32, i32) {
    %c0_i32 = arith.constant 0 : i32
    %c0_i32_0 = arith.constant 0 : i32
    %c0_i32_1 = arith.constant 0 : i32
    %c0_i32_2 = arith.constant 0 : i32
    return %c0_i32, %c0_i32_0, %c0_i32_1 : i32, i32, i32
  }
  func.func @transform_5(%arg0: i32) -> (i32, i32, i32) {
    %c0_i32 = arith.constant 0 : i32
    %c0_i32_0 = arith.constant 0 : i32
    %c0_i32_1 = arith.constant 0 : i32
    %c0_i32_2 = arith.constant 0 : i32
    return %c0_i32, %c0_i32_0, %c0_i32_1 : i32, i32, i32
  }
  func.func @transform_6(%arg0: i32) -> (i32, i32, i32) {
    %c0_i32 = arith.constant 0 : i32
    %c0_i32_0 = arith.constant 0 : i32
    %c0_i32_1 = arith.constant 0 : i32
    %c0_i32_2 = arith.constant 0 : i32
    return %c0_i32, %c0_i32_0, %c0_i32_1 : i32, i32, i32
  }
  func.func @transform_7(%arg0: i32) -> (i32, i32, i32) {
    %c0_i32 = arith.constant 0 : i32
    %c0_i32_0 = arith.constant 0 : i32
    %c0_i32_1 = arith.constant 0 : i32
    %c0_i32_2 = arith.constant 0 : i32
    return %c0_i32, %c0_i32_0, %c0_i32_1 : i32, i32, i32
  }
  func.func @transform_8(%arg0: i32) -> (i32, i32, i32) {
    %c0_i32 = arith.constant 0 : i32
    %c0_i32_0 = arith.constant 0 : i32
    %c0_i32_1 = arith.constant 0 : i32
    %c0_i32_2 = arith.constant 0 : i32
    return %c0_i32, %c0_i32_0, %c0_i32_1 : i32, i32, i32
  }
  func.func @transform_9(%arg0: i32) -> (i32, i32, i32) {
    %c0_i32 = arith.constant 0 : i32
    %c0_i32_0 = arith.constant 0 : i32
    %c0_i32_1 = arith.constant 0 : i32
    %c0_i32_2 = arith.constant 0 : i32
    return %c0_i32, %c0_i32_0, %c0_i32_1 : i32, i32, i32
  }
  func.func @transform_10(%arg0: i32) -> (i32, i32, i32) {
    %c0_i32 = arith.constant 0 : i32
    %c0_i32_0 = arith.constant 0 : i32
    %c0_i32_1 = arith.constant 0 : i32
    %c0_i32_2 = arith.constant 0 : i32
    return %c0_i32, %c0_i32_0, %c0_i32_1 : i32, i32, i32
  }
  func.func @transform_11(%arg0: i32) -> (i32, i32, i32) {
    %c0_i32 = arith.constant 0 : i32
    %c0_i32_0 = arith.constant 0 : i32
    %c0_i32_1 = arith.constant 0 : i32
    %c0_i32_2 = arith.constant 0 : i32
    return %c0_i32, %c0_i32_0, %c0_i32_1 : i32, i32, i32
  }
  func.func @transform_12(%arg0: i32) -> (i32, i32, i32) {
    %c0_i32 = arith.constant 0 : i32
    %c0_i32_0 = arith.constant 0 : i32
    %c0_i32_1 = arith.constant 0 : i32
    %c0_i32_2 = arith.constant 0 : i32
    return %c0_i32, %c0_i32_0, %c0_i32_1 : i32, i32, i32
  }
  func.func @transform_13(%arg0: i32) -> (i32, i32) {
    %c0_i32 = arith.constant 0 : i32
    %c0_i32_0 = arith.constant 0 : i32
    return %arg0, %c0_i32 : i32, i32
  }
}

</mosaic_0001>

<llo_original>
// kernel: tpu_custom_call.1
$region0: #{tpu_custom_call.1}
  #allocation0 [shape = 'u32[]', space=smem, size = 0x4, offset = 0x4, fixed_abs, tag = 'smem constant byte address 0x4 - core index']
  #allocation1 [shape = 'u32[144,128]{1,0:T(1,128)}', space=vmem, size = 0x12000, scoped, tag = 'internal scratch']
  %s0 = inlined_call_operand.hbm [shape: f32[16,32], index: 0, kind: input, shape index: {}]
  %s1 = inlined_call_operand.hbm [shape: f32[2,1,32], index: 1, kind: input, shape index: {}]
  %s2 = inlined_call_operand.vmem [shape: f32[2,1,32], index: 2, kind: input, shape index: {}]
  %s3 = inlined_call_operand.vmem [shape: bf16[2,32,96], index: 3, kind: input, shape index: {}]
  %s4 = inlined_call_operand.vmem [shape: f32[2,1,96], index: 4, kind: input, shape index: {}]
  %s5 = inlined_call_operand.vmem [shape: bf16[2,32,32], index: 5, kind: input, shape index: {}]
  %s6 = inlined_call_operand.vmem [shape: f32[2,1,32], index: 6, kind: input, shape index: {}]
  %s7 = inlined_call_operand.vmem [shape: f32[2,1,32], index: 7, kind: input, shape index: {}]
  %s8 = inlined_call_operand.vmem [shape: f32[2,1,32], index: 8, kind: input, shape index: {}]
  %s9 = inlined_call_operand.vmem [shape: bf16[2,32,64], index: 9, kind: input, shape index: {}]
  %s10 = inlined_call_operand.vmem [shape: f32[2,1,64], index: 10, kind: input, shape index: {}]
  %s11 = inlined_call_operand.vmem [shape: bf16[2,64,32], index: 11, kind: input, shape index: {}]
  %s12 = inlined_call_operand.vmem [shape: f32[2,1,32], index: 12, kind: input, shape index: {}]
  %s13 = inlined_call_operand.hbm [shape: f32[16,32], index: 13, kind: output, shape index: {}]
  %s14 = sld [smem:[#allocation0]]
  $region93: #{tpu_custom_call.1} parent=0
    _
  %s16 = ssub.s32 1, %s14
  %s17 = scalar_select 0, %s16, %s14
  $region1: #{tpu_custom_call.1} parent=0
    #allocation2 [shape = 'u8[8192]{0}', space=vmem, size = 0x2000, scoped, tag = 'input window, operand 0']
    #allocation3 [shape = 's32[2]{0}', space=sflag, size = 0x8, scoped, tag = 'scoped memory for tpu_custom_call.1']
    #allocation4 [shape = 's32[2]{0}', space=sflag, size = 0x8, scoped, tag = 'scoped memory for tpu_custom_call.1']
    #allocation5 [shape = 'u8[1024]{0}', space=vmem, size = 0x400, scoped, tag = 'input window, operand 1, single buffered']
    #allocation6 [shape = 's32[1]{0}', space=sflag, size = 0x4, scoped, tag = 'scoped memory for tpu_custom_call.1']
    #allocation7 [shape = 'u8[8192]{0}', space=vmem, size = 0x2000, scoped, tag = 'output window, operand 0']
    %18 = vsyncpa [#allocation3], 0
    %s19 = scalar_lea.sflag [#allocation3], 1
    %20 = vsyncpa %s19, 0
    %21 = vsyncpa [#allocation6], 0
    %22 = vsyncpa [#allocation4], 0
    %s23 = scalar_lea.sflag [#allocation4], 1
    %24 = vsyncpa %s23, 0
    loop: start=0, step=1, limit=4
    $region2: #{tpu_custom_call.1} parent=1 // loop_pre_header
      _
    $region3: #{tpu_custom_call.1} parent=1 // loop_header
      %s26 = sphi 0, %s30
      %p27 = scmp.ge.s32.totalorder %s26, 4
      %s36 = sphi 0, %s38
      %s39 = sphi 0, %s36
      %s40 = sphi 0, %s39
      %s56 = sphi 0, %s40
      %s60 = sphi 0, %s60
      %s62 = sphi 0, %s60
      %s63 = sphi 0, %s62
      %s77 = sphi 0, %s63
      %s81 = sphi 0, %s81
      %s83 = sphi 0, %s81
      %s84 = sphi 0, %s83
      %s98 = sphi 0, %s84
      %s102 = sphi 0, %s102
      %s104 = sphi 0, %s102
      %s105 = sphi 0, %s104
      %s119 = sphi 0, %s105
      %s123 = sphi 0, %s123
      %s125 = sphi 0, %s123
      %s126 = sphi 0, %s125
      %s140 = sphi 0, %s126
      %s144 = sphi 0, %s144
      %s146 = sphi 0, %s144
      %s147 = sphi 0, %s146
      %s161 = sphi 0, %s147
      %s165 = sphi 0, %s165
      %s167 = sphi 0, %s165
      %s168 = sphi 0, %s167
      %s182 = sphi 0, %s168
      %s186 = sphi 0, %s186
      %s188 = sphi 0, %s186
      %s189 = sphi 0, %s188
      %s203 = sphi 0, %s189
      %s207 = sphi 0, %s207
      %s209 = sphi 0, %s207
      %s210 = sphi 0, %s209
      %s224 = sphi 0, %s210
      %s228 = sphi 0, %s228
      %s230 = sphi 0, %s228
      %s231 = sphi 0, %s230
      %s245 = sphi 0, %s231
      %s249 = sphi 0, %s249
      %s251 = sphi 0, %s249
      %s252 = sphi 0, %s251
      %s266 = sphi 0, %s252
      %s270 = sphi 0, %s270
      %s272 = sphi 0, %s270
      %s273 = sphi 0, %s272
      %s287 = sphi 0, %s273
      %s291 = sphi 0, %s291
      %s293 = sphi 0, %s291
      %s294 = sphi 0, %s293
      %s308 = sphi 0, %s294
      %s314 = sphi 0, %s316
      %s317 = sphi 0, %s314
      %s318 = sphi 0, %s317
      %s334 = sphi 0, %s318
    $region4: #{tpu_custom_call.1} parent=1 // loop_header_branch
      %29 = sbr.rel (%p27) target = $region8
    $region5: #{tpu_custom_call.1} parent=1 // loop_body
      %s31 = ssub.s32 %s26, 1
      %s32 = ssub.s32 %s26, 2
      %s33 = sadd.s32 %s26, 1
      %s34 = ssub.s32 %s26, %s33
      %p35 = scmp.eq.s32.totalorder %s34, 0
      %s37 = sadd.s32 %s36, 1
      %s38 = scalar_select %p35, %s36, %s37
      %p41 = pneg %p35
      %p42 = scmp.eq.s32.totalorder %s26, 1
      %p43 = por %p41, %p42
      %p44 = scmp.ne.s32.totalorder %s36, %s39
      %p45 = scmp.eq.s32.totalorder %s26, 0
      %p46 = por %p44, %p45
      %p47 = scmp.ne.s32.totalorder %s36, %s39
      %p48 = scmp.eq.s32.totalorder %s31, 1
      %p49 = por %p47, %p48
      %p50 = scmp.ne.s32.totalorder %s39, %s40
      %p51 = scmp.eq.s32.totalorder %s31, 0
      %p52 = por %p50, %p51
      %p53 = scmp.ne.s32.totalorder %s39, %s40
      %p54 = scmp.eq.s32.totalorder %s32, 1
      %p55 = por %p53, %p54
      %p57 = scmp.ne.s32.totalorder %s40, %s56
      %p58 = scmp.eq.s32.totalorder %s32, 0
      %p59 = por %p57, %p58
      %s61 = sadd.s32 %s60, 1
      %p64 = scmp.eq.s32.totalorder %s26, 1
      %p65 = scmp.ne.s32.totalorder %s60, %s62
      %p66 = scmp.eq.s32.totalorder %s26, 0
      %p67 = por %p65, %p66
      %p68 = scmp.ne.s32.totalorder %s60, %s62
      %p69 = scmp.eq.s32.totalorder %s31, 1
      %p70 = por %p68, %p69
      %p71 = scmp.ne.s32.totalorder %s62, %s63
      %p72 = scmp.eq.s32.totalorder %s31, 0
      %p73 = por %p71, %p72
      %p74 = scmp.ne.s32.totalorder %s62, %s63
      %p75 = scmp.eq.s32.totalorder %s32, 1
      %p76 = por %p74, %p75
      %p78 = scmp.ne.s32.totalorder %s63, %s77
      %p79 = scmp.eq.s32.totalorder %s32, 0
      %p80 = por %p78, %p79
      %s82 = sadd.s32 %s81, 1
      %p85 = scmp.eq.s32.totalorder %s26, 1
      %p86 = scmp.ne.s32.totalorder %s81, %s83
      %p87 = scmp.eq.s32.totalorder %s26, 0
      %p88 = por %p86, %p87
      %p89 = scmp.ne.s32.totalorder %s81, %s83
      %p90 = scmp.eq.s32.totalorder %s31, 1
      %p91 = por %p89, %p90
      %p92 = scmp.ne.s32.totalorder %s83, %s84
      %p93 = scmp.eq.s32.totalorder %s31, 0
      %p94 = por %p92, %p93
      %p95 = scmp.ne.s32.totalorder %s83, %s84
      %p96 = scmp.eq.s32.totalorder %s32, 1
      %p97 = por %p95, %p96
      %p99 = scmp.ne.s32.totalorder %s84, %s98
      %p100 = scmp.eq.s32.totalorder %s32, 0
      %p101 = por %p99, %p100
      %s103 = sadd.s32 %s102, 1
      %p106 = scmp.eq.s32.totalorder %s26, 1
      %p107 = scmp.ne.s32.totalorder %s102, %s104
      %p108 = scmp.eq.s32.totalorder %s26, 0
      %p109 = por %p107, %p108
      %p110 = scmp.ne.s32.totalorder %s102, %s104
      %p111 = scmp.eq.s32.totalorder %s31, 1
      %p112 = por %p110, %p111
      %p113 = scmp.ne.s32.totalorder %s104, %s105
      %p114 = scmp.eq.s32.totalorder %s31, 0
      %p115 = por %p113, %p114
      %p116 = scmp.ne.s32.totalorder %s104, %s105
      %p117 = scmp.eq.s32.totalorder %s32, 1
      %p118 = por %p116, %p117
      %p120 = scmp.ne.s32.totalorder %s105, %s119
      %p121 = scmp.eq.s32.totalorder %s32, 0
      %p122 = por %p120, %p121
      %s124 = sadd.s32 %s123, 1
      %p127 = scmp.eq.s32.totalorder %s26, 1
      %p128 = scmp.ne.s32.totalorder %s123, %s125
      %p129 = scmp.eq.s32.totalorder %s26, 0
      %p130 = por %p128, %p129
      %p131 = scmp.ne.s32.totalorder %s123, %s125
      %p132 = scmp.eq.s32.totalorder %s31, 1
      %p133 = por %p131, %p132
      %p134 = scmp.ne.s32.totalorder %s125, %s126
      %p135 = scmp.eq.s32.totalorder %s31, 0
      %p136 = por %p134, %p135
      %p137 = scmp.ne.s32.totalorder %s125, %s126
      %p138 = scmp.eq.s32.totalorder %s32, 1
      %p139 = por %p137, %p138
      %p141 = scmp.ne.s32.totalorder %s126, %s140
      %p142 = scmp.eq.s32.totalorder %s32, 0
      %p143 = por %p141, %p142
      %s145 = sadd.s32 %s144, 1
      %p148 = scmp.eq.s32.totalorder %s26, 1
      %p149 = scmp.ne.s32.totalorder %s144, %s146
      %p150 = scmp.eq.s32.totalorder %s26, 0
      %p151 = por %p149, %p150
      %p152 = scmp.ne.s32.totalorder %s144, %s146
      %p153 = scmp.eq.s32.totalorder %s31, 1
      %p154 = por %p152, %p153
      %p155 = scmp.ne.s32.totalorder %s146, %s147
      %p156 = scmp.eq.s32.totalorder %s31, 0
      %p157 = por %p155, %p156
      %p158 = scmp.ne.s32.totalorder %s146, %s147
      %p159 = scmp.eq.s32.totalorder %s32, 1
      %p160 = por %p158, %p159
      %p162 = scmp.ne.s32.totalorder %s147, %s161
      %p163 = scmp.eq.s32.totalorder %s32, 0
      %p164 = por %p162, %p163
      %s166 = sadd.s32 %s165, 1
      %p169 = scmp.eq.s32.totalorder %s26, 1
      %p170 = scmp.ne.s32.totalorder %s165, %s167
      %p171 = scmp.eq.s32.totalorder %s26, 0
      %p172 = por %p170, %p171
      %p173 = scmp.ne.s32.totalorder %s165, %s167
      %p174 = scmp.eq.s32.totalorder %s31, 1
      %p175 = por %p173, %p174
      %p176 = scmp.ne.s32.totalorder %s167, %s168
      %p177 = scmp.eq.s32.totalorder %s31, 0
      %p178 = por %p176, %p177
      %p179 = scmp.ne.s32.totalorder %s167, %s168
      %p180 = scmp.eq.s32.totalorder %s32, 1
      %p181 = por %p179, %p180
      %p183 = scmp.ne.s32.totalorder %s168, %s182
      %p184 = scmp.eq.s32.totalorder %s32, 0
      %p185 = por %p183, %p184
      %s187 = sadd.s32 %s186, 1
      %p190 = scmp.eq.s32.totalorder %s26, 1
      %p191 = scmp.ne.s32.totalorder %s186, %s188
      %p192 = scmp.eq.s32.totalorder %s26, 0
      %p193 = por %p191, %p192
      %p194 = scmp.ne.s32.totalorder %s186, %s188
      %p195 = scmp.eq.s32.totalorder %s31, 1
      %p196 = por %p194, %p195
      %p197 = scmp.ne.s32.totalorder %s188, %s189
      %p198 = scmp.eq.s32.totalorder %s31, 0
      %p199 = por %p197, %p198
      %p200 = scmp.ne.s32.totalorder %s188, %s189
      %p201 = scmp.eq.s32.totalorder %s32, 1
      %p202 = por %p200, %p201
      %p204 = scmp.ne.s32.totalorder %s189, %s203
      %p205 = scmp.eq.s32.totalorder %s32, 0
      %p206 = por %p204, %p205
      %s208 = sadd.s32 %s207, 1
      %p211 = scmp.eq.s32.totalorder %s26, 1
      %p212 = scmp.ne.s32.totalorder %s207, %s209
      %p213 = scmp.eq.s32.totalorder %s26, 0
      %p214 = por %p212, %p213
      %p215 = scmp.ne.s32.totalorder %s207, %s209
      %p216 = scmp.eq.s32.totalorder %s31, 1
      %p217 = por %p215, %p216
      %p218 = scmp.ne.s32.totalorder %s209, %s210
      %p219 = scmp.eq.s32.totalorder %s31, 0
      %p220 = por %p218, %p219
      %p221 = scmp.ne.s32.totalorder %s209, %s210
      %p222 = scmp.eq.s32.totalorder %s32, 1
      %p223 = por %p221, %p222
      %p225 = scmp.ne.s32.totalorder %s210, %s224
      %p226 = scmp.eq.s32.totalorder %s32, 0
      %p227 = por %p225, %p226
      %s229 = sadd.s32 %s228, 1
      %p232 = scmp.eq.s32.totalorder %s26, 1
      %p233 = scmp.ne.s32.totalorder %s228, %s230
      %p234 = scmp.eq.s32.totalorder %s26, 0
      %p235 = por %p233, %p234
      %p236 = scmp.ne.s32.totalorder %s228, %s230
      %p237 = scmp.eq.s32.totalorder %s31, 1
      %p238 = por %p236, %p237
      %p239 = scmp.ne.s32.totalorder %s230, %s231
      %p240 = scmp.eq.s32.totalorder %s31, 0
      %p241 = por %p239, %p240
      %p242 = scmp.ne.s32.totalorder %s230, %s231
      %p243 = scmp.eq.s32.totalorder %s32, 1
      %p244 = por %p242, %p243
      %p246 = scmp.ne.s32.totalorder %s231, %s245
      %p247 = scmp.eq.s32.totalorder %s32, 0
      %p248 = por %p246, %p247
      %s250 = sadd.s32 %s249, 1
      %p253 = scmp.eq.s32.totalorder %s26, 1
      %p254 = scmp.ne.s32.totalorder %s249, %s251
      %p255 = scmp.eq.s32.totalorder %s26, 0
      %p256 = por %p254, %p255
      %p257 = scmp.ne.s32.totalorder %s249, %s251
      %p258 = scmp.eq.s32.totalorder %s31, 1
      %p259 = por %p257, %p258
      %p260 = scmp.ne.s32.totalorder %s251, %s252
      %p261 = scmp.eq.s32.totalorder %s31, 0
      %p262 = por %p260, %p261
      %p263 = scmp.ne.s32.totalorder %s251, %s252
      %p264 = scmp.eq.s32.totalorder %s32, 1
      %p265 = por %p263, %p264
      %p267 = scmp.ne.s32.totalorder %s252, %s266
      %p268 = scmp.eq.s32.totalorder %s32, 0
      %p269 = por %p267, %p268
      %s271 = sadd.s32 %s270, 1
      %p274 = scmp.eq.s32.totalorder %s26, 1
      %p275 = scmp.ne.s32.totalorder %s270, %s272
      %p276 = scmp.eq.s32.totalorder %s26, 0
      %p277 = por %p275, %p276
      %p278 = scmp.ne.s32.totalorder %s270, %s272
      %p279 = scmp.eq.s32.totalorder %s31, 1
      %p280 = por %p278, %p279
      %p281 = scmp.ne.s32.totalorder %s272, %s273
      %p282 = scmp.eq.s32.totalorder %s31, 0
      %p283 = por %p281, %p282
      %p284 = scmp.ne.s32.totalorder %s272, %s273
      %p285 = scmp.eq.s32.totalorder %s32, 1
      %p286 = por %p284, %p285
      %p288 = scmp.ne.s32.totalorder %s273, %s287
      %p289 = scmp.eq.s32.totalorder %s32, 0
      %p290 = por %p288, %p289
      %s292 = sadd.s32 %s291, 1
      %p295 = scmp.eq.s32.totalorder %s26, 1
      %p296 = scmp.ne.s32.totalorder %s291, %s293
      %p297 = scmp.eq.s32.totalorder %s26, 0
      %p298 = por %p296, %p297
      %p299 = scmp.ne.s32.totalorder %s291, %s293
      %p300 = scmp.eq.s32.totalorder %s31, 1
      %p301 = por %p299, %p300
      %p302 = scmp.ne.s32.totalorder %s293, %s294
      %p303 = scmp.eq.s32.totalorder %s31, 0
      %p304 = por %p302, %p303
      %p305 = scmp.ne.s32.totalorder %s293, %s294
      %p306 = scmp.eq.s32.totalorder %s32, 1
      %p307 = por %p305, %p306
      %p309 = scmp.ne.s32.totalorder %s294, %s308
      %p310 = scmp.eq.s32.totalorder %s32, 0
      %p311 = por %p309, %p310
      %s312 = ssub.s32 %s26, %s33
      %p313 = scmp.eq.s32.totalorder %s312, 0
      %s315 = sadd.s32 %s314, 1
      %s316 = scalar_select %p313, %s314, %s315
      %p319 = pneg %p313
      %p320 = scmp.eq.s32.totalorder %s26, 1
      %p321 = por %p319, %p320
      %p322 = scmp.ne.s32.totalorder %s314, %s317
      %p323 = scmp.eq.s32.totalorder %s26, 0
      %p324 = por %p322, %p323
      %p325 = scmp.ne.s32.totalorder %s314, %s317
      %p326 = scmp.eq.s32.totalorder %s31, 1
      %p327 = por %p325, %p326
      %p328 = scmp.ne.s32.totalorder %s317, %s318
      %p329 = scmp.eq.s32.totalorder %s31, 0
      %p330 = por %p328, %p329
      %p331 = scmp.ne.s32.totalorder %s317, %s318
      %p332 = scmp.eq.s32.totalorder %s32, 1
      %p333 = por %p331, %p332
      %p335 = scmp.ne.s32.totalorder %s318, %s334
      %p336 = scmp.eq.s32.totalorder %s32, 0
      %p337 = por %p335, %p336
      %p338 = scmp.le.s32.totalorder 1, %s26
      %p339 = scmp.lt.s32.totalorder %s26, 3
      %p340 = pnand %p338, %p339
      %p341 = pneg %p340
      // Predicated region
      $region9: #{tpu_custom_call.1} parent=5 // pred_check
        _
      $region10: #{tpu_custom_call.1} parent=5 // pred_check_branch
        %343 = sbr.rel (%p340) target = $region12
      $region11: #{tpu_custom_call.1} parent=5 // pred_region
        %s344 = ssub.s32 %s26, 1
        // Predicated region
        $region13: #{tpu_custom_call.1} parent=11 // pred_check
          %p345 = pneg %p73
        $region14: #{tpu_custom_call.1} parent=11 // pred_check_branch
          %347 = sbr.rel (%p345) target = $region16
        $region15: #{tpu_custom_call.1} parent=11 // pred_region
          %s349 = ssub.s32 32, 32
          %350 = vsyncadd [#allocation6], %s349
          %s351 = sshll.u32 [#allocation5], 4
          %s352 = int_to_ptr.vmem [resolvable:$true] %s351
          %357 = dma.hbm_to_vmem [thread:$0]  %s1, 32, %s352, [#allocation6], 16, 16, 1
        $region16: #{tpu_custom_call.1} parent=11 // pred_fallthru
          _
        // Predicated region
        $region17: #{tpu_custom_call.1} parent=11 // pred_check
          %p358 = pneg %p94
        $region18: #{tpu_custom_call.1} parent=11 // pred_check_branch
          %360 = sbr.rel (%p358) target = $region20
        $region19: #{tpu_custom_call.1} parent=11 // pred_region
          _
        $region20: #{tpu_custom_call.1} parent=11 // pred_fallthru
          _
        // Predicated region
        $region21: #{tpu_custom_call.1} parent=11 // pred_check
          %p361 = pneg %p115
        $region22: #{tpu_custom_call.1} parent=11 // pred_check_branch
          %363 = sbr.rel (%p361) target = $region24
        $region23: #{tpu_custom_call.1} parent=11 // pred_region
          _
        $region24: #{tpu_custom_call.1} parent=11 // pred_fallthru
          _
        // Predicated region
        $region25: #{tpu_custom_call.1} parent=11 // pred_check
          %p364 = pneg %p136
        $region26: #{tpu_custom_call.1} parent=11 // pred_check_branch
          %366 = sbr.rel (%p364) target = $region28
        $region27: #{tpu_custom_call.1} parent=11 // pred_region
          _
        $region28: #{tpu_custom_call.1} parent=11 // pred_fallthru
          _
        // Predicated region
        $region29: #{tpu_custom_call.1} parent=11 // pred_check
          %p367 = pneg %p157
        $region30: #{tpu_custom_call.1} parent=11 // pred_check_branch
          %369 = sbr.rel (%p367) target = $region32
        $region31: #{tpu_custom_call.1} parent=11 // pred_region
          _
        $region32: #{tpu_custom_call.1} parent=11 // pred_fallthru
          _
        // Predicated region
        $region33: #{tpu_custom_call.1} parent=11 // pred_check
          %p370 = pneg %p178
        $region34: #{tpu_custom_call.1} parent=11 // pred_check_branch
          %372 = sbr.rel (%p370) target = $region36
        $region35: #{tpu_custom_call.1} parent=11 // pred_region
          _
        $region36: #{tpu_custom_call.1} parent=11 // pred_fallthru
          _
        // Predicated region
        $region37: #{tpu_custom_call.1} parent=11 // pred_check
          %p373 = pneg %p199
        $region38: #{tpu_custom_call.1} parent=11 // pred_check_branch
          %375 = sbr.rel (%p373) target = $region40
        $region39: #{tpu_custom_call.1} parent=11 // pred_region
          _
        $region40: #{tpu_custom_call.1} parent=11 // pred_fallthru
          _
        // Predicated region
        $region41: #{tpu_custom_call.1} parent=11 // pred_check
          %p376 = pneg %p220
        $region42: #{tpu_custom_call.1} parent=11 // pred_check_branch
          %378 = sbr.rel (%p376) target = $region44
        $region43: #{tpu_custom_call.1} parent=11 // pred_region
          _
        $region44: #{tpu_custom_call.1} parent=11 // pred_fallthru
          _
        // Predicated region
        $region45: #{tpu_custom_call.1} parent=11 // pred_check
          %p379 = pneg %p241
        $region46: #{tpu_custom_call.1} parent=11 // pred_check_branch
          %381 = sbr.rel (%p379) target = $region48
        $region47: #{tpu_custom_call.1} parent=11 // pred_region
          _
        $region48: #{tpu_custom_call.1} parent=11 // pred_fallthru
          _
        // Predicated region
        $region49: #{tpu_custom_call.1} parent=11 // pred_check
          %p382 = pneg %p262
        $region50: #{tpu_custom_call.1} parent=11 // pred_check_branch
          %384 = sbr.rel (%p382) target = $region52
        $region51: #{tpu_custom_call.1} parent=11 // pred_region
          _
        $region52: #{tpu_custom_call.1} parent=11 // pred_fallthru
          _
        // Predicated region
        $region53: #{tpu_custom_call.1} parent=11 // pred_check
          %p385 = pneg %p283
        $region54: #{tpu_custom_call.1} parent=11 // pred_check_branch
          %387 = sbr.rel (%p385) target = $region56
        $region55: #{tpu_custom_call.1} parent=11 // pred_region
          _
        $region56: #{tpu_custom_call.1} parent=11 // pred_fallthru
          _
        // Predicated region
        $region57: #{tpu_custom_call.1} parent=11 // pred_check
          %p388 = pneg %p304
        $region58: #{tpu_custom_call.1} parent=11 // pred_check_branch
          %390 = sbr.rel (%p388) target = $region60
        $region59: #{tpu_custom_call.1} parent=11 // pred_region
          _
        $region60: #{tpu_custom_call.1} parent=11 // pred_fallthru
          _
      $region12: #{tpu_custom_call.1} parent=5 // pred_fallthru
        _
      %p391 = scmp.lt.s32.totalorder %s26, 2
      // Predicated region
      $region61: #{tpu_custom_call.1} parent=5 // pred_check
        %p392 = pneg %p391
      $region62: #{tpu_custom_call.1} parent=5 // pred_check_branch
        %394 = sbr.rel (%p392) target = $region64
      $region63: #{tpu_custom_call.1} parent=5 // pred_region
        // Predicated region
        $region65: #{tpu_custom_call.1} parent=63 // pred_check
          %p395 = pneg %p46
        $region66: #{tpu_custom_call.1} parent=63 // pred_check_branch
          %397 = sbr.rel (%p395) target = $region68
        $region67: #{tpu_custom_call.1} parent=63 // pred_region
          %s398 = sand.u32 %s36, 1
          %s399 = scalar_lea.sflag [#allocation3], %s398
          %s400 = sand.u32 %s36, 1
          %s401 = smul.addr %s400, 8
          %s402 = scalar_lea.vmem [#allocation2], %s401
          %s404 = ssub.s32 128, 128
          %405 = vsyncadd %s399, %s404
          %s406 = smul.addr %s26, 128
          %s407 = scalar_lea.hbm %s0, %s406
          %s409 = sshll.u32 %s402, 4
          %s410 = int_to_ptr.vmem [resolvable:$true] %s409
          %412 = dma.hbm_to_vmem [thread:$0]  %s407, 128, %s410, %s399
        $region68: #{tpu_custom_call.1} parent=63 // pred_fallthru
          _
      $region64: #{tpu_custom_call.1} parent=5 // pred_fallthru
        _
      %p413 = scmp.le.s32.totalorder 1, %s26
      %p414 = scmp.lt.s32.totalorder %s26, 3
      %p415 = pnand %p413, %p414
      %p416 = pneg %p415
      // Predicated region
      $region69: #{tpu_custom_call.1} parent=5 // pred_check
        _
      $region70: #{tpu_custom_call.1} parent=5 // pred_check_branch
        %418 = sbr.rel (%p415) target = $region72
      $region71: #{tpu_custom_call.1} parent=5 // pred_region
        %s419 = ssub.s32 %s26, 1
        %s420 = sand.u32 %s39, 1
        %s421 = scalar_lea.sflag [#allocation3], %s420
        %s422 = sand.u32 %s39, 1
        %s423 = smul.addr %s422, 8
        %s424 = scalar_lea.vmem [#allocation2], %s423
        // Predicated region
        $region73: #{tpu_custom_call.1} parent=71 // pred_check
          %p425 = pneg %p52
        $region74: #{tpu_custom_call.1} parent=71 // pred_check_branch
          %427 = sbr.rel (%p425) target = $region76
        $region75: #{tpu_custom_call.1} parent=71 // pred_region
          %428 = dma.done %s421, 128
        $region76: #{tpu_custom_call.1} parent=71 // pred_fallthru
          _
        // Predicated region
        $region77: #{tpu_custom_call.1} parent=71 // pred_check
          %p429 = pneg %p73
        $region78: #{tpu_custom_call.1} parent=71 // pred_check_branch
          %431 = sbr.rel (%p429) target = $region80
        $region79: #{tpu_custom_call.1} parent=71 // pred_region
          %432 = dma.done [#allocation6], 32
        $region80: #{tpu_custom_call.1} parent=71 // pred_fallthru
          _
        %s433 = sand.u32 %s39, 1
        %s434 = scalar_lea.sflag [#allocation3], %s433
        %s435 = sand.u32 %s39, 1
        %s436 = smul.addr %s435, 8
        %s437 = scalar_lea.vmem [#allocation2], %s436
        %p438 = pneg %p52
        %p439 = pneg %p49
        %p440 = pneg %p73
        %p441 = pneg %p70
        %p442 = pneg %p94
        %p443 = pneg %p91
        %p444 = pneg %p115
        %p445 = pneg %p112
        %p446 = pneg %p136
        %p447 = pneg %p133
        %p448 = pneg %p157
        %p449 = pneg %p154
        %p450 = pneg %p178
        %p451 = pneg %p175
        %p452 = pneg %p199
        %p453 = pneg %p196
        %p454 = pneg %p220
        %p455 = pneg %p217
        %p456 = pneg %p241
        %p457 = pneg %p238
        %p458 = pneg %p262
        %p459 = pneg %p259
        %p460 = pneg %p283
        %p461 = pneg %p280
        %p462 = pneg %p304
        %p463 = pneg %p301
        %p464 = pneg %p330
        %p465 = pneg %p327
        %s466 = sand.u32 %s317, 1
        %s467 = scalar_lea.sflag [#allocation4], %s466
        %s468 = sand.u32 %s317, 1
        %s469 = smul.addr %s468, 8
        %s470 = scalar_lea.vmem [#allocation7], %s469
        %v472 = vld [vmem:[%s424] sm:$0xff]
        %v473 = vld [vmem:[#allocation5] sm:$0x1]
        %v474 = vld [vmem:[%s2] sm:$0x1]
        %vm475 = vcmask 261120
        %v476 = vsel %vm475, %v472, 0.0
        %477 = vadd.xlane.f32.xlu0 %v476
        %v478 = vpop.xlane.xlu0 %477
        %v479 = vrcp.pop 32.0
        %v480 = vmul.f32 %v478, %v479
        %v481 = vsub.f32 %v472, %v480
        %v482 = vmul.f32 %v481, %v481
        %v483 = vsel %vm475, %v482, 0.0
        %484 = vadd.xlane.f32.xlu0 %v483
        %v485 = vpop.xlane.xlu0 %484
        %v486 = vmul.f32 %v485, %v479
        %v487 = vadd.f32 %v486, 1e-05
        %v488 = vrsqrt.pop %v487
        %v489 = vmul.f32 %v481, %v488
        %v491 = vlaneseq
        %v492 = vshrl.u32 %v491, 7
        %v493 = vsub.s32 0, %v492
        %v494 = vrot.slane %v473, %v493
        %v496 = vmul.f32 %v489, %v494
        %v498 = vlaneseq
        %v499 = vshrl.u32 %v498, 7
        %v500 = vsub.s32 0, %v499
        %v501 = vrot.slane %v474, %v500
        %v503 = vadd.f32 %v496, %v501
        %v504 = vpack.c.bf16 %v503, %v503
        %v505 = vld [vmem:[%s3] sm:$0xf]
        %v506 = vld [vmem:[%s3 + $0x4] sm:$0xf]
        %v507 = vld [vmem:[%s3 + $0x8] sm:$0xf]
        %v508 = vld [vmem:[%s3 + $0xc] sm:$0xf]
        %v509 = vld [vmem:[%s4] sm:$0x1]
        %v511 = vlaneseq
        %v512 = vshrl.u32 %v511, 7
        %v513 = vsub.s32 0, %v512
        %v514 = vrot.slane %v509, %v513
        %v520 = vunpack.c.l.b16 %v505
        %v521 = vunpack.c.l.b16 %v506
        %v522 = vunpack.c.l.b16 %v507
        %v523 = vunpack.c.l.b16 %v508
        %v524 = vpack.c.b16 %v521, %v520
        %v525 = vpack.c.b16 %v523, %v522
        %v529 = vsel %vm475, %v504, 0
        %531 = vmatprep.subr.bf16.mxu0 0
        %532 = vmatpush1.bf16.msra.mxu0 0
        %533 = vmatprep.subr.bf16.mxu0 0
        %534 = vmatpush1.bf16.msra.mxu0 0
        %535 = vmatprep.subr.bf16.mxu0 0
        %536 = vmatpush1.bf16.msra.mxu0 0
        %537 = vmatprep.subr.bf16.mxu0 0
        %538 = vmatpush1.bf16.msra.mxu0 0
        %539 = vmatprep.subr.bf16.mxu0 0
        %540 = vmatpush1.bf16.msra.mxu0 0
        %541 = vmatprep.subr.bf16.mxu0 0
        %542 = vmatpush1.bf16.msra.mxu0 0
        %543 = vmatprep.subr.bf16.mxu0 0
        %544 = vmatpush1.bf16.msra.mxu0 %v525
        %545 = vmatprep.subr.bf16.mxu0 0
        %546 = vmatpush1.bf16.msra.mxu0 %v524
        %547 = vmatprep.subr.bf16.mxu0 0
        %548 = vmatpush2.bf16.msra.mxu0 0
        %549 = vmatprep.subr.bf16.mxu0 0
        %550 = vmatpush2.bf16.msra.mxu0 0
        %551 = vmatprep.subr.bf16.mxu0 0
        %552 = vmatpush2.bf16.msra.mxu0 0
        %553 = vmatprep.subr.bf16.mxu0 0
        %554 = vmatpush2.bf16.msra.mxu0 0
        %555 = vmatprep.subr.bf16.mxu0 0
        %556 = vmatpush2.bf16.msra.mxu0 0
        %557 = vmatprep.subr.bf16.mxu0 0
        %558 = vmatpush2.bf16.msra.mxu0 0
        %559 = vmatprep.subr.bf16.mxu0 0
        %560 = vmatpush2.bf16.msra.mxu0 0
        %561 = vmatprep.subr.bf16.mxu0 0
        %562 = vmatpush2.bf16.msra.mxu0 0
        %563 = vmatprep.mubr.bf16.mxu0 0
        %564 = vmatmul.mubr.bf16.gmra.mxu0 %v529
        %v565 = vpop.f32.mrf.mxu0
        %v566 = vadd.f32 %v514, %v565
        %v567 = vpop.f32.mrf.mxu0
        %v568 = vpop.f32.mrf.mxu0
        %v569 = vpop.f32.mrf.mxu0
        %570 = vdwg.mxu0
        %571 = vxpose.xlu0.b32.start [1/16] %v566, 128
        %572 = vxpose.xlu0.b32.cont [2/16] 0.0, 128
        %573 = vxpose.xlu0.b32.cont [3/16] 0.0, 128
        %574 = vxpose.xlu0.b32.cont [4/16] 0.0, 128
        %575 = vxpose.xlu0.b32.cont [5/16] 0.0, 128
        %576 = vxpose.xlu0.b32.cont [6/16] 0.0, 128
        %577 = vxpose.xlu0.b32.cont [7/16] 0.0, 128
        %578 = vxpose.xlu0.b32.cont [8/16] 0.0, 128
        %579 = vxpose.xlu0.b32.cont [9/16] 0.0, 128
        %580 = vxpose.xlu0.b32.cont [10/16] 0.0, 128
        %581 = vxpose.xlu0.b32.cont [11/16] 0.0, 128
        %582 = vxpose.xlu0.b32.cont [12/16] 0.0, 128
        %583 = vxpose.xlu0.b32.cont [13/16] 0.0, 128
        %584 = vxpose.xlu0.b32.cont [14/16] 0.0, 128
        %585 = vxpose.xlu0.b32.cont [15/16] 0.0, 128
        %586 = vxpose.xlu0.b32.end [16/16] 0.0, 128
        %v587 = vpop.trf.xlu0
        %v588 = vpop.trf.xlu0
        %v589 = vpop.trf.xlu0
        %v590 = vpop.trf.xlu0
        %v591 = vpop.trf.xlu0
        %v592 = vpop.trf.xlu0
        %v593 = vpop.trf.xlu0
        %v594 = vpop.trf.xlu0
        %v595 = vpop.trf.xlu0
        %v596 = vpop.trf.xlu0
        %v597 = vpop.trf.xlu0
        %v598 = vpop.trf.xlu0
        %v599 = vpop.trf.xlu0
        %v600 = vpop.trf.xlu0
        %v601 = vpop.trf.xlu0
        %v602 = vpop.trf.xlu0
        %603 = vxpose.xlu0.b32.start [1/16] %v587, 128
        %604 = vxpose.xlu0.b32.cont [2/16] 0.0, 128
        %605 = vxpose.xlu0.b32.cont [3/16] 0.0, 128
        %606 = vxpose.xlu0.b32.cont [4/16] 0.0, 128
        %607 = vxpose.xlu0.b32.cont [5/16] 0.0, 128
        %608 = vxpose.xlu0.b32.cont [6/16] 0.0, 128
        %609 = vxpose.xlu0.b32.cont [7/16] 0.0, 128
        %610 = vxpose.xlu0.b32.cont [8/16] 0.0, 128
        %611 = vxpose.xlu0.b32.cont [9/16] 0.0, 128
        %612 = vxpose.xlu0.b32.cont [10/16] 0.0, 128
        %613 = vxpose.xlu0.b32.cont [11/16] 0.0, 128
        %614 = vxpose.xlu0.b32.cont [12/16] 0.0, 128
        %615 = vxpose.xlu0.b32.cont [13/16] 0.0, 128
        %616 = vxpose.xlu0.b32.cont [14/16] 0.0, 128
        %617 = vxpose.xlu0.b32.cont [15/16] 0.0, 128
        %618 = vxpose.xlu0.b32.end [16/16] 0.0, 128
        %v619 = vpop.trf.xlu0
        %v620 = vpop.trf.xlu0
        %v621 = vpop.trf.xlu0
        %v622 = vpop.trf.xlu0
        %v623 = vpop.trf.xlu0
        %v624 = vpop.trf.xlu0
        %v625 = vpop.trf.xlu0
        %v626 = vpop.trf.xlu0
        %v627 = vpop.trf.xlu0
        %v628 = vpop.trf.xlu0
        %v629 = vpop.trf.xlu0
        %v630 = vpop.trf.xlu0
        %v631 = vpop.trf.xlu0
        %v632 = vpop.trf.xlu0
        %v633 = vpop.trf.xlu0
        %v634 = vpop.trf.xlu0
        %635 = vxpose.xlu0.b32.start [1/16] %v588, 128
        %636 = vxpose.xlu0.b32.cont [2/16] 0.0, 128
        %637 = vxpose.xlu0.b32.cont [3/16] 0.0, 128
        %638 = vxpose.xlu0.b32.cont [4/16] 0.0, 128
        %639 = vxpose.xlu0.b32.cont [5/16] 0.0, 128
        %640 = vxpose.xlu0.b32.cont [6/16] 0.0, 128
        %641 = vxpose.xlu0.b32.cont [7/16] 0.0, 128
        %642 = vxpose.xlu0.b32.cont [8/16] 0.0, 128
        %643 = vxpose.xlu0.b32.cont [9/16] 0.0, 128
        %644 = vxpose.xlu0.b32.cont [10/16] 0.0, 128
        %645 = vxpose.xlu0.b32.cont [11/16] 0.0, 128
        %646 = vxpose.xlu0.b32.cont [12/16] 0.0, 128
        %647 = vxpose.xlu0.b32.cont [13/16] 0.0, 128
        %648 = vxpose.xlu0.b32.cont [14/16] 0.0, 128
        %649 = vxpose.xlu0.b32.cont [15/16] 0.0, 128
        %650 = vxpose.xlu0.b32.end [16/16] 0.0, 128
        %v651 = vpop.trf.xlu0
        %v652 = vpop.trf.xlu0
        %v653 = vpop.trf.xlu0
        %v654 = vpop.trf.xlu0
        %v655 = vpop.trf.xlu0
        %v656 = vpop.trf.xlu0
        %v657 = vpop.trf.xlu0
        %v658 = vpop.trf.xlu0
        %v659 = vpop.trf.xlu0
        %v660 = vpop.trf.xlu0
        %v661 = vpop.trf.xlu0
        %v662 = vpop.trf.xlu0
        %v663 = vpop.trf.xlu0
        %v664 = vpop.trf.xlu0
        %v665 = vpop.trf.xlu0
        %v666 = vpop.trf.xlu0
        %667 = vxpose.xlu0.b32.start [1/16] %v589, 128
        %668 = vxpose.xlu0.b32.cont [2/16] 0.0, 128
        %669 = vxpose.xlu0.b32.cont [3/16] 0.0, 128
        %670 = vxpose.xlu0.b32.cont [4/16] 0.0, 128
        %671 = vxpose.xlu0.b32.cont [5/16] 0.0, 128
        %672 = vxpose.xlu0.b32.cont [6/16] 0.0, 128
        %673 = vxpose.xlu0.b32.cont [7/16] 0.0, 128
        %674 = vxpose.xlu0.b32.cont [8/16] 0.0, 128
        %675 = vxpose.xlu0.b32.cont [9/16] 0.0, 128
        %676 = vxpose.xlu0.b32.cont [10/16] 0.0, 128
        %677 = vxpose.xlu0.b32.cont [11/16] 0.0, 128
        %678 = vxpose.xlu0.b32.cont [12/16] 0.0, 128
        %679 = vxpose.xlu0.b32.cont [13/16] 0.0, 128
        %680 = vxpose.xlu0.b32.cont [14/16] 0.0, 128
        %681 = vxpose.xlu0.b32.cont [15/16] 0.0, 128
        %682 = vxpose.xlu0.b32.end [16/16] 0.0, 128
        %v683 = vpop.trf.xlu0
        %v684 = vpop.trf.xlu0
        %v685 = vpop.trf.xlu0
        %v686 = vpop.trf.xlu0
        %v687 = vpop.trf.xlu0
        %v688 = vpop.trf.xlu0
        %v689 = vpop.trf.xlu0
        %v690 = vpop.trf.xlu0
        %v691 = vpop.trf.xlu0
        %v692 = vpop.trf.xlu0
        %v693 = vpop.trf.xlu0
        %v694 = vpop.trf.xlu0
        %v695 = vpop.trf.xlu0
        %v696 = vpop.trf.xlu0
        %v697 = vpop.trf.xlu0
        %v698 = vpop.trf.xlu0
        %699 = vxpose.xlu0.b32.start [1/16] %v590, 128
        %700 = vxpose.xlu0.b32.cont [2/16] 0.0, 128
        %701 = vxpose.xlu0.b32.cont [3/16] 0.0, 128
        %702 = vxpose.xlu0.b32.cont [4/16] 0.0, 128
        %703 = vxpose.xlu0.b32.cont [5/16] 0.0, 128
        %704 = vxpose.xlu0.b32.cont [6/16] 0.0, 128
        %705 = vxpose.xlu0.b32.cont [7/16] 0.0, 128
        %706 = vxpose.xlu0.b32.cont [8/16] 0.0, 128
        %707 = vxpose.xlu0.b32.cont [9/16] 0.0, 128
        %708 = vxpose.xlu0.b32.cont [10/16] 0.0, 128
        %709 = vxpose.xlu0.b32.cont [11/16] 0.0, 128
        %710 = vxpose.xlu0.b32.cont [12/16] 0.0, 128
        %711 = vxpose.xlu0.b32.cont [13/16] 0.0, 128
        %712 = vxpose.xlu0.b32.cont [14/16] 0.0, 128
        %713 = vxpose.xlu0.b32.cont [15/16] 0.0, 128
        %714 = vxpose.xlu0.b32.end [16/16] 0.0, 128
        %v715 = vpop.trf.xlu0
        %v716 = vpop.trf.xlu0
        %v717 = vpop.trf.xlu0
        %v718 = vpop.trf.xlu0
        %v719 = vpop.trf.xlu0
        %v720 = vpop.trf.xlu0
        %v721 = vpop.trf.xlu0
        %v722 = vpop.trf.xlu0
        %v723 = vpop.trf.xlu0
        %v724 = vpop.trf.xlu0
        %v725 = vpop.trf.xlu0
        %v726 = vpop.trf.xlu0
        %v727 = vpop.trf.xlu0
        %v728 = vpop.trf.xlu0
        %v729 = vpop.trf.xlu0
        %v730 = vpop.trf.xlu0
        %v731 = vmul.f32 %v619, 0.35355338
        %v732 = vmul.f32 %v651, 0.35355338
        %v733 = vmul.f32 %v683, 0.35355338
        %v734 = vmul.f32 %v715, 0.35355338
        %v735 = vpack.c.bf16 %v731, %v731
        %v736 = vpack.c.bf16 %v732, %v732
        %v737 = vpack.c.bf16 %v733, %v733
        %v738 = vpack.c.bf16 %v734, %v734
        %739 = vxpose.xlu0.b32.start [1/16] %v591, 128
        %740 = vxpose.xlu0.b32.cont [2/16] 0.0, 128
        %741 = vxpose.xlu0.b32.cont [3/16] 0.0, 128
        %742 = vxpose.xlu0.b32.cont [4/16] 0.0, 128
        %743 = vxpose.xlu0.b32.cont [5/16] 0.0, 128
        %744 = vxpose.xlu0.b32.cont [6/16] 0.0, 128
        %745 = vxpose.xlu0.b32.cont [7/16] 0.0, 128
        %746 = vxpose.xlu0.b32.cont [8/16] 0.0, 128
        %747 = vxpose.xlu0.b32.cont [9/16] 0.0, 128
        %748 = vxpose.xlu0.b32.cont [10/16] 0.0, 128
        %749 = vxpose.xlu0.b32.cont [11/16] 0.0, 128
        %750 = vxpose.xlu0.b32.cont [12/16] 0.0, 128
        %751 = vxpose.xlu0.b32.cont [13/16] 0.0, 128
        %752 = vxpose.xlu0.b32.cont [14/16] 0.0, 128
        %753 = vxpose.xlu0.b32.cont [15/16] 0.0, 128
        %754 = vxpose.xlu0.b32.end [16/16] 0.0, 128
        %v755 = vpop.trf.xlu0
        %v756 = vpop.trf.xlu0
        %v757 = vpop.trf.xlu0
        %v758 = vpop.trf.xlu0
        %v759 = vpop.trf.xlu0
        %v760 = vpop.trf.xlu0
        %v761 = vpop.trf.xlu0
        %v762 = vpop.trf.xlu0
        %v763 = vpop.trf.xlu0
        %v764 = vpop.trf.xlu0
        %v765 = vpop.trf.xlu0
        %v766 = vpop.trf.xlu0
        %v767 = vpop.trf.xlu0
        %v768 = vpop.trf.xlu0
        %v769 = vpop.trf.xlu0
        %v770 = vpop.trf.xlu0
        %771 = vxpose.xlu0.b32.start [1/16] %v592, 128
        %772 = vxpose.xlu0.b32.cont [2/16] 0.0, 128
        %773 = vxpose.xlu0.b32.cont [3/16] 0.0, 128
        %774 = vxpose.xlu0.b32.cont [4/16] 0.0, 128
        %775 = vxpose.xlu0.b32.cont [5/16] 0.0, 128
        %776 = vxpose.xlu0.b32.cont [6/16] 0.0, 128
        %777 = vxpose.xlu0.b32.cont [7/16] 0.0, 128
        %778 = vxpose.xlu0.b32.cont [8/16] 0.0, 128
        %779 = vxpose.xlu0.b32.cont [9/16] 0.0, 128
        %780 = vxpose.xlu0.b32.cont [10/16] 0.0, 128
        %781 = vxpose.xlu0.b32.cont [11/16] 0.0, 128
        %782 = vxpose.xlu0.b32.cont [12/16] 0.0, 128
        %783 = vxpose.xlu0.b32.cont [13/16] 0.0, 128
        %784 = vxpose.xlu0.b32.cont [14/16] 0.0, 128
        %785 = vxpose.xlu0.b32.cont [15/16] 0.0, 128
        %786 = vxpose.xlu0.b32.end [16/16] 0.0, 128
        %v787 = vpop.trf.xlu0
        %v788 = vpop.trf.xlu0
        %v789 = vpop.trf.xlu0
        %v790 = vpop.trf.xlu0
        %v791 = vpop.trf.xlu0
        %v792 = vpop.trf.xlu0
        %v793 = vpop.trf.xlu0
        %v794 = vpop.trf.xlu0
        %v795 = vpop.trf.xlu0
        %v796 = vpop.trf.xlu0
        %v797 = vpop.trf.xlu0
        %v798 = vpop.trf.xlu0
        %v799 = vpop.trf.xlu0
        %v800 = vpop.trf.xlu0
        %v801 = vpop.trf.xlu0
        %v802 = vpop.trf.xlu0
        %803 = vxpose.xlu0.b32.start [1/16] %v593, 128
        %804 = vxpose.xlu0.b32.cont [2/16] 0.0, 128
        %805 = vxpose.xlu0.b32.cont [3/16] 0.0, 128
        %806 = vxpose.xlu0.b32.cont [4/16] 0.0, 128
        %807 = vxpose.xlu0.b32.cont [5/16] 0.0, 128
        %808 = vxpose.xlu0.b32.cont [6/16] 0.0, 128
        %809 = vxpose.xlu0.b32.cont [7/16] 0.0, 128
        %810 = vxpose.xlu0.b32.cont [8/16] 0.0, 128
        %811 = vxpose.xlu0.b32.cont [9/16] 0.0, 128
        %812 = vxpose.xlu0.b32.cont [10/16] 0.0, 128
        %813 = vxpose.xlu0.b32.cont [11/16] 0.0, 128
        %814 = vxpose.xlu0.b32.cont [12/16] 0.0, 128
        %815 = vxpose.xlu0.b32.cont [13/16] 0.0, 128
        %816 = vxpose.xlu0.b32.cont [14/16] 0.0, 128
        %817 = vxpose.xlu0.b32.cont [15/16] 0.0, 128
        %818 = vxpose.xlu0.b32.end [16/16] 0.0, 128
        %v819 = vpop.trf.xlu0
        %v820 = vpop.trf.xlu0
        %v821 = vpop.trf.xlu0
        %v822 = vpop.trf.xlu0
        %v823 = vpop.trf.xlu0
        %v824 = vpop.trf.xlu0
        %v825 = vpop.trf.xlu0
        %v826 = vpop.trf.xlu0
        %v827 = vpop.trf.xlu0
        %v828 = vpop.trf.xlu0
        %v829 = vpop.trf.xlu0
        %v830 = vpop.trf.xlu0
        %v831 = vpop.trf.xlu0
        %v832 = vpop.trf.xlu0
        %v833 = vpop.trf.xlu0
        %v834 = vpop.trf.xlu0
        %835 = vxpose.xlu0.b32.start [1/16] %v594, 128
        %836 = vxpose.xlu0.b32.cont [2/16] 0.0, 128
        %837 = vxpose.xlu0.b32.cont [3/16] 0.0, 128
        %838 = vxpose.xlu0.b32.cont [4/16] 0.0, 128
        %839 = vxpose.xlu0.b32.cont [5/16] 0.0, 128
        %840 = vxpose.xlu0.b32.cont [6/16] 0.0, 128
        %841 = vxpose.xlu0.b32.cont [7/16] 0.0, 128
        %842 = vxpose.xlu0.b32.cont [8/16] 0.0, 128
        %843 = vxpose.xlu0.b32.cont [9/16] 0.0, 128
        %844 = vxpose.xlu0.b32.cont [10/16] 0.0, 128
        %845 = vxpose.xlu0.b32.cont [11/16] 0.0, 128
        %846 = vxpose.xlu0.b32.cont [12/16] 0.0, 128
        %847 = vxpose.xlu0.b32.cont [13/16] 0.0, 128
        %848 = vxpose.xlu0.b32.cont [14/16] 0.0, 128
        %849 = vxpose.xlu0.b32.cont [15/16] 0.0, 128
        %850 = vxpose.xlu0.b32.end [16/16] 0.0, 128
        %v851 = vpop.trf.xlu0
        %v852 = vpop.trf.xlu0
        %v853 = vpop.trf.xlu0
        %v854 = vpop.trf.xlu0
        %v855 = vpop.trf.xlu0
        %v856 = vpop.trf.xlu0
        %v857 = vpop.trf.xlu0
        %v858 = vpop.trf.xlu0
        %v859 = vpop.trf.xlu0
        %v860 = vpop.trf.xlu0
        %v861 = vpop.trf.xlu0
        %v862 = vpop.trf.xlu0
        %v863 = vpop.trf.xlu0
        %v864 = vpop.trf.xlu0
        %v865 = vpop.trf.xlu0
        %v866 = vpop.trf.xlu0
        %v867 = vpack.c.bf16 %v755, %v755
        %v868 = vpack.c.bf16 %v787, %v787
        %v869 = vpack.c.bf16 %v819, %v819
        %v870 = vpack.c.bf16 %v851, %v851
        %vm871 = vcmask 64512
        %v873 = vsel %vm871, %v735, 0
        %v876 = vsel %vm871, %v867, 0
        %878 = vmatprep.subr.bf16.mxu0 0
        %879 = vmatpush1.bf16.xpose.msra.mxu0 0
        %880 = vmatprep.subr.bf16.mxu0 0
        %881 = vmatpush1.bf16.xpose.msra.mxu0 0
        %882 = vmatprep.subr.bf16.mxu0 0
        %883 = vmatpush1.bf16.xpose.msra.mxu0 0
        %884 = vmatprep.subr.bf16.mxu0 0
        %885 = vmatpush1.bf16.xpose.msra.mxu0 0
        %886 = vmatprep.subr.bf16.mxu0 0
        %887 = vmatpush1.bf16.xpose.msra.mxu0 0
        %888 = vmatprep.subr.bf16.mxu0 0
        %889 = vmatpush1.bf16.xpose.msra.mxu0 0
        %890 = vmatprep.subr.bf16.mxu0 0
        %891 = vmatpush1.bf16.xpose.msra.mxu0 0
        %892 = vmatprep.subr.bf16.mxu0 0
        %893 = vmatpush1.bf16.xpose.msra.mxu0 %v876
        %894 = vmatprep.subr.bf16.mxu0 0
        %895 = vmatpush2.bf16.xpose.msra.mxu0 0
        %896 = vmatprep.subr.bf16.mxu0 0
        %897 = vmatpush2.bf16.xpose.msra.mxu0 0
        %898 = vmatprep.subr.bf16.mxu0 0
        %899 = vmatpush2.bf16.xpose.msra.mxu0 0
        %900 = vmatprep.subr.bf16.mxu0 0
        %901 = vmatpush2.bf16.xpose.msra.mxu0 0
        %902 = vmatprep.subr.bf16.mxu0 0
        %903 = vmatpush2.bf16.xpose.msra.mxu0 0
        %904 = vmatprep.subr.bf16.mxu0 0
        %905 = vmatpush2.bf16.xpose.msra.mxu0 0
        %906 = vmatprep.subr.bf16.mxu0 0
        %907 = vmatpush2.bf16.xpose.msra.mxu0 0
        %908 = vmatprep.subr.bf16.mxu0 0
        %909 = vmatpush2.bf16.xpose.msra.mxu0 0
        %910 = vmatprep.mubr.bf16.mxu0 0
        %911 = vmatmul.mubr.bf16.gmra.mxu0 %v873
        %v912 = vpop.f32.mrf.mxu0
        %v913 = vadd.f32 0.0, %v912
        %v914 = vpop.f32.mrf.mxu0
        %v915 = vpop.f32.mrf.mxu0
        %v916 = vpop.f32.mrf.mxu0
        %917 = vdwg.mxu0
        %v919 = vsel %vm871, %v736, 0
        %v922 = vsel %vm871, %v868, 0
        %924 = vmatprep.subr.bf16.mxu0 0
        %925 = vmatpush1.bf16.xpose.msra.mxu0 0
        %926 = vmatprep.subr.bf16.mxu0 0
        %927 = vmatpush1.bf16.xpose.msra.mxu0 0
        %928 = vmatprep.subr.bf16.mxu0 0
        %929 = vmatpush1.bf16.xpose.msra.mxu0 0
        %930 = vmatprep.subr.bf16.mxu0 0
        %931 = vmatpush1.bf16.xpose.msra.mxu0 0
        %932 = vmatprep.subr.bf16.mxu0 0
        %933 = vmatpush1.bf16.xpose.msra.mxu0 0
        %934 = vmatprep.subr.bf16.mxu0 0
        %935 = vmatpush1.bf16.xpose.msra.mxu0 0
        %936 = vmatprep.subr.bf16.mxu0 0
        %937 = vmatpush1.bf16.xpose.msra.mxu0 0
        %938 = vmatprep.subr.bf16.mxu0 0
        %939 = vmatpush1.bf16.xpose.msra.mxu0 %v922
        %940 = vmatprep.subr.bf16.mxu0 0
        %941 = vmatpush2.bf16.xpose.msra.mxu0 0
        %942 = vmatprep.subr.bf16.mxu0 0
        %943 = vmatpush2.bf16.xpose.msra.mxu0 0
        %944 = vmatprep.subr.bf16.mxu0 0
        %945 = vmatpush2.bf16.xpose.msra.mxu0 0
        %946 = vmatprep.subr.bf16.mxu0 0
        %947 = vmatpush2.bf16.xpose.msra.mxu0 0
        %948 = vmatprep.subr.bf16.mxu0 0
        %949 = vmatpush2.bf16.xpose.msra.mxu0 0
        %950 = vmatprep.subr.bf16.mxu0 0
        %951 = vmatpush2.bf16.xpose.msra.mxu0 0
        %952 = vmatprep.subr.bf16.mxu0 0
        %953 = vmatpush2.bf16.xpose.msra.mxu0 0
        %954 = vmatprep.subr.bf16.mxu0 0
        %955 = vmatpush2.bf16.xpose.msra.mxu0 0
        %956 = vmatprep.mubr.bf16.mxu0 0
        %957 = vmatmul.mubr.bf16.gmra.mxu0 %v919
        %v958 = vpop.f32.mrf.mxu0
        %v959 = vadd.f32 0.0, %v958
        %v960 = vpop.f32.mrf.mxu0
        %v961 = vpop.f32.mrf.mxu0
        %v962 = vpop.f32.mrf.mxu0
        %963 = vdwg.mxu0
        %v965 = vsel %vm871, %v737, 0
        %v968 = vsel %vm871, %v869, 0
        %970 = vmatprep.subr.bf16.mxu0 0
        %971 = vmatpush1.bf16.xpose.msra.mxu0 0
        %972 = vmatprep.subr.bf16.mxu0 0
        %973 = vmatpush1.bf16.xpose.msra.mxu0 0
        %974 = vmatprep.subr.bf16.mxu0 0
        %975 = vmatpush1.bf16.xpose.msra.mxu0 0
        %976 = vmatprep.subr.bf16.mxu0 0
        %977 = vmatpush1.bf16.xpose.msra.mxu0 0
        %978 = vmatprep.subr.bf16.mxu0 0
        %979 = vmatpush1.bf16.xpose.msra.mxu0 0
        %980 = vmatprep.subr.bf16.mxu0 0
        %981 = vmatpush1.bf16.xpose.msra.mxu0 0
        %982 = vmatprep.subr.bf16.mxu0 0
        %983 = vmatpush1.bf16.xpose.msra.mxu0 0
        %984 = vmatprep.subr.bf16.mxu0 0
        %985 = vmatpush1.bf16.xpose.msra.mxu0 %v968
        %986 = vmatprep.subr.bf16.mxu0 0
        %987 = vmatpush2.bf16.xpose.msra.mxu0 0
        %988 = vmatprep.subr.bf16.mxu0 0
        %989 = vmatpush2.bf16.xpose.msra.mxu0 0
        %990 = vmatprep.subr.bf16.mxu0 0
        %991 = vmatpush2.bf16.xpose.msra.mxu0 0
        %992 = vmatprep.subr.bf16.mxu0 0
        %993 = vmatpush2.bf16.xpose.msra.mxu0 0
        %994 = vmatprep.subr.bf16.mxu0 0
        %995 = vmatpush2.bf16.xpose.msra.mxu0 0
        %996 = vmatprep.subr.bf16.mxu0 0
        %997 = vmatpush2.bf16.xpose.msra.mxu0 0
        %998 = vmatprep.subr.bf16.mxu0 0
        %999 = vmatpush2.bf16.xpose.msra.mxu0 0
        %1000 = vmatprep.subr.bf16.mxu0 0
        %1001 = vmatpush2.bf16.xpose.msra.mxu0 0
        %1002 = vmatprep.mubr.bf16.mxu0 0
        %1003 = vmatmul.mubr.bf16.gmra.mxu0 %v965
        %v1004 = vpop.f32.mrf.mxu0
        %v1005 = vadd.f32 0.0, %v1004
        %v1006 = vpop.f32.mrf.mxu0
        %v1007 = vpop.f32.mrf.mxu0
        %v1008 = vpop.f32.mrf.mxu0
        %1009 = vdwg.mxu0
        %v1011 = vsel %vm871, %v738, 0
        %v1014 = vsel %vm871, %v870, 0
        %1016 = vmatprep.subr.bf16.mxu0 0
        %1017 = vmatpush1.bf16.xpose.msra.mxu0 0
        %1018 = vmatprep.subr.bf16.mxu0 0
        %1019 = vmatpush1.bf16.xpose.msra.mxu0 0
        %1020 = vmatprep.subr.bf16.mxu0 0
        %1021 = vmatpush1.bf16.xpose.msra.mxu0 0
        %1022 = vmatprep.subr.bf16.mxu0 0
        %1023 = vmatpush1.bf16.xpose.msra.mxu0 0
        %1024 = vmatprep.subr.bf16.mxu0 0
        %1025 = vmatpush1.bf16.xpose.msra.mxu0 0
        %1026 = vmatprep.subr.bf16.mxu0 0
        %1027 = vmatpush1.bf16.xpose.msra.mxu0 0
        %1028 = vmatprep.subr.bf16.mxu0 0
        %1029 = vmatpush1.bf16.xpose.msra.mxu0 0
        %1030 = vmatprep.subr.bf16.mxu0 0
        %1031 = vmatpush1.bf16.xpose.msra.mxu0 %v1014
        %1032 = vmatprep.subr.bf16.mxu0 0
        %1033 = vmatpush2.bf16.xpose.msra.mxu0 0
        %1034 = vmatprep.subr.bf16.mxu0 0
        %1035 = vmatpush2.bf16.xpose.msra.mxu0 0
        %1036 = vmatprep.subr.bf16.mxu0 0
        %1037 = vmatpush2.bf16.xpose.msra.mxu0 0
        %1038 = vmatprep.subr.bf16.mxu0 0
        %1039 = vmatpush2.bf16.xpose.msra.mxu0 0
        %1040 = vmatprep.subr.bf16.mxu0 0
        %1041 = vmatpush2.bf16.xpose.msra.mxu0 0
        %1042 = vmatprep.subr.bf16.mxu0 0
        %1043 = vmatpush2.bf16.xpose.msra.mxu0 0
        %1044 = vmatprep.subr.bf16.mxu0 0
        %1045 = vmatpush2.bf16.xpose.msra.mxu0 0
        %1046 = vmatprep.subr.bf16.mxu0 0
        %1047 = vmatpush2.bf16.xpose.msra.mxu0 0
        %1048 = vmatprep.mubr.bf16.mxu0 0
        %1049 = vmatmul.mubr.bf16.gmra.mxu0 %v1011
        %v1050 = vpop.f32.mrf.mxu0
        %v1051 = vadd.f32 0.0, %v1050
        %v1052 = vpop.f32.mrf.mxu0
        %v1053 = vpop.f32.mrf.mxu0
        %v1054 = vpop.f32.mrf.mxu0
        %1055 = vdwg.mxu0
        %v1056 = vsel %vm871, %v913, -inf
        %1057 = vmax.xlane.f32.xlu0 %v1056
        %v1058 = vpop.xlane.xlu0 %1057
        %v1059 = vsel %vm871, %v959, -inf
        %1060 = vmax.xlane.f32.xlu0 %v1059
        %v1061 = vpop.xlane.xlu0 %1060
        %v1062 = vsel %vm871, %v1005, -inf
        %1063 = vmax.xlane.f32.xlu0 %v1062
        %v1064 = vpop.xlane.xlu0 %1063
        %v1065 = vsel %vm871, %v1051, -inf
        %1066 = vmax.xlane.f32.xlu0 %v1065
        %v1067 = vpop.xlane.xlu0 %1066
        %v1068 = vsub.f32 %v913, %v1058
        %v1069 = vsub.f32 %v959, %v1061
        %v1070 = vsub.f32 %v1005, %v1064
        %v1071 = vsub.f32 %v1051, %v1067
        %v1072 = vmul.f32 %v1068, 1.442695
        %v1073 = vpow.pop %v1072
        %v1074 = vmul.f32 %v1069, 1.442695
        %v1075 = vpow.pop %v1074
        %v1076 = vmul.f32 %v1070, 1.442695
        %v1077 = vpow.pop %v1076
        %v1078 = vmul.f32 %v1071, 1.442695
        %v1079 = vpow.pop %v1078
        %v1080 = vsel %vm871, %v1073, 0.0
        %1081 = vadd.xlane.f32.xlu0 %v1080
        %v1082 = vpop.xlane.xlu0 %1081
        %v1083 = vsel %vm871, %v1075, 0.0
        %1084 = vadd.xlane.f32.xlu0 %v1083
        %v1085 = vpop.xlane.xlu0 %1084
        %v1086 = vsel %vm871, %v1077, 0.0
        %1087 = vadd.xlane.f32.xlu0 %v1086
        %v1088 = vpop.xlane.xlu0 %1087
        %v1089 = vsel %vm871, %v1079, 0.0
        %1090 = vadd.xlane.f32.xlu0 %v1089
        %v1091 = vpop.xlane.xlu0 %1090
        %v1092 = vrcp.pop %v1082
        %v1093 = vrcp.pop %v1085
        %v1094 = vrcp.pop %v1088
        %v1095 = vrcp.pop %v1091
        %v1096 = vmul.f32 %v1073, %v1092
        %v1097 = vmul.f32 %v1075, %v1093
        %v1098 = vmul.f32 %v1077, %v1094
        %v1099 = vmul.f32 %v1079, %v1095
        %v1100 = vpack.c.bf16 %v595, %v595
        %v1101 = vpack.c.bf16 %v596, %v596
        %v1102 = vpack.c.bf16 %v597, %v597
        %v1103 = vpack.c.bf16 %v598, %v598
        %v1104 = vpack.c.bf16 %v1096, %v1096
        %v1105 = vpack.c.bf16 %v1097, %v1097
        %v1106 = vpack.c.bf16 %v1098, %v1098
        %v1107 = vpack.c.bf16 %v1099, %v1099
        %v1109 = vsel %vm871, %v1100, 0
        %v1112 = vsel %vm871, %v1104, 0
        %1114 = vmatprep.subr.bf16.mxu0 0
        %1115 = vmatpush1.bf16.xpose.msra.mxu0 0
        %1116 = vmatprep.subr.bf16.mxu0 0
        %1117 = vmatpush1.bf16.xpose.msra.mxu0 0
        %1118 = vmatprep.subr.bf16.mxu0 0
        %1119 = vmatpush1.bf16.xpose.msra.mxu0 0
        %1120 = vmatprep.subr.bf16.mxu0 0
        %1121 = vmatpush1.bf16.xpose.msra.mxu0 0
        %1122 = vmatprep.subr.bf16.mxu0 0
        %1123 = vmatpush1.bf16.xpose.msra.mxu0 0
        %1124 = vmatprep.subr.bf16.mxu0 0
        %1125 = vmatpush1.bf16.xpose.msra.mxu0 0
        %1126 = vmatprep.subr.bf16.mxu0 0
        %1127 = vmatpush1.bf16.xpose.msra.mxu0 0
        %1128 = vmatprep.subr.bf16.mxu0 0
        %1129 = vmatpush1.bf16.xpose.msra.mxu0 %v1112
        %1130 = vmatprep.subr.bf16.mxu0 0
        %1131 = vmatpush2.bf16.xpose.msra.mxu0 0
        %1132 = vmatprep.subr.bf16.mxu0 0
        %1133 = vmatpush2.bf16.xpose.msra.mxu0 0
        %1134 = vmatprep.subr.bf16.mxu0 0
        %1135 = vmatpush2.bf16.xpose.msra.mxu0 0
        %1136 = vmatprep.subr.bf16.mxu0 0
        %1137 = vmatpush2.bf16.xpose.msra.mxu0 0
        %1138 = vmatprep.subr.bf16.mxu0 0
        %1139 = vmatpush2.bf16.xpose.msra.mxu0 0
        %1140 = vmatprep.subr.bf16.mxu0 0
        %1141 = vmatpush2.bf16.xpose.msra.mxu0 0
        %1142 = vmatprep.subr.bf16.mxu0 0
        %1143 = vmatpush2.bf16.xpose.msra.mxu0 0
        %1144 = vmatprep.subr.bf16.mxu0 0
        %1145 = vmatpush2.bf16.xpose.msra.mxu0 0
        %1146 = vmatprep.mubr.bf16.mxu0 0
        %1147 = vmatmul.mubr.bf16.gmra.mxu0 %v1109
        %v1148 = vpop.f32.mrf.mxu0
        %v1149 = vadd.f32 0.0, %v1148
        %v1150 = vpop.f32.mrf.mxu0
        %v1151 = vpop.f32.mrf.mxu0
        %v1152 = vpop.f32.mrf.mxu0
        %1153 = vdwg.mxu0
        %v1155 = vsel %vm871, %v1101, 0
        %v1158 = vsel %vm871, %v1105, 0
        %1160 = vmatprep.subr.bf16.mxu0 0
        %1161 = vmatpush1.bf16.xpose.msra.mxu0 0
        %1162 = vmatprep.subr.bf16.mxu0 0
        %1163 = vmatpush1.bf16.xpose.msra.mxu0 0
        %1164 = vmatprep.subr.bf16.mxu0 0
        %1165 = vmatpush1.bf16.xpose.msra.mxu0 0
        %1166 = vmatprep.subr.bf16.mxu0 0
        %1167 = vmatpush1.bf16.xpose.msra.mxu0 0
        %1168 = vmatprep.subr.bf16.mxu0 0
        %1169 = vmatpush1.bf16.xpose.msra.mxu0 0
        %1170 = vmatprep.subr.bf16.mxu0 0
        %1171 = vmatpush1.bf16.xpose.msra.mxu0 0
        %1172 = vmatprep.subr.bf16.mxu0 0
        %1173 = vmatpush1.bf16.xpose.msra.mxu0 0
        %1174 = vmatprep.subr.bf16.mxu0 0
        %1175 = vmatpush1.bf16.xpose.msra.mxu0 %v1158
        %1176 = vmatprep.subr.bf16.mxu0 0
        %1177 = vmatpush2.bf16.xpose.msra.mxu0 0
        %1178 = vmatprep.subr.bf16.mxu0 0
        %1179 = vmatpush2.bf16.xpose.msra.mxu0 0
        %1180 = vmatprep.subr.bf16.mxu0 0
        %1181 = vmatpush2.bf16.xpose.msra.mxu0 0
        %1182 = vmatprep.subr.bf16.mxu0 0
        %1183 = vmatpush2.bf16.xpose.msra.mxu0 0
        %1184 = vmatprep.subr.bf16.mxu0 0
        %1185 = vmatpush2.bf16.xpose.msra.mxu0 0
        %1186 = vmatprep.subr.bf16.mxu0 0
        %1187 = vmatpush2.bf16.xpose.msra.mxu0 0
        %1188 = vmatprep.subr.bf16.mxu0 0
        %1189 = vmatpush2.bf16.xpose.msra.mxu0 0
        %1190 = vmatprep.subr.bf16.mxu0 0
        %1191 = vmatpush2.bf16.xpose.msra.mxu0 0
        %1192 = vmatprep.mubr.bf16.mxu0 0
        %1193 = vmatmul.mubr.bf16.gmra.mxu0 %v1155
        %v1194 = vpop.f32.mrf.mxu0
        %v1195 = vadd.f32 0.0, %v1194
        %v1196 = vpop.f32.mrf.mxu0
        %v1197 = vpop.f32.mrf.mxu0
        %v1198 = vpop.f32.mrf.mxu0
        %1199 = vdwg.mxu0
        %v1201 = vsel %vm871, %v1102, 0
        %v1204 = vsel %vm871, %v1106, 0
        %1206 = vmatprep.subr.bf16.mxu0 0
        %1207 = vmatpush1.bf16.xpose.msra.mxu0 0
        %1208 = vmatprep.subr.bf16.mxu0 0
        %1209 = vmatpush1.bf16.xpose.msra.mxu0 0
        %1210 = vmatprep.subr.bf16.mxu0 0
        %1211 = vmatpush1.bf16.xpose.msra.mxu0 0
        %1212 = vmatprep.subr.bf16.mxu0 0
        %1213 = vmatpush1.bf16.xpose.msra.mxu0 0
        %1214 = vmatprep.subr.bf16.mxu0 0
        %1215 = vmatpush1.bf16.xpose.msra.mxu0 0
        %1216 = vmatprep.subr.bf16.mxu0 0
        %1217 = vmatpush1.bf16.xpose.msra.mxu0 0
        %1218 = vmatprep.subr.bf16.mxu0 0
        %1219 = vmatpush1.bf16.xpose.msra.mxu0 0
        %1220 = vmatprep.subr.bf16.mxu0 0
        %1221 = vmatpush1.bf16.xpose.msra.mxu0 %v1204
        %1222 = vmatprep.subr.bf16.mxu0 0
        %1223 = vmatpush2.bf16.xpose.msra.mxu0 0
        %1224 = vmatprep.subr.bf16.mxu0 0
        %1225 = vmatpush2.bf16.xpose.msra.mxu0 0
        %1226 = vmatprep.subr.bf16.mxu0 0
        %1227 = vmatpush2.bf16.xpose.msra.mxu0 0
        %1228 = vmatprep.subr.bf16.mxu0 0
        %1229 = vmatpush2.bf16.xpose.msra.mxu0 0
        %1230 = vmatprep.subr.bf16.mxu0 0
        %1231 = vmatpush2.bf16.xpose.msra.mxu0 0
        %1232 = vmatprep.subr.bf16.mxu0 0
        %1233 = vmatpush2.bf16.xpose.msra.mxu0 0
        %1234 = vmatprep.subr.bf16.mxu0 0
        %1235 = vmatpush2.bf16.xpose.msra.mxu0 0
        %1236 = vmatprep.subr.bf16.mxu0 0
        %1237 = vmatpush2.bf16.xpose.msra.mxu0 0
        %1238 = vmatprep.mubr.bf16.mxu0 0
        %1239 = vmatmul.mubr.bf16.gmra.mxu0 %v1201
        %v1240 = vpop.f32.mrf.mxu0
        %v1241 = vadd.f32 0.0, %v1240
        %v1242 = vpop.f32.mrf.mxu0
        %v1243 = vpop.f32.mrf.mxu0
        %v1244 = vpop.f32.mrf.mxu0
        %1245 = vdwg.mxu0
        %v1247 = vsel %vm871, %v1103, 0
        %v1250 = vsel %vm871, %v1107, 0
        %1252 = vmatprep.subr.bf16.mxu0 0
        %1253 = vmatpush1.bf16.xpose.msra.mxu0 0
        %1254 = vmatprep.subr.bf16.mxu0 0
        %1255 = vmatpush1.bf16.xpose.msra.mxu0 0
        %1256 = vmatprep.subr.bf16.mxu0 0
        %1257 = vmatpush1.bf16.xpose.msra.mxu0 0
        %1258 = vmatprep.subr.bf16.mxu0 0
        %1259 = vmatpush1.bf16.xpose.msra.mxu0 0
        %1260 = vmatprep.subr.bf16.mxu0 0
        %1261 = vmatpush1.bf16.xpose.msra.mxu0 0
        %1262 = vmatprep.subr.bf16.mxu0 0
        %1263 = vmatpush1.bf16.xpose.msra.mxu0 0
        %1264 = vmatprep.subr.bf16.mxu0 0
        %1265 = vmatpush1.bf16.xpose.msra.mxu0 0
        %1266 = vmatprep.subr.bf16.mxu0 0
        %1267 = vmatpush1.bf16.xpose.msra.mxu0 %v1250
        %1268 = vmatprep.subr.bf16.mxu0 0
        %1269 = vmatpush2.bf16.xpose.msra.mxu0 0
        %1270 = vmatprep.subr.bf16.mxu0 0
        %1271 = vmatpush2.bf16.xpose.msra.mxu0 0
        %1272 = vmatprep.subr.bf16.mxu0 0
        %1273 = vmatpush2.bf16.xpose.msra.mxu0 0
        %1274 = vmatprep.subr.bf16.mxu0 0
        %1275 = vmatpush2.bf16.xpose.msra.mxu0 0
        %1276 = vmatprep.subr.bf16.mxu0 0
        %1277 = vmatpush2.bf16.xpose.msra.mxu0 0
        %1278 = vmatprep.subr.bf16.mxu0 0
        %1279 = vmatpush2.bf16.xpose.msra.mxu0 0
        %1280 = vmatprep.subr.bf16.mxu0 0
        %1281 = vmatpush2.bf16.xpose.msra.mxu0 0
        %1282 = vmatprep.subr.bf16.mxu0 0
        %1283 = vmatpush2.bf16.xpose.msra.mxu0 0
        %1284 = vmatprep.mubr.bf16.mxu0 0
        %1285 = vmatmul.mubr.bf16.gmra.mxu0 %v1247
        %v1286 = vpop.f32.mrf.mxu0
        %v1287 = vadd.f32 0.0, %v1286
        %v1288 = vpop.f32.mrf.mxu0
        %v1289 = vpop.f32.mrf.mxu0
        %v1290 = vpop.f32.mrf.mxu0
        %1291 = vdwg.mxu0
        %1292 = vxpose.xlu0.b32.start [1/16] %v1149, 128
        %1293 = vxpose.xlu0.b32.cont [2/16] %v1195, 128
        %1294 = vxpose.xlu0.b32.cont [3/16] %v1241, 128
        %1295 = vxpose.xlu0.b32.cont [4/16] %v1287, 128
        %1296 = vxpose.xlu0.b32.cont [5/16] 0.0, 128
        %1297 = vxpose.xlu0.b32.cont [6/16] 0.0, 128
        %1298 = vxpose.xlu0.b32.cont [7/16] 0.0, 128
        %1299 = vxpose.xlu0.b32.cont [8/16] 0.0, 128
        %1300 = vxpose.xlu0.b32.cont [9/16] 0.0, 128
        %1301 = vxpose.xlu0.b32.cont [10/16] 0.0, 128
        %1302 = vxpose.xlu0.b32.cont [11/16] 0.0, 128
        %1303 = vxpose.xlu0.b32.cont [12/16] 0.0, 128
        %1304 = vxpose.xlu0.b32.cont [13/16] 0.0, 128
        %1305 = vxpose.xlu0.b32.cont [14/16] 0.0, 128
        %1306 = vxpose.xlu0.b32.cont [15/16] 0.0, 128
        %1307 = vxpose.xlu0.b32.end [16/16] 0.0, 128
        %v1308 = vpop.trf.xlu0
        %v1309 = vpop.trf.xlu0
        %v1310 = vpop.trf.xlu0
        %v1311 = vpop.trf.xlu0
        %v1312 = vpop.trf.xlu0
        %v1313 = vpop.trf.xlu0
        %v1314 = vpop.trf.xlu0
        %v1315 = vpop.trf.xlu0
        %v1316 = vpop.trf.xlu0
        %v1317 = vpop.trf.xlu0
        %v1318 = vpop.trf.xlu0
        %v1319 = vpop.trf.xlu0
        %v1320 = vpop.trf.xlu0
        %v1321 = vpop.trf.xlu0
        %v1322 = vpop.trf.xlu0
        %v1323 = vpop.trf.xlu0
        %v1324 = vpack.c.bf16 %v1308, %v1308
        %v1325 = vld [vmem:[%s5] sm:$0xf]
        %v1326 = vld [vmem:[%s5 + $0x4] sm:$0xf]
        %v1327 = vld [vmem:[%s5 + $0x8] sm:$0xf]
        %v1328 = vld [vmem:[%s5 + $0xc] sm:$0xf]
        %v1329 = vld [vmem:[%s6] sm:$0x1]
        %v1331 = vlaneseq
        %v1332 = vshrl.u32 %v1331, 7
        %v1333 = vsub.s32 0, %v1332
        %v1334 = vrot.slane %v1329, %v1333
        %v1340 = vunpack.c.l.b16 %v1325
        %v1341 = vunpack.c.l.b16 %v1326
        %v1342 = vunpack.c.l.b16 %v1327
        %v1343 = vunpack.c.l.b16 %v1328
        %v1344 = vpack.c.b16 %v1341, %v1340
        %v1345 = vpack.c.b16 %v1343, %v1342
        %v1349 = vsel %vm475, %v1324, 0
        %1351 = vmatprep.subr.bf16.mxu0 0
        %1352 = vmatpush1.bf16.msra.mxu0 0
        %1353 = vmatprep.subr.bf16.mxu0 0
        %1354 = vmatpush1.bf16.msra.mxu0 0
        %1355 = vmatprep.subr.bf16.mxu0 0
        %1356 = vmatpush1.bf16.msra.mxu0 0
        %1357 = vmatprep.subr.bf16.mxu0 0
        %1358 = vmatpush1.bf16.msra.mxu0 0
        %1359 = vmatprep.subr.bf16.mxu0 0
        %1360 = vmatpush1.bf16.msra.mxu0 0
        %1361 = vmatprep.subr.bf16.mxu0 0
        %1362 = vmatpush1.bf16.msra.mxu0 0
        %1363 = vmatprep.subr.bf16.mxu0 0
        %1364 = vmatpush1.bf16.msra.mxu0 %v1345
        %1365 = vmatprep.subr.bf16.mxu0 0
        %1366 = vmatpush1.bf16.msra.mxu0 %v1344
        %1367 = vmatprep.subr.bf16.mxu0 0
        %1368 = vmatpush2.bf16.msra.mxu0 0
        %1369 = vmatprep.subr.bf16.mxu0 0
        %1370 = vmatpush2.bf16.msra.mxu0 0
        %1371 = vmatprep.subr.bf16.mxu0 0
        %1372 = vmatpush2.bf16.msra.mxu0 0
        %1373 = vmatprep.subr.bf16.mxu0 0
        %1374 = vmatpush2.bf16.msra.mxu0 0
        %1375 = vmatprep.subr.bf16.mxu0 0
        %1376 = vmatpush2.bf16.msra.mxu0 0
        %1377 = vmatprep.subr.bf16.mxu0 0
        %1378 = vmatpush2.bf16.msra.mxu0 0
        %1379 = vmatprep.subr.bf16.mxu0 0
        %1380 = vmatpush2.bf16.msra.mxu0 0
        %1381 = vmatprep.subr.bf16.mxu0 0
        %1382 = vmatpush2.bf16.msra.mxu0 0
        %1383 = vmatprep.mubr.bf16.mxu0 0
        %1384 = vmatmul.mubr.bf16.gmra.mxu0 %v1349
        %v1385 = vpop.f32.mrf.mxu0
        %v1386 = vadd.f32 %v1334, %v1385
        %v1387 = vpop.f32.mrf.mxu0
        %v1388 = vpop.f32.mrf.mxu0
        %v1389 = vpop.f32.mrf.mxu0
        %1390 = vdwg.mxu0
        %v1391 = vadd.f32 %v472, %v1386
        %v1392 = vld [vmem:[%s7] sm:$0x1]
        %v1393 = vld [vmem:[%s8] sm:$0x1]
        %v1394 = vsel %vm475, %v1391, 0.0
        %1395 = vadd.xlane.f32.xlu0 %v1394
        %v1396 = vpop.xlane.xlu0 %1395
        %v1397 = vmul.f32 %v1396, %v479
        %v1398 = vsub.f32 %v1391, %v1397
        %v1399 = vmul.f32 %v1398, %v1398
        %v1400 = vsel %vm475, %v1399, 0.0
        %1401 = vadd.xlane.f32.xlu0 %v1400
        %v1402 = vpop.xlane.xlu0 %1401
        %v1403 = vmul.f32 %v1402, %v479
        %v1404 = vadd.f32 %v1403, 1e-05
        %v1405 = vrsqrt.pop %v1404
        %v1406 = vmul.f32 %v1398, %v1405
        %v1408 = vlaneseq
        %v1409 = vshrl.u32 %v1408, 7
        %v1410 = vsub.s32 0, %v1409
        %v1411 = vrot.slane %v1392, %v1410
        %v1413 = vmul.f32 %v1406, %v1411
        %v1415 = vlaneseq
        %v1416 = vshrl.u32 %v1415, 7
        %v1417 = vsub.s32 0, %v1416
        %v1418 = vrot.slane %v1393, %v1417
        %v1420 = vadd.f32 %v1413, %v1418
        %v1421 = vpack.c.bf16 %v1420, %v1420
        %v1422 = vld [vmem:[%s9] sm:$0xf]
        %v1423 = vld [vmem:[%s9 + $0x4] sm:$0xf]
        %v1424 = vld [vmem:[%s9 + $0x8] sm:$0xf]
        %v1425 = vld [vmem:[%s9 + $0xc] sm:$0xf]
        %v1426 = vld [vmem:[%s10] sm:$0x1]
        %v1428 = vlaneseq
        %v1429 = vshrl.u32 %v1428, 7
        %v1430 = vsub.s32 0, %v1429
        %v1431 = vrot.slane %v1426, %v1430
        %v1437 = vunpack.c.l.b16 %v1422
        %v1438 = vunpack.c.l.b16 %v1423
        %v1439 = vunpack.c.l.b16 %v1424
        %v1440 = vunpack.c.l.b16 %v1425
        %v1441 = vpack.c.b16 %v1438, %v1437
        %v1442 = vpack.c.b16 %v1440, %v1439
        %v1446 = vsel %vm475, %v1421, 0
        %1448 = vmatprep.subr.bf16.mxu0 0
        %1449 = vmatpush1.bf16.msra.mxu0 0
        %1450 = vmatprep.subr.bf16.mxu0 0
        %1451 = vmatpush1.bf16.msra.mxu0 0
        %1452 = vmatprep.subr.bf16.mxu0 0
        %1453 = vmatpush1.bf16.msra.mxu0 0
        %1454 = vmatprep.subr.bf16.mxu0 0
        %1455 = vmatpush1.bf16.msra.mxu0 0
        %1456 = vmatprep.subr.bf16.mxu0 0
        %1457 = vmatpush1.bf16.msra.mxu0 0
        %1458 = vmatprep.subr.bf16.mxu0 0
        %1459 = vmatpush1.bf16.msra.mxu0 0
        %1460 = vmatprep.subr.bf16.mxu0 0
        %1461 = vmatpush1.bf16.msra.mxu0 %v1442
        %1462 = vmatprep.subr.bf16.mxu0 0
        %1463 = vmatpush1.bf16.msra.mxu0 %v1441
        %1464 = vmatprep.subr.bf16.mxu0 0
        %1465 = vmatpush2.bf16.msra.mxu0 0
        %1466 = vmatprep.subr.bf16.mxu0 0
        %1467 = vmatpush2.bf16.msra.mxu0 0
        %1468 = vmatprep.subr.bf16.mxu0 0
        %1469 = vmatpush2.bf16.msra.mxu0 0
        %1470 = vmatprep.subr.bf16.mxu0 0
        %1471 = vmatpush2.bf16.msra.mxu0 0
        %1472 = vmatprep.subr.bf16.mxu0 0
        %1473 = vmatpush2.bf16.msra.mxu0 0
        %1474 = vmatprep.subr.bf16.mxu0 0
        %1475 = vmatpush2.bf16.msra.mxu0 0
        %1476 = vmatprep.subr.bf16.mxu0 0
        %1477 = vmatpush2.bf16.msra.mxu0 0
        %1478 = vmatprep.subr.bf16.mxu0 0
        %1479 = vmatpush2.bf16.msra.mxu0 0
        %1480 = vmatprep.mubr.bf16.mxu0 0
        %1481 = vmatmul.mubr.bf16.gmra.mxu0 %v1446
        %v1482 = vpop.f32.mrf.mxu0
        %v1483 = vadd.f32 %v1431, %v1482
        %v1484 = vpop.f32.mrf.mxu0
        %v1485 = vpop.f32.mrf.mxu0
        %v1486 = vpop.f32.mrf.mxu0
        %1487 = vdwg.mxu0
        %v1488 = vmax.f32 %v1483, 0.0
        %v1489 = vpack.c.bf16 %v1488, %v1488
        %v1490 = vld [vmem:[%s11] sm:$0xf]
        %v1491 = vld [vmem:[%s11 + $0x4] sm:$0xf]
        %v1492 = vld [vmem:[%s11 + $0x8] sm:$0xf]
        %v1493 = vld [vmem:[%s11 + $0xc] sm:$0xf]
        %v1494 = vld [vmem:[%s11 + $0x10] sm:$0xf]
        %v1495 = vld [vmem:[%s11 + $0x14] sm:$0xf]
        %v1496 = vld [vmem:[%s11 + $0x18] sm:$0xf]
        %v1497 = vld [vmem:[%s11 + $0x1c] sm:$0xf]
        %v1498 = vld [vmem:[%s12] sm:$0x1]
        %v1500 = vlaneseq
        %v1501 = vshrl.u32 %v1500, 7
        %v1502 = vsub.s32 0, %v1501
        %v1503 = vrot.slane %v1498, %v1502
        %v1513 = vunpack.c.l.b16 %v1490
        %v1514 = vunpack.c.l.b16 %v1491
        %v1515 = vunpack.c.l.b16 %v1492
        %v1516 = vunpack.c.l.b16 %v1493
        %v1517 = vunpack.c.l.b16 %v1494
        %v1518 = vunpack.c.l.b16 %v1495
        %v1519 = vunpack.c.l.b16 %v1496
        %v1520 = vunpack.c.l.b16 %v1497
        %v1521 = vpack.c.b16 %v1514, %v1513
        %v1522 = vpack.c.b16 %v1516, %v1515
        %v1523 = vpack.c.b16 %v1518, %v1517
        %v1524 = vpack.c.b16 %v1520, %v1519
        %vm1529 = vcmask 523264
        %v1531 = vsel %vm1529, %v1489, 0
        %1533 = vmatprep.subr.bf16.mxu0 0
        %1534 = vmatpush1.bf16.msra.mxu0 0
        %1535 = vmatprep.subr.bf16.mxu0 0
        %1536 = vmatpush1.bf16.msra.mxu0 0
        %1537 = vmatprep.subr.bf16.mxu0 0
        %1538 = vmatpush1.bf16.msra.mxu0 0
        %1539 = vmatprep.subr.bf16.mxu0 0
        %1540 = vmatpush1.bf16.msra.mxu0 0
        %1541 = vmatprep.subr.bf16.mxu0 0
        %1542 = vmatpush1.bf16.msra.mxu0 %v1524
        %1543 = vmatprep.subr.bf16.mxu0 0
        %1544 = vmatpush1.bf16.msra.mxu0 %v1523
        %1545 = vmatprep.subr.bf16.mxu0 0
        %1546 = vmatpush1.bf16.msra.mxu0 %v1522
        %1547 = vmatprep.subr.bf16.mxu0 0
        %1548 = vmatpush1.bf16.msra.mxu0 %v1521
        %1549 = vmatprep.subr.bf16.mxu0 0
        %1550 = vmatpush2.bf16.msra.mxu0 0
        %1551 = vmatprep.subr.bf16.mxu0 0
        %1552 = vmatpush2.bf16.msra.mxu0 0
        %1553 = vmatprep.subr.bf16.mxu0 0
        %1554 = vmatpush2.bf16.msra.mxu0 0
        %1555 = vmatprep.subr.bf16.mxu0 0
        %1556 = vmatpush2.bf16.msra.mxu0 0
        %1557 = vmatprep.subr.bf16.mxu0 0
        %1558 = vmatpush2.bf16.msra.mxu0 0
        %1559 = vmatprep.subr.bf16.mxu0 0
        %1560 = vmatpush2.bf16.msra.mxu0 0
        %1561 = vmatprep.subr.bf16.mxu0 0
        %1562 = vmatpush2.bf16.msra.mxu0 0
        %1563 = vmatprep.subr.bf16.mxu0 0
        %1564 = vmatpush2.bf16.msra.mxu0 0
        %1565 = vmatprep.mubr.bf16.mxu0 0
        %1566 = vmatmul.mubr.bf16.gmra.mxu0 %v1531
        %v1567 = vpop.f32.mrf.mxu0
        %v1568 = vadd.f32 %v1503, %v1567
        %v1569 = vpop.f32.mrf.mxu0
        %v1570 = vpop.f32.mrf.mxu0
        %v1571 = vpop.f32.mrf.mxu0
        %1572 = vdwg.mxu0
        %v1573 = vadd.f32 %v1391, %v1568
        %s1574 = scalar_lea.vmem [#allocation5], 1
        %v1575 = vld [vmem:[%s1574] sm:$0x1]
        %s1576 = scalar_lea.vmem %s2, 1
        %v1577 = vld [vmem:[%s1576] sm:$0x1]
        %v1578 = vsel %vm475, %v1573, 0.0
        %1579 = vadd.xlane.f32.xlu0 %v1578
        %v1580 = vpop.xlane.xlu0 %1579
        %v1581 = vmul.f32 %v1580, %v479
        %v1582 = vsub.f32 %v1573, %v1581
        %v1583 = vmul.f32 %v1582, %v1582
        %v1584 = vsel %vm475, %v1583, 0.0
        %1585 = vadd.xlane.f32.xlu0 %v1584
        %v1586 = vpop.xlane.xlu0 %1585
        %v1587 = vmul.f32 %v1586, %v479
        %v1588 = vadd.f32 %v1587, 1e-05
        %v1589 = vrsqrt.pop %v1588
        %v1590 = vmul.f32 %v1582, %v1589
        %v1592 = vlaneseq
        %v1593 = vshrl.u32 %v1592, 7
        %v1594 = vsub.s32 0, %v1593
        %v1595 = vrot.slane %v1575, %v1594
        %v1597 = vmul.f32 %v1590, %v1595
        %v1599 = vlaneseq
        %v1600 = vshrl.u32 %v1599, 7
        %v1601 = vsub.s32 0, %v1600
        %v1602 = vrot.slane %v1577, %v1601
        %v1604 = vadd.f32 %v1597, %v1602
        %v1605 = vpack.c.bf16 %v1604, %v1604
        %s1606 = scalar_lea.vmem %s3, 16
        %v1607 = vld [vmem:[%s1606] sm:$0xf]
        %v1608 = vld [vmem:[%s1606 + $0x4] sm:$0xf]
        %v1609 = vld [vmem:[%s1606 + $0x8] sm:$0xf]
        %v1610 = vld [vmem:[%s1606 + $0xc] sm:$0xf]
        %s1611 = scalar_lea.vmem %s4, 1
        %v1612 = vld [vmem:[%s1611] sm:$0x1]
        %v1614 = vlaneseq
        %v1615 = vshrl.u32 %v1614, 7
        %v1616 = vsub.s32 0, %v1615
        %v1617 = vrot.slane %v1612, %v1616
        %v1623 = vunpack.c.l.b16 %v1607
        %v1624 = vunpack.c.l.b16 %v1608
        %v1625 = vunpack.c.l.b16 %v1609
        %v1626 = vunpack.c.l.b16 %v1610
        %v1627 = vpack.c.b16 %v1624, %v1623
        %v1628 = vpack.c.b16 %v1626, %v1625
        %v1632 = vsel %vm475, %v1605, 0
        %1634 = vmatprep.subr.bf16.mxu0 0
        %1635 = vmatpush1.bf16.msra.mxu0 0
        %1636 = vmatprep.subr.bf16.mxu0 0
        %1637 = vmatpush1.bf16.msra.mxu0 0
        %1638 = vmatprep.subr.bf16.mxu0 0
        %1639 = vmatpush1.bf16.msra.mxu0 0
        %1640 = vmatprep.subr.bf16.mxu0 0
        %1641 = vmatpush1.bf16.msra.mxu0 0
        %1642 = vmatprep.subr.bf16.mxu0 0
        %1643 = vmatpush1.bf16.msra.mxu0 0
        %1644 = vmatprep.subr.bf16.mxu0 0
        %1645 = vmatpush1.bf16.msra.mxu0 0
        %1646 = vmatprep.subr.bf16.mxu0 0
        %1647 = vmatpush1.bf16.msra.mxu0 %v1628
        %1648 = vmatprep.subr.bf16.mxu0 0
        %1649 = vmatpush1.bf16.msra.mxu0 %v1627
        %1650 = vmatprep.subr.bf16.mxu0 0
        %1651 = vmatpush2.bf16.msra.mxu0 0
        %1652 = vmatprep.subr.bf16.mxu0 0
        %1653 = vmatpush2.bf16.msra.mxu0 0
        %1654 = vmatprep.subr.bf16.mxu0 0
        %1655 = vmatpush2.bf16.msra.mxu0 0
        %1656 = vmatprep.subr.bf16.mxu0 0
        %1657 = vmatpush2.bf16.msra.mxu0 0
        %1658 = vmatprep.subr.bf16.mxu0 0
        %1659 = vmatpush2.bf16.msra.mxu0 0
        %1660 = vmatprep.subr.bf16.mxu0 0
        %1661 = vmatpush2.bf16.msra.mxu0 0
        %1662 = vmatprep.subr.bf16.mxu0 0
        %1663 = vmatpush2.bf16.msra.mxu0 0
        %1664 = vmatprep.subr.bf16.mxu0 0
        %1665 = vmatpush2.bf16.msra.mxu0 0
        %1666 = vmatprep.mubr.bf16.mxu0 0
        %1667 = vmatmul.mubr.bf16.gmra.mxu0 %v1632
        %v1668 = vpop.f32.mrf.mxu0
        %v1669 = vadd.f32 %v1617, %v1668
        %v1670 = vpop.f32.mrf.mxu0
        %v1671 = vpop.f32.mrf.mxu0
        %v1672 = vpop.f32.mrf.mxu0
        %1673 = vdwg.mxu0
        %1674 = vxpose.xlu0.b32.start [1/16] %v1669, 128
        %1675 = vxpose.xlu0.b32.cont [2/16] 0.0, 128
        %1676 = vxpose.xlu0.b32.cont [3/16] 0.0, 128
        %1677 = vxpose.xlu0.b32.cont [4/16] 0.0, 128
        %1678 = vxpose.xlu0.b32.cont [5/16] 0.0, 128
        %1679 = vxpose.xlu0.b32.cont [6/16] 0.0, 128
        %1680 = vxpose.xlu0.b32.cont [7/16] 0.0, 128
        %1681 = vxpose.xlu0.b32.cont [8/16] 0.0, 128
        %1682 = vxpose.xlu0.b32.cont [9/16] 0.0, 128
        %1683 = vxpose.xlu0.b32.cont [10/16] 0.0, 128
        %1684 = vxpose.xlu0.b32.cont [11/16] 0.0, 128
        %1685 = vxpose.xlu0.b32.cont [12/16] 0.0, 128
        %1686 = vxpose.xlu0.b32.cont [13/16] 0.0, 128
        %1687 = vxpose.xlu0.b32.cont [14/16] 0.0, 128
        %1688 = vxpose.xlu0.b32.cont [15/16] 0.0, 128
        %1689 = vxpose.xlu0.b32.end [16/16] 0.0, 128
        %v1690 = vpop.trf.xlu0
        %v1691 = vpop.trf.xlu0
        %v1692 = vpop.trf.xlu0
        %v1693 = vpop.trf.xlu0
        %v1694 = vpop.trf.xlu0
        %v1695 = vpop.trf.xlu0
        %v1696 = vpop.trf.xlu0
        %v1697 = vpop.trf.xlu0
        %v1698 = vpop.trf.xlu0
        %v1699 = vpop.trf.xlu0
        %v1700 = vpop.trf.xlu0
        %v1701 = vpop.trf.xlu0
        %v1702 = vpop.trf.xlu0
        %v1703 = vpop.trf.xlu0
        %v1704 = vpop.trf.xlu0
        %v1705 = vpop.trf.xlu0
        %1706 = vxpose.xlu0.b32.start [1/16] %v1690, 128
        %1707 = vxpose.xlu0.b32.cont [2/16] 0.0, 128
        %1708 = vxpose.xlu0.b32.cont [3/16] 0.0, 128
        %1709 = vxpose.xlu0.b32.cont [4/16] 0.0, 128
        %1710 = vxpose.xlu0.b32.cont [5/16] 0.0, 128
        %1711 = vxpose.xlu0.b32.cont [6/16] 0.0, 128
        %1712 = vxpose.xlu0.b32.cont [7/16] 0.0, 128
        %1713 = vxpose.xlu0.b32.cont [8/16] 0.0, 128
        %1714 = vxpose.xlu0.b32.cont [9/16] 0.0, 128
        %1715 = vxpose.xlu0.b32.cont [10/16] 0.0, 128
        %1716 = vxpose.xlu0.b32.cont [11/16] 0.0, 128
        %1717 = vxpose.xlu0.b32.cont [12/16] 0.0, 128
        %1718 = vxpose.xlu0.b32.cont [13/16] 0.0, 128
        %1719 = vxpose.xlu0.b32.cont [14/16] 0.0, 128
        %1720 = vxpose.xlu0.b32.cont [15/16] 0.0, 128
        %1721 = vxpose.xlu0.b32.end [16/16] 0.0, 128
        %v1722 = vpop.trf.xlu0
        %v1723 = vpop.trf.xlu0
        %v1724 = vpop.trf.xlu0
        %v1725 = vpop.trf.xlu0
        %v1726 = vpop.trf.xlu0
        %v1727 = vpop.trf.xlu0
        %v1728 = vpop.trf.xlu0
        %v1729 = vpop.trf.xlu0
        %v1730 = vpop.trf.xlu0
        %v1731 = vpop.trf.xlu0
        %v1732 = vpop.trf.xlu0
        %v1733 = vpop.trf.xlu0
        %v1734 = vpop.trf.xlu0
        %v1735 = vpop.trf.xlu0
        %v1736 = vpop.trf.xlu0
        %v1737 = vpop.trf.xlu0
        %1738 = vxpose.xlu0.b32.start [1/16] %v1691, 128
        %1739 = vxpose.xlu0.b32.cont [2/16] 0.0, 128
        %1740 = vxpose.xlu0.b32.cont [3/16] 0.0, 128
        %1741 = vxpose.xlu0.b32.cont [4/16] 0.0, 128
        %1742 = vxpose.xlu0.b32.cont [5/16] 0.0, 128
        %1743 = vxpose.xlu0.b32.cont [6/16] 0.0, 128
        %1744 = vxpose.xlu0.b32.cont [7/16] 0.0, 128
        %1745 = vxpose.xlu0.b32.cont [8/16] 0.0, 128
        %1746 = vxpose.xlu0.b32.cont [9/16] 0.0, 128
        %1747 = vxpose.xlu0.b32.cont [10/16] 0.0, 128
        %1748 = vxpose.xlu0.b32.cont [11/16] 0.0, 128
        %1749 = vxpose.xlu0.b32.cont [12/16] 0.0, 128
        %1750 = vxpose.xlu0.b32.cont [13/16] 0.0, 128
        %1751 = vxpose.xlu0.b32.cont [14/16] 0.0, 128
        %1752 = vxpose.xlu0.b32.cont [15/16] 0.0, 128
        %1753 = vxpose.xlu0.b32.end [16/16] 0.0, 128
        %v1754 = vpop.trf.xlu0
        %v1755 = vpop.trf.xlu0
        %v1756 = vpop.trf.xlu0
        %v1757 = vpop.trf.xlu0
        %v1758 = vpop.trf.xlu0
        %v1759 = vpop.trf.xlu0
        %v1760 = vpop.trf.xlu0
        %v1761 = vpop.trf.xlu0
        %v1762 = vpop.trf.xlu0
        %v1763 = vpop.trf.xlu0
        %v1764 = vpop.trf.xlu0
        %v1765 = vpop.trf.xlu0
        %v1766 = vpop.trf.xlu0
        %v1767 = vpop.trf.xlu0
        %v1768 = vpop.trf.xlu0
        %v1769 = vpop.trf.xlu0
        %1770 = vxpose.xlu0.b32.start [1/16] %v1692, 128
        %1771 = vxpose.xlu0.b32.cont [2/16] 0.0, 128
        %1772 = vxpose.xlu0.b32.cont [3/16] 0.0, 128
        %1773 = vxpose.xlu0.b32.cont [4/16] 0.0, 128
        %1774 = vxpose.xlu0.b32.cont [5/16] 0.0, 128
        %1775 = vxpose.xlu0.b32.cont [6/16] 0.0, 128
        %1776 = vxpose.xlu0.b32.cont [7/16] 0.0, 128
        %1777 = vxpose.xlu0.b32.cont [8/16] 0.0, 128
        %1778 = vxpose.xlu0.b32.cont [9/16] 0.0, 128
        %1779 = vxpose.xlu0.b32.cont [10/16] 0.0, 128
        %1780 = vxpose.xlu0.b32.cont [11/16] 0.0, 128
        %1781 = vxpose.xlu0.b32.cont [12/16] 0.0, 128
        %1782 = vxpose.xlu0.b32.cont [13/16] 0.0, 128
        %1783 = vxpose.xlu0.b32.cont [14/16] 0.0, 128
        %1784 = vxpose.xlu0.b32.cont [15/16] 0.0, 128
        %1785 = vxpose.xlu0.b32.end [16/16] 0.0, 128
        %v1786 = vpop.trf.xlu0
        %v1787 = vpop.trf.xlu0
        %v1788 = vpop.trf.xlu0
        %v1789 = vpop.trf.xlu0
        %v1790 = vpop.trf.xlu0
        %v1791 = vpop.trf.xlu0
        %v1792 = vpop.trf.xlu0
        %v1793 = vpop.trf.xlu0
        %v1794 = vpop.trf.xlu0
        %v1795 = vpop.trf.xlu0
        %v1796 = vpop.trf.xlu0
        %v1797 = vpop.trf.xlu0
        %v1798 = vpop.trf.xlu0
        %v1799 = vpop.trf.xlu0
        %v1800 = vpop.trf.xlu0
        %v1801 = vpop.trf.xlu0
        %1802 = vxpose.xlu0.b32.start [1/16] %v1693, 128
        %1803 = vxpose.xlu0.b32.cont [2/16] 0.0, 128
        %1804 = vxpose.xlu0.b32.cont [3/16] 0.0, 128
        %1805 = vxpose.xlu0.b32.cont [4/16] 0.0, 128
        %1806 = vxpose.xlu0.b32.cont [5/16] 0.0, 128
        %1807 = vxpose.xlu0.b32.cont [6/16] 0.0, 128
        %1808 = vxpose.xlu0.b32.cont [7/16] 0.0, 128
        %1809 = vxpose.xlu0.b32.cont [8/16] 0.0, 128
        %1810 = vxpose.xlu0.b32.cont [9/16] 0.0, 128
        %1811 = vxpose.xlu0.b32.cont [10/16] 0.0, 128
        %1812 = vxpose.xlu0.b32.cont [11/16] 0.0, 128
        %1813 = vxpose.xlu0.b32.cont [12/16] 0.0, 128
        %1814 = vxpose.xlu0.b32.cont [13/16] 0.0, 128
        %1815 = vxpose.xlu0.b32.cont [14/16] 0.0, 128
        %1816 = vxpose.xlu0.b32.cont [15/16] 0.0, 128
        %1817 = vxpose.xlu0.b32.end [16/16] 0.0, 128
        %v1818 = vpop.trf.xlu0
        %v1819 = vpop.trf.xlu0
        %v1820 = vpop.trf.xlu0
        %v1821 = vpop.trf.xlu0
        %v1822 = vpop.trf.xlu0
        %v1823 = vpop.trf.xlu0
        %v1824 = vpop.trf.xlu0
        %v1825 = vpop.trf.xlu0
        %v1826 = vpop.trf.xlu0
        %v1827 = vpop.trf.xlu0
        %v1828 = vpop.trf.xlu0
        %v1829 = vpop.trf.xlu0
        %v1830 = vpop.trf.xlu0
        %v1831 = vpop.trf.xlu0
        %v1832 = vpop.trf.xlu0
        %v1833 = vpop.trf.xlu0
        %v1834 = vmul.f32 %v1722, 0.35355338
        %v1835 = vmul.f32 %v1754, 0.35355338
        %v1836 = vmul.f32 %v1786, 0.35355338
        %v1837 = vmul.f32 %v1818, 0.35355338
        %v1838 = vpack.c.bf16 %v1834, %v1834
        %v1839 = vpack.c.bf16 %v1835, %v1835
        %v1840 = vpack.c.bf16 %v1836, %v1836
        %v1841 = vpack.c.bf16 %v1837, %v1837
        %1842 = vxpose.xlu0.b32.start [1/16] %v1694, 128
        %1843 = vxpose.xlu0.b32.cont [2/16] 0.0, 128
        %1844 = vxpose.xlu0.b32.cont [3/16] 0.0, 128
        %1845 = vxpose.xlu0.b32.cont [4/16] 0.0, 128
        %1846 = vxpose.xlu0.b32.cont [5/16] 0.0, 128
        %1847 = vxpose.xlu0.b32.cont [6/16] 0.0, 128
        %1848 = vxpose.xlu0.b32.cont [7/16] 0.0, 128
        %1849 = vxpose.xlu0.b32.cont [8/16] 0.0, 128
        %1850 = vxpose.xlu0.b32.cont [9/16] 0.0, 128
        %1851 = vxpose.xlu0.b32.cont [10/16] 0.0, 128
        %1852 = vxpose.xlu0.b32.cont [11/16] 0.0, 128
        %1853 = vxpose.xlu0.b32.cont [12/16] 0.0, 128
        %1854 = vxpose.xlu0.b32.cont [13/16] 0.0, 128
        %1855 = vxpose.xlu0.b32.cont [14/16] 0.0, 128
        %1856 = vxpose.xlu0.b32.cont [15/16] 0.0, 128
        %1857 = vxpose.xlu0.b32.end [16/16] 0.0, 128
        %v1858 = vpop.trf.xlu0
        %v1859 = vpop.trf.xlu0
        %v1860 = vpop.trf.xlu0
        %v1861 = vpop.trf.xlu0
        %v1862 = vpop.trf.xlu0
        %v1863 = vpop.trf.xlu0
        %v1864 = vpop.trf.xlu0
        %v1865 = vpop.trf.xlu0
        %v1866 = vpop.trf.xlu0
        %v1867 = vpop.trf.xlu0
        %v1868 = vpop.trf.xlu0
        %v1869 = vpop.trf.xlu0
        %v1870 = vpop.trf.xlu0
        %v1871 = vpop.trf.xlu0
        %v1872 = vpop.trf.xlu0
        %v1873 = vpop.trf.xlu0
        %1874 = vxpose.xlu0.b32.start [1/16] %v1695, 128
        %1875 = vxpose.xlu0.b32.cont [2/16] 0.0, 128
        %1876 = vxpose.xlu0.b32.cont [3/16] 0.0, 128
        %1877 = vxpose.xlu0.b32.cont [4/16] 0.0, 128
        %1878 = vxpose.xlu0.b32.cont [5/16] 0.0, 128
        %1879 = vxpose.xlu0.b32.cont [6/16] 0.0, 128
        %1880 = vxpose.xlu0.b32.cont [7/16] 0.0, 128
        %1881 = vxpose.xlu0.b32.cont [8/16] 0.0, 128
        %1882 = vxpose.xlu0.b32.cont [9/16] 0.0, 128
        %1883 = vxpose.xlu0.b32.cont [10/16] 0.0, 128
        %1884 = vxpose.xlu0.b32.cont [11/16] 0.0, 128
        %1885 = vxpose.xlu0.b32.cont [12/16] 0.0, 128
        %1886 = vxpose.xlu0.b32.cont [13/16] 0.0, 128
        %1887 = vxpose.xlu0.b32.cont [14/16] 0.0, 128
        %1888 = vxpose.xlu0.b32.cont [15/16] 0.0, 128
        %1889 = vxpose.xlu0.b32.end [16/16] 0.0, 128
        %v1890 = vpop.trf.xlu0
        %v1891 = vpop.trf.xlu0
        %v1892 = vpop.trf.xlu0
        %v1893 = vpop.trf.xlu0
        %v1894 = vpop.trf.xlu0
        %v1895 = vpop.trf.xlu0
        %v1896 = vpop.trf.xlu0
        %v1897 = vpop.trf.xlu0
        %v1898 = vpop.trf.xlu0
        %v1899 = vpop.trf.xlu0
        %v1900 = vpop.trf.xlu0
        %v1901 = vpop.trf.xlu0
        %v1902 = vpop.trf.xlu0
        %v1903 = vpop.trf.xlu0
        %v1904 = vpop.trf.xlu0
        %v1905 = vpop.trf.xlu0
        %1906 = vxpose.xlu0.b32.start [1/16] %v1696, 128
        %1907 = vxpose.xlu0.b32.cont [2/16] 0.0, 128
        %1908 = vxpose.xlu0.b32.cont [3/16] 0.0, 128
        %1909 = vxpose.xlu0.b32.cont [4/16] 0.0, 128
        %1910 = vxpose.xlu0.b32.cont [5/16] 0.0, 128
        %1911 = vxpose.xlu0.b32.cont [6/16] 0.0, 128
        %1912 = vxpose.xlu0.b32.cont [7/16] 0.0, 128
        %1913 = vxpose.xlu0.b32.cont [8/16] 0.0, 128
        %1914 = vxpose.xlu0.b32.cont [9/16] 0.0, 128
        %1915 = vxpose.xlu0.b32.cont [10/16] 0.0, 128
        %1916 = vxpose.xlu0.b32.cont [11/16] 0.0, 128
        %1917 = vxpose.xlu0.b32.cont [12/16] 0.0, 128
        %1918 = vxpose.xlu0.b32.cont [13/16] 0.0, 128
        %1919 = vxpose.xlu0.b32.cont [14/16] 0.0, 128
        %1920 = vxpose.xlu0.b32.cont [15/16] 0.0, 128
        %1921 = vxpose.xlu0.b32.end [16/16] 0.0, 128
        %v1922 = vpop.trf.xlu0
        %v1923 = vpop.trf.xlu0
        %v1924 = vpop.trf.xlu0
        %v1925 = vpop.trf.xlu0
        %v1926 = vpop.trf.xlu0
        %v1927 = vpop.trf.xlu0
        %v1928 = vpop.trf.xlu0
        %v1929 = vpop.trf.xlu0
        %v1930 = vpop.trf.xlu0
        %v1931 = vpop.trf.xlu0
        %v1932 = vpop.trf.xlu0
        %v1933 = vpop.trf.xlu0
        %v1934 = vpop.trf.xlu0
        %v1935 = vpop.trf.xlu0
        %v1936 = vpop.trf.xlu0
        %v1937 = vpop.trf.xlu0
        %1938 = vxpose.xlu0.b32.start [1/16] %v1697, 128
        %1939 = vxpose.xlu0.b32.cont [2/16] 0.0, 128
        %1940 = vxpose.xlu0.b32.cont [3/16] 0.0, 128
        %1941 = vxpose.xlu0.b32.cont [4/16] 0.0, 128
        %1942 = vxpose.xlu0.b32.cont [5/16] 0.0, 128
        %1943 = vxpose.xlu0.b32.cont [6/16] 0.0, 128
        %1944 = vxpose.xlu0.b32.cont [7/16] 0.0, 128
        %1945 = vxpose.xlu0.b32.cont [8/16] 0.0, 128
        %1946 = vxpose.xlu0.b32.cont [9/16] 0.0, 128
        %1947 = vxpose.xlu0.b32.cont [10/16] 0.0, 128
        %1948 = vxpose.xlu0.b32.cont [11/16] 0.0, 128
        %1949 = vxpose.xlu0.b32.cont [12/16] 0.0, 128
        %1950 = vxpose.xlu0.b32.cont [13/16] 0.0, 128
        %1951 = vxpose.xlu0.b32.cont [14/16] 0.0, 128
        %1952 = vxpose.xlu0.b32.cont [15/16] 0.0, 128
        %1953 = vxpose.xlu0.b32.end [16/16] 0.0, 128
        %v1954 = vpop.trf.xlu0
        %v1955 = vpop.trf.xlu0
        %v1956 = vpop.trf.xlu0
        %v1957 = vpop.trf.xlu0
        %v1958 = vpop.trf.xlu0
        %v1959 = vpop.trf.xlu0
        %v1960 = vpop.trf.xlu0
        %v1961 = vpop.trf.xlu0
        %v1962 = vpop.trf.xlu0
        %v1963 = vpop.trf.xlu0
        %v1964 = vpop.trf.xlu0
        %v1965 = vpop.trf.xlu0
        %v1966 = vpop.trf.xlu0
        %v1967 = vpop.trf.xlu0
        %v1968 = vpop.trf.xlu0
        %v1969 = vpop.trf.xlu0
        %v1970 = vpack.c.bf16 %v1858, %v1858
        %v1971 = vpack.c.bf16 %v1890, %v1890
        %v1972 = vpack.c.bf16 %v1922, %v1922
        %v1973 = vpack.c.bf16 %v1954, %v1954
        %v1975 = vsel %vm871, %v1838, 0
        %v1978 = vsel %vm871, %v1970, 0
        %1980 = vmatprep.subr.bf16.mxu0 0
        %1981 = vmatpush1.bf16.xpose.msra.mxu0 0
        %1982 = vmatprep.subr.bf16.mxu0 0
        %1983 = vmatpush1.bf16.xpose.msra.mxu0 0
        %1984 = vmatprep.subr.bf16.mxu0 0
        %1985 = vmatpush1.bf16.xpose.msra.mxu0 0
        %1986 = vmatprep.subr.bf16.mxu0 0
        %1987 = vmatpush1.bf16.xpose.msra.mxu0 0
        %1988 = vmatprep.subr.bf16.mxu0 0
        %1989 = vmatpush1.bf16.xpose.msra.mxu0 0
        %1990 = vmatprep.subr.bf16.mxu0 0
        %1991 = vmatpush1.bf16.xpose.msra.mxu0 0
        %1992 = vmatprep.subr.bf16.mxu0 0
        %1993 = vmatpush1.bf16.xpose.msra.mxu0 0
        %1994 = vmatprep.subr.bf16.mxu0 0
        %1995 = vmatpush1.bf16.xpose.msra.mxu0 %v1978
        %1996 = vmatprep.subr.bf16.mxu0 0
        %1997 = vmatpush2.bf16.xpose.msra.mxu0 0
        %1998 = vmatprep.subr.bf16.mxu0 0
        %1999 = vmatpush2.bf16.xpose.msra.mxu0 0
        %2000 = vmatprep.subr.bf16.mxu0 0
        %2001 = vmatpush2.bf16.xpose.msra.mxu0 0
        %2002 = vmatprep.subr.bf16.mxu0 0
        %2003 = vmatpush2.bf16.xpose.msra.mxu0 0
        %2004 = vmatprep.subr.bf16.mxu0 0
        %2005 = vmatpush2.bf16.xpose.msra.mxu0 0
        %2006 = vmatprep.subr.bf16.mxu0 0
        %2007 = vmatpush2.bf16.xpose.msra.mxu0 0
        %2008 = vmatprep.subr.bf16.mxu0 0
        %2009 = vmatpush2.bf16.xpose.msra.mxu0 0
        %2010 = vmatprep.subr.bf16.mxu0 0
        %2011 = vmatpush2.bf16.xpose.msra.mxu0 0
        %2012 = vmatprep.mubr.bf16.mxu0 0
        %2013 = vmatmul.mubr.bf16.gmra.mxu0 %v1975
        %v2014 = vpop.f32.mrf.mxu0
        %v2015 = vadd.f32 0.0, %v2014
        %v2016 = vpop.f32.mrf.mxu0
        %v2017 = vpop.f32.mrf.mxu0
        %v2018 = vpop.f32.mrf.mxu0
        %2019 = vdwg.mxu0
        %v2021 = vsel %vm871, %v1839, 0
        %v2024 = vsel %vm871, %v1971, 0
        %2026 = vmatprep.subr.bf16.mxu0 0
        %2027 = vmatpush1.bf16.xpose.msra.mxu0 0
        %2028 = vmatprep.subr.bf16.mxu0 0
        %2029 = vmatpush1.bf16.xpose.msra.mxu0 0
        %2030 = vmatprep.subr.bf16.mxu0 0
        %2031 = vmatpush1.bf16.xpose.msra.mxu0 0
        %2032 = vmatprep.subr.bf16.mxu0 0
        %2033 = vmatpush1.bf16.xpose.msra.mxu0 0
        %2034 = vmatprep.subr.bf16.mxu0 0
        %2035 = vmatpush1.bf16.xpose.msra.mxu0 0
        %2036 = vmatprep.subr.bf16.mxu0 0
        %2037 = vmatpush1.bf16.xpose.msra.mxu0 0
        %2038 = vmatprep.subr.bf16.mxu0 0
        %2039 = vmatpush1.bf16.xpose.msra.mxu0 0
        %2040 = vmatprep.subr.bf16.mxu0 0
        %2041 = vmatpush1.bf16.xpose.msra.mxu0 %v2024
        %2042 = vmatprep.subr.bf16.mxu0 0
        %2043 = vmatpush2.bf16.xpose.msra.mxu0 0
        %2044 = vmatprep.subr.bf16.mxu0 0
        %2045 = vmatpush2.bf16.xpose.msra.mxu0 0
        %2046 = vmatprep.subr.bf16.mxu0 0
        %2047 = vmatpush2.bf16.xpose.msra.mxu0 0
        %2048 = vmatprep.subr.bf16.mxu0 0
        %2049 = vmatpush2.bf16.xpose.msra.mxu0 0
        %2050 = vmatprep.subr.bf16.mxu0 0
        %2051 = vmatpush2.bf16.xpose.msra.mxu0 0
        %2052 = vmatprep.subr.bf16.mxu0 0
        %2053 = vmatpush2.bf16.xpose.msra.mxu0 0
        %2054 = vmatprep.subr.bf16.mxu0 0
        %2055 = vmatpush2.bf16.xpose.msra.mxu0 0
        %2056 = vmatprep.subr.bf16.mxu0 0
        %2057 = vmatpush2.bf16.xpose.msra.mxu0 0
        %2058 = vmatprep.mubr.bf16.mxu0 0
        %2059 = vmatmul.mubr.bf16.gmra.mxu0 %v2021
        %v2060 = vpop.f32.mrf.mxu0
        %v2061 = vadd.f32 0.0, %v2060
        %v2062 = vpop.f32.mrf.mxu0
        %v2063 = vpop.f32.mrf.mxu0
        %v2064 = vpop.f32.mrf.mxu0
        %2065 = vdwg.mxu0
        %v2067 = vsel %vm871, %v1840, 0
        %v2070 = vsel %vm871, %v1972, 0
        %2072 = vmatprep.subr.bf16.mxu0 0
        %2073 = vmatpush1.bf16.xpose.msra.mxu0 0
        %2074 = vmatprep.subr.bf16.mxu0 0
        %2075 = vmatpush1.bf16.xpose.msra.mxu0 0
        %2076 = vmatprep.subr.bf16.mxu0 0
        %2077 = vmatpush1.bf16.xpose.msra.mxu0 0
        %2078 = vmatprep.subr.bf16.mxu0 0
        %2079 = vmatpush1.bf16.xpose.msra.mxu0 0
        %2080 = vmatprep.subr.bf16.mxu0 0
        %2081 = vmatpush1.bf16.xpose.msra.mxu0 0
        %2082 = vmatprep.subr.bf16.mxu0 0
        %2083 = vmatpush1.bf16.xpose.msra.mxu0 0
        %2084 = vmatprep.subr.bf16.mxu0 0
        %2085 = vmatpush1.bf16.xpose.msra.mxu0 0
        %2086 = vmatprep.subr.bf16.mxu0 0
        %2087 = vmatpush1.bf16.xpose.msra.mxu0 %v2070
        %2088 = vmatprep.subr.bf16.mxu0 0
        %2089 = vmatpush2.bf16.xpose.msra.mxu0 0
        %2090 = vmatprep.subr.bf16.mxu0 0
        %2091 = vmatpush2.bf16.xpose.msra.mxu0 0
        %2092 = vmatprep.subr.bf16.mxu0 0
        %2093 = vmatpush2.bf16.xpose.msra.mxu0 0
        %2094 = vmatprep.subr.bf16.mxu0 0
        %2095 = vmatpush2.bf16.xpose.msra.mxu0 0
        %2096 = vmatprep.subr.bf16.mxu0 0
        %2097 = vmatpush2.bf16.xpose.msra.mxu0 0
        %2098 = vmatprep.subr.bf16.mxu0 0
        %2099 = vmatpush2.bf16.xpose.msra.mxu0 0
        %2100 = vmatprep.subr.bf16.mxu0 0
        %2101 = vmatpush2.bf16.xpose.msra.mxu0 0
        %2102 = vmatprep.subr.bf16.mxu0 0
        %2103 = vmatpush2.bf16.xpose.msra.mxu0 0
        %2104 = vmatprep.mubr.bf16.mxu0 0
        %2105 = vmatmul.mubr.bf16.gmra.mxu0 %v2067
        %v2106 = vpop.f32.mrf.mxu0
        %v2107 = vadd.f32 0.0, %v2106
        %v2108 = vpop.f32.mrf.mxu0
        %v2109 = vpop.f32.mrf.mxu0
        %v2110 = vpop.f32.mrf.mxu0
        %2111 = vdwg.mxu0
        %v2113 = vsel %vm871, %v1841, 0
        %v2116 = vsel %vm871, %v1973, 0
        %2118 = vmatprep.subr.bf16.mxu0 0
        %2119 = vmatpush1.bf16.xpose.msra.mxu0 0
        %2120 = vmatprep.subr.bf16.mxu0 0
        %2121 = vmatpush1.bf16.xpose.msra.mxu0 0
        %2122 = vmatprep.subr.bf16.mxu0 0
        %2123 = vmatpush1.bf16.xpose.msra.mxu0 0
        %2124 = vmatprep.subr.bf16.mxu0 0
        %2125 = vmatpush1.bf16.xpose.msra.mxu0 0
        %2126 = vmatprep.subr.bf16.mxu0 0
        %2127 = vmatpush1.bf16.xpose.msra.mxu0 0
        %2128 = vmatprep.subr.bf16.mxu0 0
        %2129 = vmatpush1.bf16.xpose.msra.mxu0 0
        %2130 = vmatprep.subr.bf16.mxu0 0
        %2131 = vmatpush1.bf16.xpose.msra.mxu0 0
        %2132 = vmatprep.subr.bf16.mxu0 0
        %2133 = vmatpush1.bf16.xpose.msra.mxu0 %v2116
        %2134 = vmatprep.subr.bf16.mxu0 0
        %2135 = vmatpush2.bf16.xpose.msra.mxu0 0
        %2136 = vmatprep.subr.bf16.mxu0 0
        %2137 = vmatpush2.bf16.xpose.msra.mxu0 0
        %2138 = vmatprep.subr.bf16.mxu0 0
        %2139 = vmatpush2.bf16.xpose.msra.mxu0 0
        %2140 = vmatprep.subr.bf16.mxu0 0
        %2141 = vmatpush2.bf16.xpose.msra.mxu0 0
        %2142 = vmatprep.subr.bf16.mxu0 0
        %2143 = vmatpush2.bf16.xpose.msra.mxu0 0
        %2144 = vmatprep.subr.bf16.mxu0 0
        %2145 = vmatpush2.bf16.xpose.msra.mxu0 0
        %2146 = vmatprep.subr.bf16.mxu0 0
        %2147 = vmatpush2.bf16.xpose.msra.mxu0 0
        %2148 = vmatprep.subr.bf16.mxu0 0
        %2149 = vmatpush2.bf16.xpose.msra.mxu0 0
        %2150 = vmatprep.mubr.bf16.mxu0 0
        %2151 = vmatmul.mubr.bf16.gmra.mxu0 %v2113
        %v2152 = vpop.f32.mrf.mxu0
        %v2153 = vadd.f32 0.0, %v2152
        %v2154 = vpop.f32.mrf.mxu0
        %v2155 = vpop.f32.mrf.mxu0
        %v2156 = vpop.f32.mrf.mxu0
        %2157 = vdwg.mxu0
        %v2158 = vsel %vm871, %v2015, -inf
        %2159 = vmax.xlane.f32.xlu0 %v2158
        %v2160 = vpop.xlane.xlu0 %2159
        %v2161 = vsel %vm871, %v2061, -inf
        %2162 = vmax.xlane.f32.xlu0 %v2161
        %v2163 = vpop.xlane.xlu0 %2162
        %v2164 = vsel %vm871, %v2107, -inf
        %2165 = vmax.xlane.f32.xlu0 %v2164
        %v2166 = vpop.xlane.xlu0 %2165
        %v2167 = vsel %vm871, %v2153, -inf
        %2168 = vmax.xlane.f32.xlu0 %v2167
        %v2169 = vpop.xlane.xlu0 %2168
        %v2170 = vsub.f32 %v2015, %v2160
        %v2171 = vsub.f32 %v2061, %v2163
        %v2172 = vsub.f32 %v2107, %v2166
        %v2173 = vsub.f32 %v2153, %v2169
        %v2174 = vmul.f32 %v2170, 1.442695
        %v2175 = vpow.pop %v2174
        %v2176 = vmul.f32 %v2171, 1.442695
        %v2177 = vpow.pop %v2176
        %v2178 = vmul.f32 %v2172, 1.442695
        %v2179 = vpow.pop %v2178
        %v2180 = vmul.f32 %v2173, 1.442695
        %v2181 = vpow.pop %v2180
        %v2182 = vsel %vm871, %v2175, 0.0
        %2183 = vadd.xlane.f32.xlu0 %v2182
        %v2184 = vpop.xlane.xlu0 %2183
        %v2185 = vsel %vm871, %v2177, 0.0
        %2186 = vadd.xlane.f32.xlu0 %v2185
        %v2187 = vpop.xlane.xlu0 %2186
        %v2188 = vsel %vm871, %v2179, 0.0
        %2189 = vadd.xlane.f32.xlu0 %v2188
        %v2190 = vpop.xlane.xlu0 %2189
        %v2191 = vsel %vm871, %v2181, 0.0
        %2192 = vadd.xlane.f32.xlu0 %v2191
        %v2193 = vpop.xlane.xlu0 %2192
        %v2194 = vrcp.pop %v2184
        %v2195 = vrcp.pop %v2187
        %v2196 = vrcp.pop %v2190
        %v2197 = vrcp.pop %v2193
        %v2198 = vmul.f32 %v2175, %v2194
        %v2199 = vmul.f32 %v2177, %v2195
        %v2200 = vmul.f32 %v2179, %v2196
        %v2201 = vmul.f32 %v2181, %v2197
        %v2202 = vpack.c.bf16 %v1698, %v1698
        %v2203 = vpack.c.bf16 %v1699, %v1699
        %v2204 = vpack.c.bf16 %v1700, %v1700
        %v2205 = vpack.c.bf16 %v1701, %v1701
        %v2206 = vpack.c.bf16 %v2198, %v2198
        %v2207 = vpack.c.bf16 %v2199, %v2199
        %v2208 = vpack.c.bf16 %v2200, %v2200
        %v2209 = vpack.c.bf16 %v2201, %v2201
        %v2211 = vsel %vm871, %v2202, 0
        %v2214 = vsel %vm871, %v2206, 0
        %2216 = vmatprep.subr.bf16.mxu0 0
        %2217 = vmatpush1.bf16.xpose.msra.mxu0 0
        %2218 = vmatprep.subr.bf16.mxu0 0
        %2219 = vmatpush1.bf16.xpose.msra.mxu0 0
        %2220 = vmatprep.subr.bf16.mxu0 0
        %2221 = vmatpush1.bf16.xpose.msra.mxu0 0
        %2222 = vmatprep.subr.bf16.mxu0 0
        %2223 = vmatpush1.bf16.xpose.msra.mxu0 0
        %2224 = vmatprep.subr.bf16.mxu0 0
        %2225 = vmatpush1.bf16.xpose.msra.mxu0 0
        %2226 = vmatprep.subr.bf16.mxu0 0
        %2227 = vmatpush1.bf16.xpose.msra.mxu0 0
        %2228 = vmatprep.subr.bf16.mxu0 0
        %2229 = vmatpush1.bf16.xpose.msra.mxu0 0
        %2230 = vmatprep.subr.bf16.mxu0 0
        %2231 = vmatpush1.bf16.xpose.msra.mxu0 %v2214
        %2232 = vmatprep.subr.bf16.mxu0 0
        %2233 = vmatpush2.bf16.xpose.msra.mxu0 0
        %2234 = vmatprep.subr.bf16.mxu0 0
        %2235 = vmatpush2.bf16.xpose.msra.mxu0 0
        %2236 = vmatprep.subr.bf16.mxu0 0
        %2237 = vmatpush2.bf16.xpose.msra.mxu0 0
        %2238 = vmatprep.subr.bf16.mxu0 0
        %2239 = vmatpush2.bf16.xpose.msra.mxu0 0
        %2240 = vmatprep.subr.bf16.mxu0 0
        %2241 = vmatpush2.bf16.xpose.msra.mxu0 0
        %2242 = vmatprep.subr.bf16.mxu0 0
        %2243 = vmatpush2.bf16.xpose.msra.mxu0 0
        %2244 = vmatprep.subr.bf16.mxu0 0
        %2245 = vmatpush2.bf16.xpose.msra.mxu0 0
        %2246 = vmatprep.subr.bf16.mxu0 0
        %2247 = vmatpush2.bf16.xpose.msra.mxu0 0
        %2248 = vmatprep.mubr.bf16.mxu0 0
        %2249 = vmatmul.mubr.bf16.gmra.mxu0 %v2211
        %v2250 = vpop.f32.mrf.mxu0
        %v2251 = vadd.f32 0.0, %v2250
        %v2252 = vpop.f32.mrf.mxu0
        %v2253 = vpop.f32.mrf.mxu0
        %v2254 = vpop.f32.mrf.mxu0
        %2255 = vdwg.mxu0
        %v2257 = vsel %vm871, %v2203, 0
        %v2260 = vsel %vm871, %v2207, 0
        %2262 = vmatprep.subr.bf16.mxu0 0
        %2263 = vmatpush1.bf16.xpose.msra.mxu0 0
        %2264 = vmatprep.subr.bf16.mxu0 0
        %2265 = vmatpush1.bf16.xpose.msra.mxu0 0
        %2266 = vmatprep.subr.bf16.mxu0 0
        %2267 = vmatpush1.bf16.xpose.msra.mxu0 0
        %2268 = vmatprep.subr.bf16.mxu0 0
        %2269 = vmatpush1.bf16.xpose.msra.mxu0 0
        %2270 = vmatprep.subr.bf16.mxu0 0
        %2271 = vmatpush1.bf16.xpose.msra.mxu0 0
        %2272 = vmatprep.subr.bf16.mxu0 0
        %2273 = vmatpush1.bf16.xpose.msra.mxu0 0
        %2274 = vmatprep.subr.bf16.mxu0 0
        %2275 = vmatpush1.bf16.xpose.msra.mxu0 0
        %2276 = vmatprep.subr.bf16.mxu0 0
        %2277 = vmatpush1.bf16.xpose.msra.mxu0 %v2260
        %2278 = vmatprep.subr.bf16.mxu0 0
        %2279 = vmatpush2.bf16.xpose.msra.mxu0 0
        %2280 = vmatprep.subr.bf16.mxu0 0
        %2281 = vmatpush2.bf16.xpose.msra.mxu0 0
        %2282 = vmatprep.subr.bf16.mxu0 0
        %2283 = vmatpush2.bf16.xpose.msra.mxu0 0
        %2284 = vmatprep.subr.bf16.mxu0 0
        %2285 = vmatpush2.bf16.xpose.msra.mxu0 0
        %2286 = vmatprep.subr.bf16.mxu0 0
        %2287 = vmatpush2.bf16.xpose.msra.mxu0 0
        %2288 = vmatprep.subr.bf16.mxu0 0
        %2289 = vmatpush2.bf16.xpose.msra.mxu0 0
        %2290 = vmatprep.subr.bf16.mxu0 0
        %2291 = vmatpush2.bf16.xpose.msra.mxu0 0
        %2292 = vmatprep.subr.bf16.mxu0 0
        %2293 = vmatpush2.bf16.xpose.msra.mxu0 0
        %2294 = vmatprep.mubr.bf16.mxu0 0
        %2295 = vmatmul.mubr.bf16.gmra.mxu0 %v2257
        %v2296 = vpop.f32.mrf.mxu0
        %v2297 = vadd.f32 0.0, %v2296
        %v2298 = vpop.f32.mrf.mxu0
        %v2299 = vpop.f32.mrf.mxu0
        %v2300 = vpop.f32.mrf.mxu0
        %2301 = vdwg.mxu0
        %v2303 = vsel %vm871, %v2204, 0
        %v2306 = vsel %vm871, %v2208, 0
        %2308 = vmatprep.subr.bf16.mxu0 0
        %2309 = vmatpush1.bf16.xpose.msra.mxu0 0
        %2310 = vmatprep.subr.bf16.mxu0 0
        %2311 = vmatpush1.bf16.xpose.msra.mxu0 0
        %2312 = vmatprep.subr.bf16.mxu0 0
        %2313 = vmatpush1.bf16.xpose.msra.mxu0 0
        %2314 = vmatprep.subr.bf16.mxu0 0
        %2315 = vmatpush1.bf16.xpose.msra.mxu0 0
        %2316 = vmatprep.subr.bf16.mxu0 0
        %2317 = vmatpush1.bf16.xpose.msra.mxu0 0
        %2318 = vmatprep.subr.bf16.mxu0 0
        %2319 = vmatpush1.bf16.xpose.msra.mxu0 0
        %2320 = vmatprep.subr.bf16.mxu0 0
        %2321 = vmatpush1.bf16.xpose.msra.mxu0 0
        %2322 = vmatprep.subr.bf16.mxu0 0
        %2323 = vmatpush1.bf16.xpose.msra.mxu0 %v2306
        %2324 = vmatprep.subr.bf16.mxu0 0
        %2325 = vmatpush2.bf16.xpose.msra.mxu0 0
        %2326 = vmatprep.subr.bf16.mxu0 0
        %2327 = vmatpush2.bf16.xpose.msra.mxu0 0
        %2328 = vmatprep.subr.bf16.mxu0 0
        %2329 = vmatpush2.bf16.xpose.msra.mxu0 0
        %2330 = vmatprep.subr.bf16.mxu0 0
        %2331 = vmatpush2.bf16.xpose.msra.mxu0 0
        %2332 = vmatprep.subr.bf16.mxu0 0
        %2333 = vmatpush2.bf16.xpose.msra.mxu0 0
        %2334 = vmatprep.subr.bf16.mxu0 0
        %2335 = vmatpush2.bf16.xpose.msra.mxu0 0
        %2336 = vmatprep.subr.bf16.mxu0 0
        %2337 = vmatpush2.bf16.xpose.msra.mxu0 0
        %2338 = vmatprep.subr.bf16.mxu0 0
        %2339 = vmatpush2.bf16.xpose.msra.mxu0 0
        %2340 = vmatprep.mubr.bf16.mxu0 0
        %2341 = vmatmul.mubr.bf16.gmra.mxu0 %v2303
        %v2342 = vpop.f32.mrf.mxu0
        %v2343 = vadd.f32 0.0, %v2342
        %v2344 = vpop.f32.mrf.mxu0
        %v2345 = vpop.f32.mrf.mxu0
        %v2346 = vpop.f32.mrf.mxu0
        %2347 = vdwg.mxu0
        %v2349 = vsel %vm871, %v2205, 0
        %v2352 = vsel %vm871, %v2209, 0
        %2354 = vmatprep.subr.bf16.mxu0 0
        %2355 = vmatpush1.bf16.xpose.msra.mxu0 0
        %2356 = vmatprep.subr.bf16.mxu0 0
        %2357 = vmatpush1.bf16.xpose.msra.mxu0 0
        %2358 = vmatprep.subr.bf16.mxu0 0
        %2359 = vmatpush1.bf16.xpose.msra.mxu0 0
        %2360 = vmatprep.subr.bf16.mxu0 0
        %2361 = vmatpush1.bf16.xpose.msra.mxu0 0
        %2362 = vmatprep.subr.bf16.mxu0 0
        %2363 = vmatpush1.bf16.xpose.msra.mxu0 0
        %2364 = vmatprep.subr.bf16.mxu0 0
        %2365 = vmatpush1.bf16.xpose.msra.mxu0 0
        %2366 = vmatprep.subr.bf16.mxu0 0
        %2367 = vmatpush1.bf16.xpose.msra.mxu0 0
        %2368 = vmatprep.subr.bf16.mxu0 0
        %2369 = vmatpush1.bf16.xpose.msra.mxu0 %v2352
        %2370 = vmatprep.subr.bf16.mxu0 0
        %2371 = vmatpush2.bf16.xpose.msra.mxu0 0
        %2372 = vmatprep.subr.bf16.mxu0 0
        %2373 = vmatpush2.bf16.xpose.msra.mxu0 0
        %2374 = vmatprep.subr.bf16.mxu0 0
        %2375 = vmatpush2.bf16.xpose.msra.mxu0 0
        %2376 = vmatprep.subr.bf16.mxu0 0
        %2377 = vmatpush2.bf16.xpose.msra.mxu0 0
        %2378 = vmatprep.subr.bf16.mxu0 0
        %2379 = vmatpush2.bf16.xpose.msra.mxu0 0
        %2380 = vmatprep.subr.bf16.mxu0 0
        %2381 = vmatpush2.bf16.xpose.msra.mxu0 0
        %2382 = vmatprep.subr.bf16.mxu0 0
        %2383 = vmatpush2.bf16.xpose.msra.mxu0 0
        %2384 = vmatprep.subr.bf16.mxu0 0
        %2385 = vmatpush2.bf16.xpose.msra.mxu0 0
        %2386 = vmatprep.mubr.bf16.mxu0 0
        %2387 = vmatmul.mubr.bf16.gmra.mxu0 %v2349
        %v2388 = vpop.f32.mrf.mxu0
        %v2389 = vadd.f32 0.0, %v2388
        %v2390 = vpop.f32.mrf.mxu0
        %v2391 = vpop.f32.mrf.mxu0
        %v2392 = vpop.f32.mrf.mxu0
        %2393 = vdwg.mxu0
        %2394 = vxpose.xlu0.b32.start [1/16] %v2251, 128
        %2395 = vxpose.xlu0.b32.cont [2/16] %v2297, 128
        %2396 = vxpose.xlu0.b32.cont [3/16] %v2343, 128
        %2397 = vxpose.xlu0.b32.cont [4/16] %v2389, 128
        %2398 = vxpose.xlu0.b32.cont [5/16] 0.0, 128
        %2399 = vxpose.xlu0.b32.cont [6/16] 0.0, 128
        %2400 = vxpose.xlu0.b32.cont [7/16] 0.0, 128
        %2401 = vxpose.xlu0.b32.cont [8/16] 0.0, 128
        %2402 = vxpose.xlu0.b32.cont [9/16] 0.0, 128
        %2403 = vxpose.xlu0.b32.cont [10/16] 0.0, 128
        %2404 = vxpose.xlu0.b32.cont [11/16] 0.0, 128
        %2405 = vxpose.xlu0.b32.cont [12/16] 0.0, 128
        %2406 = vxpose.xlu0.b32.cont [13/16] 0.0, 128
        %2407 = vxpose.xlu0.b32.cont [14/16] 0.0, 128
        %2408 = vxpose.xlu0.b32.cont [15/16] 0.0, 128
        %2409 = vxpose.xlu0.b32.end [16/16] 0.0, 128
        %v2410 = vpop.trf.xlu0
        %v2411 = vpop.trf.xlu0
        %v2412 = vpop.trf.xlu0
        %v2413 = vpop.trf.xlu0
        %v2414 = vpop.trf.xlu0
        %v2415 = vpop.trf.xlu0
        %v2416 = vpop.trf.xlu0
        %v2417 = vpop.trf.xlu0
        %v2418 = vpop.trf.xlu0
        %v2419 = vpop.trf.xlu0
        %v2420 = vpop.trf.xlu0
        %v2421 = vpop.trf.xlu0
        %v2422 = vpop.trf.xlu0
        %v2423 = vpop.trf.xlu0
        %v2424 = vpop.trf.xlu0
        %v2425 = vpop.trf.xlu0
        %v2426 = vpack.c.bf16 %v2410, %v2410
        %s2427 = scalar_lea.vmem %s5, 16
        %v2428 = vld [vmem:[%s2427] sm:$0xf]
        %v2429 = vld [vmem:[%s2427 + $0x4] sm:$0xf]
        %v2430 = vld [vmem:[%s2427 + $0x8] sm:$0xf]
        %v2431 = vld [vmem:[%s2427 + $0xc] sm:$0xf]
        %s2432 = scalar_lea.vmem %s6, 1
        %v2433 = vld [vmem:[%s2432] sm:$0x1]
        %v2435 = vlaneseq
        %v2436 = vshrl.u32 %v2435, 7
        %v2437 = vsub.s32 0, %v2436
        %v2438 = vrot.slane %v2433, %v2437
        %v2444 = vunpack.c.l.b16 %v2428
        %v2445 = vunpack.c.l.b16 %v2429
        %v2446 = vunpack.c.l.b16 %v2430
        %v2447 = vunpack.c.l.b16 %v2431
        %v2448 = vpack.c.b16 %v2445, %v2444
        %v2449 = vpack.c.b16 %v2447, %v2446
        %v2453 = vsel %vm475, %v2426, 0
        %2455 = vmatprep.subr.bf16.mxu0 0
        %2456 = vmatpush1.bf16.msra.mxu0 0
        %2457 = vmatprep.subr.bf16.mxu0 0
        %2458 = vmatpush1.bf16.msra.mxu0 0
        %2459 = vmatprep.subr.bf16.mxu0 0
        %2460 = vmatpush1.bf16.msra.mxu0 0
        %2461 = vmatprep.subr.bf16.mxu0 0
        %2462 = vmatpush1.bf16.msra.mxu0 0
        %2463 = vmatprep.subr.bf16.mxu0 0
        %2464 = vmatpush1.bf16.msra.mxu0 0
        %2465 = vmatprep.subr.bf16.mxu0 0
        %2466 = vmatpush1.bf16.msra.mxu0 0
        %2467 = vmatprep.subr.bf16.mxu0 0
        %2468 = vmatpush1.bf16.msra.mxu0 %v2449
        %2469 = vmatprep.subr.bf16.mxu0 0
        %2470 = vmatpush1.bf16.msra.mxu0 %v2448
        %2471 = vmatprep.subr.bf16.mxu0 0
        %2472 = vmatpush2.bf16.msra.mxu0 0
        %2473 = vmatprep.subr.bf16.mxu0 0
        %2474 = vmatpush2.bf16.msra.mxu0 0
        %2475 = vmatprep.subr.bf16.mxu0 0
        %2476 = vmatpush2.bf16.msra.mxu0 0
        %2477 = vmatprep.subr.bf16.mxu0 0
        %2478 = vmatpush2.bf16.msra.mxu0 0
        %2479 = vmatprep.subr.bf16.mxu0 0
        %2480 = vmatpush2.bf16.msra.mxu0 0
        %2481 = vmatprep.subr.bf16.mxu0 0
        %2482 = vmatpush2.bf16.msra.mxu0 0
        %2483 = vmatprep.subr.bf16.mxu0 0
        %2484 = vmatpush2.bf16.msra.mxu0 0
        %2485 = vmatprep.subr.bf16.mxu0 0
        %2486 = vmatpush2.bf16.msra.mxu0 0
        %2487 = vmatprep.mubr.bf16.mxu0 0
        %2488 = vmatmul.mubr.bf16.gmra.mxu0 %v2453
        %v2489 = vpop.f32.mrf.mxu0
        %v2490 = vadd.f32 %v2438, %v2489
        %v2491 = vpop.f32.mrf.mxu0
        %v2492 = vpop.f32.mrf.mxu0
        %v2493 = vpop.f32.mrf.mxu0
        %2494 = vdwg.mxu0
        %v2495 = vadd.f32 %v1573, %v2490
        %s2496 = scalar_lea.vmem %s7, 1
        %v2497 = vld [vmem:[%s2496] sm:$0x1]
        %s2498 = scalar_lea.vmem %s8, 1
        %v2499 = vld [vmem:[%s2498] sm:$0x1]
        %v2500 = vsel %vm475, %v2495, 0.0
        %2501 = vadd.xlane.f32.xlu0 %v2500
        %v2502 = vpop.xlane.xlu0 %2501
        %v2503 = vmul.f32 %v2502, %v479
        %v2504 = vsub.f32 %v2495, %v2503
        %v2505 = vmul.f32 %v2504, %v2504
        %v2506 = vsel %vm475, %v2505, 0.0
        %2507 = vadd.xlane.f32.xlu0 %v2506
        %v2508 = vpop.xlane.xlu0 %2507
        %v2509 = vmul.f32 %v2508, %v479
        %v2510 = vadd.f32 %v2509, 1e-05
        %v2511 = vrsqrt.pop %v2510
        %v2512 = vmul.f32 %v2504, %v2511
        %v2514 = vlaneseq
        %v2515 = vshrl.u32 %v2514, 7
        %v2516 = vsub.s32 0, %v2515
        %v2517 = vrot.slane %v2497, %v2516
        %v2519 = vmul.f32 %v2512, %v2517
        %v2521 = vlaneseq
        %v2522 = vshrl.u32 %v2521, 7
        %v2523 = vsub.s32 0, %v2522
        %v2524 = vrot.slane %v2499, %v2523
        %v2526 = vadd.f32 %v2519, %v2524
        %v2527 = vpack.c.bf16 %v2526, %v2526
        %s2528 = scalar_lea.vmem %s9, 16
        %v2529 = vld [vmem:[%s2528] sm:$0xf]
        %v2530 = vld [vmem:[%s2528 + $0x4] sm:$0xf]
        %v2531 = vld [vmem:[%s2528 + $0x8] sm:$0xf]
        %v2532 = vld [vmem:[%s2528 + $0xc] sm:$0xf]
        %s2533 = scalar_lea.vmem %s10, 1
        %v2534 = vld [vmem:[%s2533] sm:$0x1]
        %v2536 = vlaneseq
        %v2537 = vshrl.u32 %v2536, 7
        %v2538 = vsub.s32 0, %v2537
        %v2539 = vrot.slane %v2534, %v2538
        %v2545 = vunpack.c.l.b16 %v2529
        %v2546 = vunpack.c.l.b16 %v2530
        %v2547 = vunpack.c.l.b16 %v2531
        %v2548 = vunpack.c.l.b16 %v2532
        %v2549 = vpack.c.b16 %v2546, %v2545
        %v2550 = vpack.c.b16 %v2548, %v2547
        %v2554 = vsel %vm475, %v2527, 0
        %2556 = vmatprep.subr.bf16.mxu0 0
        %2557 = vmatpush1.bf16.msra.mxu0 0
        %2558 = vmatprep.subr.bf16.mxu0 0
        %2559 = vmatpush1.bf16.msra.mxu0 0
        %2560 = vmatprep.subr.bf16.mxu0 0
        %2561 = vmatpush1.bf16.msra.mxu0 0
        %2562 = vmatprep.subr.bf16.mxu0 0
        %2563 = vmatpush1.bf16.msra.mxu0 0
        %2564 = vmatprep.subr.bf16.mxu0 0
        %2565 = vmatpush1.bf16.msra.mxu0 0
        %2566 = vmatprep.subr.bf16.mxu0 0
        %2567 = vmatpush1.bf16.msra.mxu0 0
        %2568 = vmatprep.subr.bf16.mxu0 0
        %2569 = vmatpush1.bf16.msra.mxu0 %v2550
        %2570 = vmatprep.subr.bf16.mxu0 0
        %2571 = vmatpush1.bf16.msra.mxu0 %v2549
        %2572 = vmatprep.subr.bf16.mxu0 0
        %2573 = vmatpush2.bf16.msra.mxu0 0
        %2574 = vmatprep.subr.bf16.mxu0 0
        %2575 = vmatpush2.bf16.msra.mxu0 0
        %2576 = vmatprep.subr.bf16.mxu0 0
        %2577 = vmatpush2.bf16.msra.mxu0 0
        %2578 = vmatprep.subr.bf16.mxu0 0
        %2579 = vmatpush2.bf16.msra.mxu0 0
        %2580 = vmatprep.subr.bf16.mxu0 0
        %2581 = vmatpush2.bf16.msra.mxu0 0
        %2582 = vmatprep.subr.bf16.mxu0 0
        %2583 = vmatpush2.bf16.msra.mxu0 0
        %2584 = vmatprep.subr.bf16.mxu0 0
        %2585 = vmatpush2.bf16.msra.mxu0 0
        %2586 = vmatprep.subr.bf16.mxu0 0
        %2587 = vmatpush2.bf16.msra.mxu0 0
        %2588 = vmatprep.mubr.bf16.mxu0 0
        %2589 = vmatmul.mubr.bf16.gmra.mxu0 %v2554
        %v2590 = vpop.f32.mrf.mxu0
        %v2591 = vadd.f32 %v2539, %v2590
        %v2592 = vpop.f32.mrf.mxu0
        %v2593 = vpop.f32.mrf.mxu0
        %v2594 = vpop.f32.mrf.mxu0
        %2595 = vdwg.mxu0
        %v2596 = vmax.f32 %v2591, 0.0
        %v2597 = vpack.c.bf16 %v2596, %v2596
        %s2598 = scalar_lea.vmem %s11, 32
        %v2599 = vld [vmem:[%s2598] sm:$0xf]
        %v2600 = vld [vmem:[%s2598 + $0x4] sm:$0xf]
        %v2601 = vld [vmem:[%s2598 + $0x8] sm:$0xf]
        %v2602 = vld [vmem:[%s2598 + $0xc] sm:$0xf]
        %v2603 = vld [vmem:[%s2598 + $0x10] sm:$0xf]
        %v2604 = vld [vmem:[%s2598 + $0x14] sm:$0xf]
        %v2605 = vld [vmem:[%s2598 + $0x18] sm:$0xf]
        %v2606 = vld [vmem:[%s2598 + $0x1c] sm:$0xf]
        %s2607 = scalar_lea.vmem %s12, 1
        %v2608 = vld [vmem:[%s2607] sm:$0x1]
        %v2610 = vlaneseq
        %v2611 = vshrl.u32 %v2610, 7
        %v2612 = vsub.s32 0, %v2611
        %v2613 = vrot.slane %v2608, %v2612
        %v2623 = vunpack.c.l.b16 %v2599
        %v2624 = vunpack.c.l.b16 %v2600
        %v2625 = vunpack.c.l.b16 %v2601
        %v2626 = vunpack.c.l.b16 %v2602
        %v2627 = vunpack.c.l.b16 %v2603
        %v2628 = vunpack.c.l.b16 %v2604
        %v2629 = vunpack.c.l.b16 %v2605
        %v2630 = vunpack.c.l.b16 %v2606
        %v2631 = vpack.c.b16 %v2624, %v2623
        %v2632 = vpack.c.b16 %v2626, %v2625
        %v2633 = vpack.c.b16 %v2628, %v2627
        %v2634 = vpack.c.b16 %v2630, %v2629
        %v2640 = vsel %vm1529, %v2597, 0
        %2642 = vmatprep.subr.bf16.mxu0 0
        %2643 = vmatpush1.bf16.msra.mxu0 0
        %2644 = vmatprep.subr.bf16.mxu0 0
        %2645 = vmatpush1.bf16.msra.mxu0 0
        %2646 = vmatprep.subr.bf16.mxu0 0
        %2647 = vmatpush1.bf16.msra.mxu0 0
        %2648 = vmatprep.subr.bf16.mxu0 0
        %2649 = vmatpush1.bf16.msra.mxu0 0
        %2650 = vmatprep.subr.bf16.mxu0 0
        %2651 = vmatpush1.bf16.msra.mxu0 %v2634
        %2652 = vmatprep.subr.bf16.mxu0 0
        %2653 = vmatpush1.bf16.msra.mxu0 %v2633
        %2654 = vmatprep.subr.bf16.mxu0 0
        %2655 = vmatpush1.bf16.msra.mxu0 %v2632
        %2656 = vmatprep.subr.bf16.mxu0 0
        %2657 = vmatpush1.bf16.msra.mxu0 %v2631
        %2658 = vmatprep.subr.bf16.mxu0 0
        %2659 = vmatpush2.bf16.msra.mxu0 0
        %2660 = vmatprep.subr.bf16.mxu0 0
        %2661 = vmatpush2.bf16.msra.mxu0 0
        %2662 = vmatprep.subr.bf16.mxu0 0
        %2663 = vmatpush2.bf16.msra.mxu0 0
        %2664 = vmatprep.subr.bf16.mxu0 0
        %2665 = vmatpush2.bf16.msra.mxu0 0
        %2666 = vmatprep.subr.bf16.mxu0 0
        %2667 = vmatpush2.bf16.msra.mxu0 0
        %2668 = vmatprep.subr.bf16.mxu0 0
        %2669 = vmatpush2.bf16.msra.mxu0 0
        %2670 = vmatprep.subr.bf16.mxu0 0
        %2671 = vmatpush2.bf16.msra.mxu0 0
        %2672 = vmatprep.subr.bf16.mxu0 0
        %2673 = vmatpush2.bf16.msra.mxu0 0
        %2674 = vmatprep.mubr.bf16.mxu0 0
        %2675 = vmatmul.mubr.bf16.gmra.mxu0 %v2640
        %v2676 = vpop.f32.mrf.mxu0
        %v2677 = vadd.f32 %v2613, %v2676
        %v2678 = vpop.f32.mrf.mxu0
        %v2679 = vpop.f32.mrf.mxu0
        %v2680 = vpop.f32.mrf.mxu0
        %2681 = vdwg.mxu0
        %v2682 = vadd.f32 %v2495, %v2677
        %2683 = vst.msk [vmem:[%s470] sm:$0xff] %vm475, %v2682
        %s2684 = sand.u32 %s317, 1
        %s2685 = scalar_lea.sflag [#allocation4], %s2684
        %s2686 = sand.u32 %s317, 1
        %s2687 = smul.addr %s2686, 8
        %s2688 = scalar_lea.vmem [#allocation7], %s2687
        // Predicated region
        $region81: #{tpu_custom_call.1} parent=71 // pred_check
          %p2689 = pneg %p327
        $region82: #{tpu_custom_call.1} parent=71 // pred_check_branch
          %2691 = sbr.rel (%p2689) target = $region84
        $region83: #{tpu_custom_call.1} parent=71 // pred_region
          %s2693 = ssub.s32 128, 128
          %2694 = vsyncadd %s2685, %s2693
          %s2695 = smul.addr %s31, 128
          %s2696 = scalar_lea.hbm %s13, %s2695
          %s2698 = sshll.u32 %s2688, 4
          %s2699 = int_to_ptr.vmem [resolvable:$true] %s2698
          %2701 = dma.vmem_to_hbm [thread:$0]  %s2699, 128, %s2696, %s2685
        $region84: #{tpu_custom_call.1} parent=71 // pred_fallthru
          _
      $region72: #{tpu_custom_call.1} parent=5 // pred_fallthru
        _
      %p2702 = scmp.le.s32.totalorder 2, %s26
      // Predicated region
      $region85: #{tpu_custom_call.1} parent=5 // pred_check
        %p2703 = pneg %p2702
      $region86: #{tpu_custom_call.1} parent=5 // pred_check_branch
        %2705 = sbr.rel (%p2703) target = $region88
      $region87: #{tpu_custom_call.1} parent=5 // pred_region
        %s2706 = ssub.s32 %s26, 2
        // Predicated region
        $region89: #{tpu_custom_call.1} parent=87 // pred_check
          %p2707 = pneg %p333
        $region90: #{tpu_custom_call.1} parent=87 // pred_check_branch
          %2709 = sbr.rel (%p2707) target = $region92
        $region91: #{tpu_custom_call.1} parent=87 // pred_region
          %s2710 = sand.u32 %s318, 1
          %s2711 = scalar_lea.sflag [#allocation4], %s2710
          %s2712 = sand.u32 %s318, 1
          %s2713 = smul.addr %s2712, 8
          %s2714 = scalar_lea.vmem [#allocation7], %s2713
          %2715 = dma.done %s2711, 128
        $region92: #{tpu_custom_call.1} parent=87 // pred_fallthru
          _
      $region88: #{tpu_custom_call.1} parent=5 // pred_fallthru
        _
    $region6: #{tpu_custom_call.1} parent=1 // loop_footer
      %s30 = sadd.s32 1, %s26
    $region7: #{tpu_custom_call.1} parent=1 // loop_footer_branch
      %25 = sbr.rel target = $region3
    $region8: #{tpu_custom_call.1} parent=1 // loop_exit
      _
    %2716 = vsyncpa [#allocation3], 1
    %s2717 = scalar_lea.sflag [#allocation3], 1
    %2718 = vsyncpa %s2717, 1
    %2719 = vsyncpa [#allocation6], 1
    %2720 = vsyncpa [#allocation4], 1
    %s2721 = scalar_lea.sflag [#allocation4], 1
    %2722 = vsyncpa %s2721, 1

</llo_original>
